<compile_context>
chip_gen: v7x
topology: tpu7x:2x2x1
jax: 0.10.0
libtpu: 0.0.40
codegen_flags: <defaults>
</compile_context>

<pallas_src>
import functools

import numpy as np
import jax
import jax.numpy as jnp
from jax import lax
from jax.experimental import pallas as pl
from jax.experimental.pallas import tpu as pltpu


# ----------------------------------------------------------------------------
# Fused bidirectional recurrent kernel for one LSTM layer.
# One grid step = one time chunk for the forward direction AND the mirrored
# time chunk for the backward direction, interleaved in the same loop body.
# ----------------------------------------------------------------------------
def _bilstm_kernel(gxf_ref, gxb_ref, len_ref, whh_ref,
                   outf_ref, outb_ref, hT_ref,
                   hf_sc, cf_sc, hb_sc, cb_sc, *, tt, hidden):
    ci = pl.program_id(0)          # time-chunk index (processing order)
    nc = pl.num_programs(0)

    @pl.when(ci == 0)
    def _():                       # fresh h0 / c0 for both directions
        hf_sc[...] = jnp.zeros_like(hf_sc)
        cf_sc[...] = jnp.zeros_like(cf_sc)
        hb_sc[...] = jnp.zeros_like(hb_sc)
        cb_sc[...] = jnp.zeros_like(cb_sc)

    # Loop-invariant loads: full (H, 4H) recurrent weights per direction
    # (PyTorch gate order i,f,g,o along 4H) and the per-row sequence lengths
    # that emulate pack_padded_sequence.
    w_f = whh_ref[0]
    w_b = whh_ref[1]
    lens = len_ref[...]                                # (B, 1) int32

    t0_f = ci * tt                                     # fwd chunk start time
    t0_b = (nc - 1 - ci) * tt                          # bwd chunk start time

    def cell(gx_t, h, c_prev, w_hh, t):
        # gx_t: (B, 4H) f32 precomputed x-projection; h: (B, H) matmul dtype;
        # c_prev: (B, H) f32.  One fused (B,H)x(H,4H) MXU dot per step.
        gates = gx_t + jnp.dot(h, w_hh, preferred_element_type=jnp.float32)
        i_g = jax.nn.sigmoid(gates[:, 0 * hidden:1 * hidden])
        f_g = jax.nn.sigmoid(gates[:, 1 * hidden:2 * hidden])
        g_g = jnp.tanh(gates[:, 2 * hidden:3 * hidden])
        o_g = jax.nn.sigmoid(gates[:, 3 * hidden:4 * hidden])
        c_new = f_g * c_prev + i_g * g_g               # f32 cell state
        h_new = (o_g * jnp.tanh(c_new)).astype(h.dtype)
        live = lens > t                                # packed-seq masking
        return jnp.where(live, h_new, h), jnp.where(live, c_new, c_prev)

    def step(s, carry):
        h_f, c_f, h_b, c_b = carry
        sb = tt - 1 - s                                # bwd walks chunk R->L
        # Two independent chains -> LLO scheduler interleaves them.
        h_f, c_f = cell(gxf_ref[s].astype(jnp.float32), h_f, c_f, w_f,
                        t0_f + s)
        h_b, c_b = cell(gxb_ref[sb].astype(jnp.float32), h_b, c_b, w_b,
                        t0_b + sb)
        outf_ref[s] = h_f
        outb_ref[sb] = h_b
        return h_f, c_f, h_b, c_b

    # h/c live in the loop carry (vregs); scratch only at chunk boundaries.
    carry0 = (hf_sc[...], cf_sc[...], hb_sc[...], cb_sc[...])
    h_f, c_f, h_b, c_b = lax.fori_loop(0, tt, step, carry0, unroll=True)

    hf_sc[...] = h_f
    cf_sc[...] = c_f
    hb_sc[...] = h_b
    cb_sc[...] = c_b

    @pl.when(ci == nc - 1)                             # final hidden, once
    def _():
        hT_ref[0] = h_f.astype(jnp.float32)            # fwd: state at len-1
        hT_ref[1] = h_b.astype(jnp.float32)            # bwd: state after t=0


def bilstm_layer(gx_f, gx_b, lengths_b1, whh, *, tt):
    """Both directions of one bidirectional LSTM layer in a single pallas_call.

    gx_f/gx_b: (T_pad, B, 4H) precomputed input projections per direction.
    whh:       (2, H, 4H) recurrent weights [fwd, bwd], matmul dtype.
    Returns (out_f, out_b) hidden sequences and h_T (2, B, H) f32 finals.
    """
    tp, B, four_h = gx_f.shape
    H = four_h // 4
    nc = tp // tt
    mm_dtype = gx_f.dtype
    msz = gx_f.dtype.itemsize

    # VMEM budget: double-buffered gx/out chunks + resident weights + scratch.
    need = (4 * tt * B * four_h * msz       # 2 gx chunks, 2 buffers each
            + 4 * tt * B * H * msz          # 2 out chunks, 2 buffers each
            + 4 * H * four_h * msz          # whh (2, H, 4H), 2 buffers
            + 4 * B * H * 4                 # h_T block, 2 buffers
            + 2 * B * 4                     # lengths
            + 2 * B * H * (msz + 4))        # h/c scratch, both directions
    # Cap under v7x's 64 MiB physical VMEM; shrink `tt` if this is exceeded.
    vmem_limit = int(min(56 * 2**20, max(32 * 2**20, 1.5 * need)))

    kernel = functools.partial(_bilstm_kernel, tt=tt, hidden=H)
    out_f, out_b, h_T = pl.pallas_call(
        kernel,
        out_shape=(jax.ShapeDtypeStruct((tp, B, H), mm_dtype),
                   jax.ShapeDtypeStruct((tp, B, H), mm_dtype),
                   jax.ShapeDtypeStruct((2, B, H), jnp.float32)),
        grid=(nc,),
        in_specs=[
            pl.BlockSpec((tt, B, four_h), lambda c: (c, 0, 0)),
            pl.BlockSpec((tt, B, four_h), lambda c: (nc - 1 - c, 0, 0)),
            pl.BlockSpec((B, 1), lambda c: (0, 0)),
            pl.BlockSpec((2, H, four_h), lambda c: (0, 0, 0)),
        ],
        out_specs=(
            pl.BlockSpec((tt, B, H), lambda c: (c, 0, 0)),
            pl.BlockSpec((tt, B, H), lambda c: (nc - 1 - c, 0, 0)),
            pl.BlockSpec((2, B, H), lambda c: (0, 0, 0)),
        ),
        scratch_shapes=[pltpu.VMEM((B, H), mm_dtype),     # h fwd
                        pltpu.VMEM((B, H), jnp.float32),  # c fwd
                        pltpu.VMEM((B, H), mm_dtype),     # h bwd
                        pltpu.VMEM((B, H), jnp.float32)], # c bwd
        compiler_params=pltpu.CompilerParams(
            dimension_semantics=("arbitrary",),   # time is the recurrence
            vmem_limit_bytes=vmem_limit),
    )(gx_f, gx_b, lengths_b1, whh)
    return out_f, out_b, h_T


# ----------------------------------------------------------------------------
# Hoisted input projection (one big XLA GEMM per stream, outside the kernel)
# ----------------------------------------------------------------------------
def _input_proj(streams, w_ih, bias, mm_dtype):
    """x @ W_ih + b for every timestep of one direction.

    `streams` is a list of (T_pad, B, d_s) arrays (the fwd/bwd halves of the
    previous layer, consumed separately -> no (T,B,2H) concat in HBM).
    Matmul operands are cast to `mm_dtype`; accumulation is f32.
    """
    acc = None
    off = 0
    for s in streams:
        d = s.shape[-1]
        w = w_ih[off:off + d].astype(mm_dtype)
        p = jnp.einsum('tbd,dg->tbg', s.astype(mm_dtype), w,
                       preferred_element_type=jnp.float32)
        acc = p if acc is None else acc + p
        off += d
    return (acc + bias.astype(jnp.float32)).astype(mm_dtype)


# ----------------------------------------------------------------------------
# Head: BatchNorm1d (eval) -> tanh -> Dropout(identity) -> Linear
# ----------------------------------------------------------------------------
def _head_kernel(h_ref, gamma_ref, beta_ref, mean_ref, var_ref,
                 w_ref, bias_ref, out_ref):
    x = h_ref[...]                                            # (B, H)
    inv_std = lax.rsqrt(var_ref[...] + 1e-5)
    y = jnp.tanh((x - mean_ref[...]) * inv_std * gamma_ref[...] + beta_ref[...])
    # Dropout(p=0.5): identity in inference mode.
    out_ref[...] = (jnp.dot(y, w_ref[...], preferred_element_type=jnp.float32)
                    + bias_ref[...])


# ----------------------------------------------------------------------------
# Full model forward
# ----------------------------------------------------------------------------
def lstm_model_forward(params, x_btd, lengths, *, time_chunk=32,
                       matmul_dtype=jnp.bfloat16):
    x = jnp.transpose(x_btd, (1, 0, 2)).astype(jnp.float32)     # (T, B, D)
    T, B, _ = x.shape

    # Pad batch to a multiple of 8 sublanes (full vregs in the recurrent
    # matmul, unmasked stores).  Padded rows get length 0 -> stay zero.
    B_pad = ((B + 7) // 8) * 8
    lengths = lengths.astype(jnp.int32)
    if B_pad != B:
        x = jnp.pad(x, ((0, 0), (0, B_pad - B), (0, 0)))
        lengths = jnp.pad(lengths, (0, B_pad - B))
    lengths_b1 = lengths[:, None]                               # (B_pad, 1)

    # Time chunking: larger chunks amortise the ~0.35us per-grid-step cost.
    tt = int(min(time_chunk, T))
    tp = ((T + tt - 1) // tt) * tt
    if tp != T:
        x = jnp.pad(x, ((0, tp - T), (0, 0), (0, 0)))

    streams = [x]          # previous layer's fwd/bwd halves (no HBM concat)
    h_T = None
    for (w_ih_f, w_hh_f, b_f, w_ih_b, w_hh_b, b_b) in params["lstm_layers"]:
        gx_f = _input_proj(streams, w_ih_f, b_f, matmul_dtype)
        gx_b = _input_proj(streams, w_ih_b, b_b, matmul_dtype)
        whh = jnp.stack([w_hh_f, w_hh_b]).astype(matmul_dtype)  # (2, H, 4H)
        out_f, out_b, h_T = bilstm_layer(gx_f, gx_b, lengths_b1, whh, tt=tt)
        streams = [out_f, out_b]

    ht_bwd = h_T[1, :B]                # ht[-1]: backward dir of last layer
    G = params["fc_w"].shape[1]
    out = pl.pallas_call(
        _head_kernel,
        out_shape=jax.ShapeDtypeStruct((B, G), jnp.float32),
    )(ht_bwd, params["bn_gamma"], params["bn_beta"], params["bn_mean"],
      params["bn_var"], params["fc_w"], params["fc_b"])
    return out


# ----------------------------------------------------------------------------
# Deterministic parameter init (matches nn.LSTM / nn.Linear shapes)
# ----------------------------------------------------------------------------
def init_params(key, input_size, number_of_neurons, go_output_size):
    layers = []
    in_dim = input_size
    for H in number_of_neurons:
        scale = 1.0 / np.sqrt(H)
        layer = []
        for _direction in range(2):
            key, k1, k2, k3, k4 = jax.random.split(key, 5)
            w_ih = jax.random.uniform(k1, (in_dim, 4 * H), jnp.float32, -scale, scale)
            w_hh = jax.random.uniform(k2, (H, 4 * H), jnp.float32, -scale, scale)
            b_ih = jax.random.uniform(k3, (4 * H,), jnp.float32, -scale, scale)
            b_hh = jax.random.uniform(k4, (4 * H,), jnp.float32, -scale, scale)
            layer += [w_ih, w_hh, (b_ih + b_hh)[None, :]]
        layers.append(tuple(layer))
        in_dim = 2 * H
    H_last = number_of_neurons[-1]
    key, kw, kb = jax.random.split(key, 3)
    fscale = 1.0 / np.sqrt(H_last)
    return dict(
        lstm_layers=layers,
        bn_gamma=jnp.ones((1, H_last), jnp.float32),
        bn_beta=jnp.zeros((1, H_last), jnp.float32),
        bn_mean=jnp.zeros((1, H_last), jnp.float32),
        bn_var=jnp.ones((1, H_last), jnp.float32),
        fc_w=jax.random.uniform(kw, (H_last, go_output_size), jnp.float32,
                                -fscale, fscale),
        fc_b=jax.random.uniform(kb, (1, go_output_size), jnp.float32,
                                -fscale, fscale),
    )


# ----------------------------------------------------------------------------
# Pure-JAX f32 reference (same math, no Pallas) for correctness checks
# ----------------------------------------------------------------------------
def reference_forward(params, x_btd, lengths):
    x = jnp.transpose(x_btd, (1, 0, 2))
    T, B, _ = x.shape
    lens = lengths.astype(jnp.int32)
    ht_bwd = None
    for (w_ih_f, w_hh_f, b_f, w_ih_b, w_hh_b, b_b) in params["lstm_layers"]:
        def run(seq, wi, wh, b, reverse):
            H = wh.shape[0]
            h = jnp.zeros((B, H), jnp.float32)
            c = jnp.zeros((B, H), jnp.float32)
            outs = [None] * T
            order = range(T - 1, -1, -1) if reverse else range(T)
            for t in order:
                gates = seq[t] @ wi + h @ wh + b
                i = jax.nn.sigmoid(gates[:, :H])
                f = jax.nn.sigmoid(gates[:, H:2 * H])
                g = jnp.tanh(gates[:, 2 * H:3 * H])
                o = jax.nn.sigmoid(gates[:, 3 * H:])
                cn = f * c + i * g
                hn = o * jnp.tanh(cn)
                m = (lens > t)[:, None]
                h = jnp.where(m, hn, h)
                c = jnp.where(m, cn, c)
                outs[t] = h
            return jnp.stack(outs, axis=0), h
        of, _hf = run(x, w_ih_f, w_hh_f, b_f, False)
        ob, hb = run(x, w_ih_b, w_hh_b, b_b, True)
        x = jnp.concatenate([of, ob], axis=-1)
        ht_bwd = hb
    y = ((ht_bwd - params["bn_mean"]) * lax.rsqrt(params["bn_var"] + 1e-5)
         * params["bn_gamma"] + params["bn_beta"])
    y = jnp.tanh(y)
    return y @ params["fc_w"] + params["fc_b"]


if __name__ == "__main__":
    B, T = 2, 8
    input_size = 16
    number_of_neurons = [32, 32]
    go_output_size = 10

    key = jax.random.PRNGKey(0)
    kx, kp = jax.random.split(key)
    x = jax.random.normal(kx, (B, T, input_size), jnp.float32)   # batch_first
    lengths = jnp.array([8, 5], jnp.int32)  # sorted desc (pack_padded_sequence)

    params = init_params(kp, input_size, number_of_neurons, go_output_size)
    ref = reference_forward(params, x, lengths)

    # f32 matmul path with a small time chunk (exercises multi-chunk scratch
    # carry, reversed backward chunk order and time padding): tight check.
    fwd_f32 = jax.jit(functools.partial(lstm_model_forward,
                                        matmul_dtype=jnp.float32,
                                        time_chunk=5))
    out_f32 = jax.block_until_ready(fwd_f32(params, x, lengths))
    assert out_f32.shape == (B, go_output_size)
    np.testing.assert_allclose(np.asarray(out_f32), np.asarray(ref),
                               rtol=5e-3, atol=5e-3)

    # Production path: bf16 matmul operands / f32 accumulation (looser
    # tolerance for bf16 quantization compounding over the recurrence).
    fwd_bf16 = jax.jit(lstm_model_forward)
    out_bf16 = jax.block_until_ready(fwd_bf16(params, x, lengths))
    assert out_bf16.shape == (B, go_output_size)
    np.testing.assert_allclose(np.asarray(out_bf16), np.asarray(ref),
                               rtol=4e-2, atol=4e-2)
    print("KERNEL_OK")
</pallas_src>

<mosaic_0001>
module attributes {stable_mosaic.version = 11 : i64} {
  func.func @_bilstm_kernel(%arg0: i32, %arg1: memref<5x8x128xf32, #tpu.memory_space<vmem>>, %arg2: memref<5x8x128xf32, #tpu.memory_space<vmem>>, %arg3: memref<8x1xi32, #tpu.memory_space<vmem>>, %arg4: memref<2x32x128xf32, #tpu.memory_space<vmem>>, %arg5: memref<5x8x32xf32, #tpu.memory_space<vmem>>, %arg6: memref<5x8x32xf32, #tpu.memory_space<vmem>>, %arg7: memref<2x8x32xf32, #tpu.memory_space<vmem>>, %arg8: memref<8x32xf32, #tpu.memory_space<vmem>>, %arg9: memref<8x32xf32, #tpu.memory_space<vmem>>, %arg10: memref<8x32xf32, #tpu.memory_space<vmem>>, %arg11: memref<8x32xf32, #tpu.memory_space<vmem>>) attributes {dimension_semantics = [#tpu.dimension_semantics<arbitrary>], iteration_bounds = array<i64: 2>, scalar_prefetch = 0 : i64, scratch_operands = 4 : i64, tpu.core_type = #tpu.core_type<tc>, window_params = [{transform_indices = @transform_0, window_bounds = array<i64: 5, 8, 128>}, {transform_indices = @transform_1, window_bounds = array<i64: 5, 8, 128>}, {pipeline_mode = #tpu.pipeline_mode<synchronous>, transform_indices = @transform_2, window_bounds = array<i64: 8, 1>}, {pipeline_mode = #tpu.pipeline_mode<synchronous>, transform_indices = @transform_3, window_bounds = array<i64: 2, 32, 128>}, {transform_indices = @transform_4, window_bounds = array<i64: 5, 8, 32>}, {transform_indices = @transform_5, window_bounds = array<i64: 5, 8, 32>}, {pipeline_mode = #tpu.pipeline_mode<synchronous>, transform_indices = @transform_6, window_bounds = array<i64: 2, 8, 32>}]} {
    %c0_i32 = arith.constant 0 : i32
    %0 = arith.cmpi eq, %arg0, %c0_i32 : i32
    %1 = arith.extui %0 : i1 to i32
    %c0_i32_0 = arith.constant 0 : i32
    %2 = arith.cmpi ne, %1, %c0_i32_0 : i32
    scf.if %2 {
      %cst_113 = arith.constant 0.000000e+00 : f32
      %457 = vector.broadcast %cst_113 : f32 to vector<8x32xf32>
      %c0_114 = arith.constant 0 : index
      %c0_115 = arith.constant 0 : index
      %458 = vector.load %arg8[%c0_114, %c0_115] : memref<8x32xf32, #tpu.memory_space<vmem>>, vector<8x32xf32>
      tpu.vector_store %arg8[%c0_114, %c0_115], %457 {strides = array<i32>} : memref<8x32xf32, #tpu.memory_space<vmem>>, vector<8x32xf32>,
      %cst_116 = arith.constant 0.000000e+00 : f32
      %459 = vector.broadcast %cst_116 : f32 to vector<8x32xf32>
      %c0_117 = arith.constant 0 : index
      %c0_118 = arith.constant 0 : index
      %460 = vector.load %arg9[%c0_117, %c0_118] : memref<8x32xf32, #tpu.memory_space<vmem>>, vector<8x32xf32>
      tpu.vector_store %arg9[%c0_117, %c0_118], %459 {strides = array<i32>} : memref<8x32xf32, #tpu.memory_space<vmem>>, vector<8x32xf32>,
      %cst_119 = arith.constant 0.000000e+00 : f32
      %461 = vector.broadcast %cst_119 : f32 to vector<8x32xf32>
      %c0_120 = arith.constant 0 : index
      %c0_121 = arith.constant 0 : index
      %462 = vector.load %arg10[%c0_120, %c0_121] : memref<8x32xf32, #tpu.memory_space<vmem>>, vector<8x32xf32>
      tpu.vector_store %arg10[%c0_120, %c0_121], %461 {strides = array<i32>} : memref<8x32xf32, #tpu.memory_space<vmem>>, vector<8x32xf32>,
      %cst_122 = arith.constant 0.000000e+00 : f32
      %463 = vector.broadcast %cst_122 : f32 to vector<8x32xf32>
      %c0_123 = arith.constant 0 : index
      %c0_124 = arith.constant 0 : index
      %464 = vector.load %arg11[%c0_123, %c0_124] : memref<8x32xf32, #tpu.memory_space<vmem>>, vector<8x32xf32>
      tpu.vector_store %arg11[%c0_123, %c0_124], %463 {strides = array<i32>} : memref<8x32xf32, #tpu.memory_space<vmem>>, vector<8x32xf32>,
    } else {
    }
    %c0 = arith.constant 0 : index
    %c0_1 = arith.constant 0 : index
    %c0_2 = arith.constant 0 : index
    %3 = vector.load %arg4[%c0, %c0_1, %c0_2] : memref<2x32x128xf32, #tpu.memory_space<vmem>>, vector<1x32x128xf32>
    %4 = vector.shape_cast %3 : vector<1x32x128xf32> to vector<32x128xf32>
    %c1 = arith.constant 1 : index
    %c0_3 = arith.constant 0 : index
    %c0_4 = arith.constant 0 : index
    %5 = vector.load %arg4[%c1, %c0_3, %c0_4] : memref<2x32x128xf32, #tpu.memory_space<vmem>>, vector<1x32x128xf32>
    %6 = vector.shape_cast %5 : vector<1x32x128xf32> to vector<32x128xf32>
    %c0_5 = arith.constant 0 : index
    %c0_6 = arith.constant 0 : index
    %7 = vector.load %arg3[%c0_5, %c0_6] : memref<8x1xi32, #tpu.memory_space<vmem>>, vector<8x1xi32>
    %c5_i32 = arith.constant 5 : i32
    %8 = arith.muli %arg0, %c5_i32 : i32
    %c1_i32 = arith.constant 1 : i32
    %9 = arith.subi %c1_i32, %arg0 : i32
    %c5_i32_7 = arith.constant 5 : i32
    %10 = arith.muli %9, %c5_i32_7 : i32
    %c0_8 = arith.constant 0 : index
    %c0_9 = arith.constant 0 : index
    %11 = vector.load %arg8[%c0_8, %c0_9] : memref<8x32xf32, #tpu.memory_space<vmem>>, vector<8x32xf32>
    %c0_10 = arith.constant 0 : index
    %c0_11 = arith.constant 0 : index
    %12 = vector.load %arg9[%c0_10, %c0_11] : memref<8x32xf32, #tpu.memory_space<vmem>>, vector<8x32xf32>
    %c0_12 = arith.constant 0 : index
    %c0_13 = arith.constant 0 : index
    %13 = vector.load %arg10[%c0_12, %c0_13] : memref<8x32xf32, #tpu.memory_space<vmem>>, vector<8x32xf32>
    %c0_14 = arith.constant 0 : index
    %c0_15 = arith.constant 0 : index
    %14 = vector.load %arg11[%c0_14, %c0_15] : memref<8x32xf32, #tpu.memory_space<vmem>>, vector<8x32xf32>
    %c0_i32_16 = arith.constant 0 : i32
    %c4_i32 = arith.constant 4 : i32
    %15 = arith.subi %c4_i32, %c0_i32_16 : i32
    %16 = arith.index_cast %c0_i32_16 : i32 to index
    %c0_17 = arith.constant 0 : index
    %c0_18 = arith.constant 0 : index
    %17 = vector.load %arg1[%16, %c0_17, %c0_18] : memref<5x8x128xf32, #tpu.memory_space<vmem>>, vector<1x8x128xf32>
    %18 = vector.shape_cast %17 : vector<1x8x128xf32> to vector<8x128xf32>
    %19 = arith.addi %8, %c0_i32_16 : i32
    %cst = arith.constant dense<0.000000e+00> : vector<8x128xf32>
    %20 = tpu.matmul %11, %4, %cst {dimension_numbers = #tpu.dot_dimension_numbers<[1], [0], [0], [1], [0, 0, 1, 1], [], []>} : vector<8x32xf32>, vector<32x128xf32>, vector<8x128xf32> -> vector<8x128xf32>
    %21 = arith.addf %18, %20 : vector<8x128xf32>
    %22 = vector.extract_strided_slice %21 {offsets = [0, 0], sizes = [8, 32], strides = [1, 1]} : vector<8x128xf32> to vector<8x32xf32>
    %23 = arith.negf %22 : vector<8x32xf32>
    %24 = math.exp %23 : vector<8x32xf32>
    %cst_19 = arith.constant 1.000000e+00 : f32
    %25 = vector.broadcast %cst_19 : f32 to vector<8x32xf32>
    %26 = arith.addf %25, %24 : vector<8x32xf32>
    %27 = arith.divf %25, %26 : vector<8x32xf32>
    %28 = vector.extract_strided_slice %21 {offsets = [0, 32], sizes = [8, 32], strides = [1, 1]} : vector<8x128xf32> to vector<8x32xf32>
    %29 = arith.negf %28 : vector<8x32xf32>
    %30 = math.exp %29 : vector<8x32xf32>
    %cst_20 = arith.constant 1.000000e+00 : f32
    %31 = vector.broadcast %cst_20 : f32 to vector<8x32xf32>
    %32 = arith.addf %31, %30 : vector<8x32xf32>
    %33 = arith.divf %31, %32 : vector<8x32xf32>
    %34 = vector.extract_strided_slice %21 {offsets = [0, 64], sizes = [8, 32], strides = [1, 1]} : vector<8x128xf32> to vector<8x32xf32>
    %35 = math.tanh %34 : vector<8x32xf32>
    %36 = vector.extract_strided_slice %21 {offsets = [0, 96], sizes = [8, 32], strides = [1, 1]} : vector<8x128xf32> to vector<8x32xf32>
    %37 = arith.negf %36 : vector<8x32xf32>
    %38 = math.exp %37 : vector<8x32xf32>
    %cst_21 = arith.constant 1.000000e+00 : f32
    %39 = vector.broadcast %cst_21 : f32 to vector<8x32xf32>
    %40 = arith.addf %39, %38 : vector<8x32xf32>
    %41 = arith.divf %39, %40 : vector<8x32xf32>
    %42 = arith.mulf %33, %12 : vector<8x32xf32>
    %43 = arith.mulf %27, %35 : vector<8x32xf32>
    %44 = arith.addf %42, %43 : vector<8x32xf32>
    %45 = math.tanh %44 : vector<8x32xf32>
    %46 = arith.mulf %41, %45 : vector<8x32xf32>
    %47 = vector.broadcast %19 : i32 to vector<8x1xi32>
    %48 = arith.cmpi sgt, %7, %47 : vector<8x1xi32>
    %49 = vector.shape_cast %48 : vector<8x1xi1> to vector<8x1xi1>
    %50 = vector.broadcast %49 : vector<8x1xi1> to vector<8x32xi1>
    %51 = arith.select %50, %46, %11 : vector<8x32xi1>, vector<8x32xf32>
    %52 = vector.shape_cast %48 : vector<8x1xi1> to vector<8x1xi1>
    %53 = vector.broadcast %52 : vector<8x1xi1> to vector<8x32xi1>
    %54 = arith.select %53, %44, %12 : vector<8x32xi1>, vector<8x32xf32>
    %55 = arith.index_cast %15 : i32 to index
    %c0_22 = arith.constant 0 : index
    %c0_23 = arith.constant 0 : index
    %56 = vector.load %arg2[%55, %c0_22, %c0_23] : memref<5x8x128xf32, #tpu.memory_space<vmem>>, vector<1x8x128xf32>
    %57 = vector.shape_cast %56 : vector<1x8x128xf32> to vector<8x128xf32>
    %58 = arith.addi %10, %15 : i32
    %cst_24 = arith.constant dense<0.000000e+00> : vector<8x128xf32>
    %59 = tpu.matmul %13, %6, %cst_24 {dimension_numbers = #tpu.dot_dimension_numbers<[1], [0], [0], [1], [0, 0, 1, 1], [], []>} : vector<8x32xf32>, vector<32x128xf32>, vector<8x128xf32> -> vector<8x128xf32>
    %60 = arith.addf %57, %59 : vector<8x128xf32>
    %61 = vector.extract_strided_slice %60 {offsets = [0, 0], sizes = [8, 32], strides = [1, 1]} : vector<8x128xf32> to vector<8x32xf32>
    %62 = arith.negf %61 : vector<8x32xf32>
    %63 = math.exp %62 : vector<8x32xf32>
    %cst_25 = arith.constant 1.000000e+00 : f32
    %64 = vector.broadcast %cst_25 : f32 to vector<8x32xf32>
    %65 = arith.addf %64, %63 : vector<8x32xf32>
    %66 = arith.divf %64, %65 : vector<8x32xf32>
    %67 = vector.extract_strided_slice %60 {offsets = [0, 32], sizes = [8, 32], strides = [1, 1]} : vector<8x128xf32> to vector<8x32xf32>
    %68 = arith.negf %67 : vector<8x32xf32>
    %69 = math.exp %68 : vector<8x32xf32>
    %cst_26 = arith.constant 1.000000e+00 : f32
    %70 = vector.broadcast %cst_26 : f32 to vector<8x32xf32>
    %71 = arith.addf %70, %69 : vector<8x32xf32>
    %72 = arith.divf %70, %71 : vector<8x32xf32>
    %73 = vector.extract_strided_slice %60 {offsets = [0, 64], sizes = [8, 32], strides = [1, 1]} : vector<8x128xf32> to vector<8x32xf32>
    %74 = math.tanh %73 : vector<8x32xf32>
    %75 = vector.extract_strided_slice %60 {offsets = [0, 96], sizes = [8, 32], strides = [1, 1]} : vector<8x128xf32> to vector<8x32xf32>
    %76 = arith.negf %75 : vector<8x32xf32>
    %77 = math.exp %76 : vector<8x32xf32>
    %cst_27 = arith.constant 1.000000e+00 : f32
    %78 = vector.broadcast %cst_27 : f32 to vector<8x32xf32>
    %79 = arith.addf %78, %77 : vector<8x32xf32>
    %80 = arith.divf %78, %79 : vector<8x32xf32>
    %81 = arith.mulf %72, %14 : vector<8x32xf32>
    %82 = arith.mulf %66, %74 : vector<8x32xf32>
    %83 = arith.addf %81, %82 : vector<8x32xf32>
    %84 = math.tanh %83 : vector<8x32xf32>
    %85 = arith.mulf %80, %84 : vector<8x32xf32>
    %86 = vector.broadcast %58 : i32 to vector<8x1xi32>
    %87 = arith.cmpi sgt, %7, %86 : vector<8x1xi32>
    %88 = vector.shape_cast %87 : vector<8x1xi1> to vector<8x1xi1>
    %89 = vector.broadcast %88 : vector<8x1xi1> to vector<8x32xi1>
    %90 = arith.select %89, %85, %13 : vector<8x32xi1>, vector<8x32xf32>
    %91 = vector.shape_cast %87 : vector<8x1xi1> to vector<8x1xi1>
    %92 = vector.broadcast %91 : vector<8x1xi1> to vector<8x32xi1>
    %93 = arith.select %92, %83, %14 : vector<8x32xi1>, vector<8x32xf32>
    %94 = arith.index_cast %c0_i32_16 : i32 to index
    %c0_28 = arith.constant 0 : index
    %c0_29 = arith.constant 0 : index
    %95 = vector.load %arg5[%94, %c0_28, %c0_29] : memref<5x8x32xf32, #tpu.memory_space<vmem>>, vector<1x8x32xf32>
    %96 = vector.shape_cast %95 : vector<1x8x32xf32> to vector<8x32xf32>
    %97 = vector.shape_cast %51 : vector<8x32xf32> to vector<1x8x32xf32>
    tpu.vector_store %arg5[%94, %c0_28, %c0_29], %97 {strides = array<i32>} : memref<5x8x32xf32, #tpu.memory_space<vmem>>, vector<1x8x32xf32>,
    %98 = arith.index_cast %15 : i32 to index
    %c0_30 = arith.constant 0 : index
    %c0_31 = arith.constant 0 : index
    %99 = vector.load %arg6[%98, %c0_30, %c0_31] : memref<5x8x32xf32, #tpu.memory_space<vmem>>, vector<1x8x32xf32>
    %100 = vector.shape_cast %99 : vector<1x8x32xf32> to vector<8x32xf32>
    %101 = vector.shape_cast %90 : vector<8x32xf32> to vector<1x8x32xf32>
    tpu.vector_store %arg6[%98, %c0_30, %c0_31], %101 {strides = array<i32>} : memref<5x8x32xf32, #tpu.memory_space<vmem>>, vector<1x8x32xf32>,
    %c1_i32_32 = arith.constant 1 : i32
    %c4_i32_33 = arith.constant 4 : i32
    %102 = arith.subi %c4_i32_33, %c1_i32_32 : i32
    %103 = arith.index_cast %c1_i32_32 : i32 to index
    %c0_34 = arith.constant 0 : index
    %c0_35 = arith.constant 0 : index
    %104 = vector.load %arg1[%103, %c0_34, %c0_35] : memref<5x8x128xf32, #tpu.memory_space<vmem>>, vector<1x8x128xf32>
    %105 = vector.shape_cast %104 : vector<1x8x128xf32> to vector<8x128xf32>
    %106 = arith.addi %8, %c1_i32_32 : i32
    %cst_36 = arith.constant dense<0.000000e+00> : vector<8x128xf32>
    %107 = tpu.matmul %51, %4, %cst_36 {dimension_numbers = #tpu.dot_dimension_numbers<[1], [0], [0], [1], [0, 0, 1, 1], [], []>} : vector<8x32xf32>, vector<32x128xf32>, vector<8x128xf32> -> vector<8x128xf32>
    %108 = arith.addf %105, %107 : vector<8x128xf32>
    %109 = vector.extract_strided_slice %108 {offsets = [0, 0], sizes = [8, 32], strides = [1, 1]} : vector<8x128xf32> to vector<8x32xf32>
    %110 = arith.negf %109 : vector<8x32xf32>
    %111 = math.exp %110 : vector<8x32xf32>
    %cst_37 = arith.constant 1.000000e+00 : f32
    %112 = vector.broadcast %cst_37 : f32 to vector<8x32xf32>
    %113 = arith.addf %112, %111 : vector<8x32xf32>
    %114 = arith.divf %112, %113 : vector<8x32xf32>
    %115 = vector.extract_strided_slice %108 {offsets = [0, 32], sizes = [8, 32], strides = [1, 1]} : vector<8x128xf32> to vector<8x32xf32>
    %116 = arith.negf %115 : vector<8x32xf32>
    %117 = math.exp %116 : vector<8x32xf32>
    %cst_38 = arith.constant 1.000000e+00 : f32
    %118 = vector.broadcast %cst_38 : f32 to vector<8x32xf32>
    %119 = arith.addf %118, %117 : vector<8x32xf32>
    %120 = arith.divf %118, %119 : vector<8x32xf32>
    %121 = vector.extract_strided_slice %108 {offsets = [0, 64], sizes = [8, 32], strides = [1, 1]} : vector<8x128xf32> to vector<8x32xf32>
    %122 = math.tanh %121 : vector<8x32xf32>
    %123 = vector.extract_strided_slice %108 {offsets = [0, 96], sizes = [8, 32], strides = [1, 1]} : vector<8x128xf32> to vector<8x32xf32>
    %124 = arith.negf %123 : vector<8x32xf32>
    %125 = math.exp %124 : vector<8x32xf32>
    %cst_39 = arith.constant 1.000000e+00 : f32
    %126 = vector.broadcast %cst_39 : f32 to vector<8x32xf32>
    %127 = arith.addf %126, %125 : vector<8x32xf32>
    %128 = arith.divf %126, %127 : vector<8x32xf32>
    %129 = arith.mulf %120, %54 : vector<8x32xf32>
    %130 = arith.mulf %114, %122 : vector<8x32xf32>
    %131 = arith.addf %129, %130 : vector<8x32xf32>
    %132 = math.tanh %131 : vector<8x32xf32>
    %133 = arith.mulf %128, %132 : vector<8x32xf32>
    %134 = vector.broadcast %106 : i32 to vector<8x1xi32>
    %135 = arith.cmpi sgt, %7, %134 : vector<8x1xi32>
    %136 = vector.shape_cast %135 : vector<8x1xi1> to vector<8x1xi1>
    %137 = vector.broadcast %136 : vector<8x1xi1> to vector<8x32xi1>
    %138 = arith.select %137, %133, %51 : vector<8x32xi1>, vector<8x32xf32>
    %139 = vector.shape_cast %135 : vector<8x1xi1> to vector<8x1xi1>
    %140 = vector.broadcast %139 : vector<8x1xi1> to vector<8x32xi1>
    %141 = arith.select %140, %131, %54 : vector<8x32xi1>, vector<8x32xf32>
    %142 = arith.index_cast %102 : i32 to index
    %c0_40 = arith.constant 0 : index
    %c0_41 = arith.constant 0 : index
    %143 = vector.load %arg2[%142, %c0_40, %c0_41] : memref<5x8x128xf32, #tpu.memory_space<vmem>>, vector<1x8x128xf32>
    %144 = vector.shape_cast %143 : vector<1x8x128xf32> to vector<8x128xf32>
    %145 = arith.addi %10, %102 : i32
    %cst_42 = arith.constant dense<0.000000e+00> : vector<8x128xf32>
    %146 = tpu.matmul %90, %6, %cst_42 {dimension_numbers = #tpu.dot_dimension_numbers<[1], [0], [0], [1], [0, 0, 1, 1], [], []>} : vector<8x32xf32>, vector<32x128xf32>, vector<8x128xf32> -> vector<8x128xf32>
    %147 = arith.addf %144, %146 : vector<8x128xf32>
    %148 = vector.extract_strided_slice %147 {offsets = [0, 0], sizes = [8, 32], strides = [1, 1]} : vector<8x128xf32> to vector<8x32xf32>
    %149 = arith.negf %148 : vector<8x32xf32>
    %150 = math.exp %149 : vector<8x32xf32>
    %cst_43 = arith.constant 1.000000e+00 : f32
    %151 = vector.broadcast %cst_43 : f32 to vector<8x32xf32>
    %152 = arith.addf %151, %150 : vector<8x32xf32>
    %153 = arith.divf %151, %152 : vector<8x32xf32>
    %154 = vector.extract_strided_slice %147 {offsets = [0, 32], sizes = [8, 32], strides = [1, 1]} : vector<8x128xf32> to vector<8x32xf32>
    %155 = arith.negf %154 : vector<8x32xf32>
    %156 = math.exp %155 : vector<8x32xf32>
    %cst_44 = arith.constant 1.000000e+00 : f32
    %157 = vector.broadcast %cst_44 : f32 to vector<8x32xf32>
    %158 = arith.addf %157, %156 : vector<8x32xf32>
    %159 = arith.divf %157, %158 : vector<8x32xf32>
    %160 = vector.extract_strided_slice %147 {offsets = [0, 64], sizes = [8, 32], strides = [1, 1]} : vector<8x128xf32> to vector<8x32xf32>
    %161 = math.tanh %160 : vector<8x32xf32>
    %162 = vector.extract_strided_slice %147 {offsets = [0, 96], sizes = [8, 32], strides = [1, 1]} : vector<8x128xf32> to vector<8x32xf32>
    %163 = arith.negf %162 : vector<8x32xf32>
    %164 = math.exp %163 : vector<8x32xf32>
    %cst_45 = arith.constant 1.000000e+00 : f32
    %165 = vector.broadcast %cst_45 : f32 to vector<8x32xf32>
    %166 = arith.addf %165, %164 : vector<8x32xf32>
    %167 = arith.divf %165, %166 : vector<8x32xf32>
    %168 = arith.mulf %159, %93 : vector<8x32xf32>
    %169 = arith.mulf %153, %161 : vector<8x32xf32>
    %170 = arith.addf %168, %169 : vector<8x32xf32>
    %171 = math.tanh %170 : vector<8x32xf32>
    %172 = arith.mulf %167, %171 : vector<8x32xf32>
    %173 = vector.broadcast %145 : i32 to vector<8x1xi32>
    %174 = arith.cmpi sgt, %7, %173 : vector<8x1xi32>
    %175 = vector.shape_cast %174 : vector<8x1xi1> to vector<8x1xi1>
    %176 = vector.broadcast %175 : vector<8x1xi1> to vector<8x32xi1>
    %177 = arith.select %176, %172, %90 : vector<8x32xi1>, vector<8x32xf32>
    %178 = vector.shape_cast %174 : vector<8x1xi1> to vector<8x1xi1>
    %179 = vector.broadcast %178 : vector<8x1xi1> to vector<8x32xi1>
    %180 = arith.select %179, %170, %93 : vector<8x32xi1>, vector<8x32xf32>
    %181 = arith.index_cast %c1_i32_32 : i32 to index
    %c0_46 = arith.constant 0 : index
    %c0_47 = arith.constant 0 : index
    %182 = vector.load %arg5[%181, %c0_46, %c0_47] : memref<5x8x32xf32, #tpu.memory_space<vmem>>, vector<1x8x32xf32>
    %183 = vector.shape_cast %182 : vector<1x8x32xf32> to vector<8x32xf32>
    %184 = vector.shape_cast %138 : vector<8x32xf32> to vector<1x8x32xf32>
    tpu.vector_store %arg5[%181, %c0_46, %c0_47], %184 {strides = array<i32>} : memref<5x8x32xf32, #tpu.memory_space<vmem>>, vector<1x8x32xf32>,
    %185 = arith.index_cast %102 : i32 to index
    %c0_48 = arith.constant 0 : index
    %c0_49 = arith.constant 0 : index
    %186 = vector.load %arg6[%185, %c0_48, %c0_49] : memref<5x8x32xf32, #tpu.memory_space<vmem>>, vector<1x8x32xf32>
    %187 = vector.shape_cast %186 : vector<1x8x32xf32> to vector<8x32xf32>
    %188 = vector.shape_cast %177 : vector<8x32xf32> to vector<1x8x32xf32>
    tpu.vector_store %arg6[%185, %c0_48, %c0_49], %188 {strides = array<i32>} : memref<5x8x32xf32, #tpu.memory_space<vmem>>, vector<1x8x32xf32>,
    %c2_i32 = arith.constant 2 : i32
    %c4_i32_50 = arith.constant 4 : i32
    %189 = arith.subi %c4_i32_50, %c2_i32 : i32
    %190 = arith.index_cast %c2_i32 : i32 to index
    %c0_51 = arith.constant 0 : index
    %c0_52 = arith.constant 0 : index
    %191 = vector.load %arg1[%190, %c0_51, %c0_52] : memref<5x8x128xf32, #tpu.memory_space<vmem>>, vector<1x8x128xf32>
    %192 = vector.shape_cast %191 : vector<1x8x128xf32> to vector<8x128xf32>
    %193 = arith.addi %8, %c2_i32 : i32
    %cst_53 = arith.constant dense<0.000000e+00> : vector<8x128xf32>
    %194 = tpu.matmul %138, %4, %cst_53 {dimension_numbers = #tpu.dot_dimension_numbers<[1], [0], [0], [1], [0, 0, 1, 1], [], []>} : vector<8x32xf32>, vector<32x128xf32>, vector<8x128xf32> -> vector<8x128xf32>
    %195 = arith.addf %192, %194 : vector<8x128xf32>
    %196 = vector.extract_strided_slice %195 {offsets = [0, 0], sizes = [8, 32], strides = [1, 1]} : vector<8x128xf32> to vector<8x32xf32>
    %197 = arith.negf %196 : vector<8x32xf32>
    %198 = math.exp %197 : vector<8x32xf32>
    %cst_54 = arith.constant 1.000000e+00 : f32
    %199 = vector.broadcast %cst_54 : f32 to vector<8x32xf32>
    %200 = arith.addf %199, %198 : vector<8x32xf32>
    %201 = arith.divf %199, %200 : vector<8x32xf32>
    %202 = vector.extract_strided_slice %195 {offsets = [0, 32], sizes = [8, 32], strides = [1, 1]} : vector<8x128xf32> to vector<8x32xf32>
    %203 = arith.negf %202 : vector<8x32xf32>
    %204 = math.exp %203 : vector<8x32xf32>
    %cst_55 = arith.constant 1.000000e+00 : f32
    %205 = vector.broadcast %cst_55 : f32 to vector<8x32xf32>
    %206 = arith.addf %205, %204 : vector<8x32xf32>
    %207 = arith.divf %205, %206 : vector<8x32xf32>
    %208 = vector.extract_strided_slice %195 {offsets = [0, 64], sizes = [8, 32], strides = [1, 1]} : vector<8x128xf32> to vector<8x32xf32>
    %209 = math.tanh %208 : vector<8x32xf32>
    %210 = vector.extract_strided_slice %195 {offsets = [0, 96], sizes = [8, 32], strides = [1, 1]} : vector<8x128xf32> to vector<8x32xf32>
    %211 = arith.negf %210 : vector<8x32xf32>
    %212 = math.exp %211 : vector<8x32xf32>
    %cst_56 = arith.constant 1.000000e+00 : f32
    %213 = vector.broadcast %cst_56 : f32 to vector<8x32xf32>
    %214 = arith.addf %213, %212 : vector<8x32xf32>
    %215 = arith.divf %213, %214 : vector<8x32xf32>
    %216 = arith.mulf %207, %141 : vector<8x32xf32>
    %217 = arith.mulf %201, %209 : vector<8x32xf32>
    %218 = arith.addf %216, %217 : vector<8x32xf32>
    %219 = math.tanh %218 : vector<8x32xf32>
    %220 = arith.mulf %215, %219 : vector<8x32xf32>
    %221 = vector.broadcast %193 : i32 to vector<8x1xi32>
    %222 = arith.cmpi sgt, %7, %221 : vector<8x1xi32>
    %223 = vector.shape_cast %222 : vector<8x1xi1> to vector<8x1xi1>
    %224 = vector.broadcast %223 : vector<8x1xi1> to vector<8x32xi1>
    %225 = arith.select %224, %220, %138 : vector<8x32xi1>, vector<8x32xf32>
    %226 = vector.shape_cast %222 : vector<8x1xi1> to vector<8x1xi1>
    %227 = vector.broadcast %226 : vector<8x1xi1> to vector<8x32xi1>
    %228 = arith.select %227, %218, %141 : vector<8x32xi1>, vector<8x32xf32>
    %229 = arith.index_cast %189 : i32 to index
    %c0_57 = arith.constant 0 : index
    %c0_58 = arith.constant 0 : index
    %230 = vector.load %arg2[%229, %c0_57, %c0_58] : memref<5x8x128xf32, #tpu.memory_space<vmem>>, vector<1x8x128xf32>
    %231 = vector.shape_cast %230 : vector<1x8x128xf32> to vector<8x128xf32>
    %232 = arith.addi %10, %189 : i32
    %cst_59 = arith.constant dense<0.000000e+00> : vector<8x128xf32>
    %233 = tpu.matmul %177, %6, %cst_59 {dimension_numbers = #tpu.dot_dimension_numbers<[1], [0], [0], [1], [0, 0, 1, 1], [], []>} : vector<8x32xf32>, vector<32x128xf32>, vector<8x128xf32> -> vector<8x128xf32>
    %234 = arith.addf %231, %233 : vector<8x128xf32>
    %235 = vector.extract_strided_slice %234 {offsets = [0, 0], sizes = [8, 32], strides = [1, 1]} : vector<8x128xf32> to vector<8x32xf32>
    %236 = arith.negf %235 : vector<8x32xf32>
    %237 = math.exp %236 : vector<8x32xf32>
    %cst_60 = arith.constant 1.000000e+00 : f32
    %238 = vector.broadcast %cst_60 : f32 to vector<8x32xf32>
    %239 = arith.addf %238, %237 : vector<8x32xf32>
    %240 = arith.divf %238, %239 : vector<8x32xf32>
    %241 = vector.extract_strided_slice %234 {offsets = [0, 32], sizes = [8, 32], strides = [1, 1]} : vector<8x128xf32> to vector<8x32xf32>
    %242 = arith.negf %241 : vector<8x32xf32>
    %243 = math.exp %242 : vector<8x32xf32>
    %cst_61 = arith.constant 1.000000e+00 : f32
    %244 = vector.broadcast %cst_61 : f32 to vector<8x32xf32>
    %245 = arith.addf %244, %243 : vector<8x32xf32>
    %246 = arith.divf %244, %245 : vector<8x32xf32>
    %247 = vector.extract_strided_slice %234 {offsets = [0, 64], sizes = [8, 32], strides = [1, 1]} : vector<8x128xf32> to vector<8x32xf32>
    %248 = math.tanh %247 : vector<8x32xf32>
    %249 = vector.extract_strided_slice %234 {offsets = [0, 96], sizes = [8, 32], strides = [1, 1]} : vector<8x128xf32> to vector<8x32xf32>
    %250 = arith.negf %249 : vector<8x32xf32>
    %251 = math.exp %250 : vector<8x32xf32>
    %cst_62 = arith.constant 1.000000e+00 : f32
    %252 = vector.broadcast %cst_62 : f32 to vector<8x32xf32>
    %253 = arith.addf %252, %251 : vector<8x32xf32>
    %254 = arith.divf %252, %253 : vector<8x32xf32>
    %255 = arith.mulf %246, %180 : vector<8x32xf32>
    %256 = arith.mulf %240, %248 : vector<8x32xf32>
    %257 = arith.addf %255, %256 : vector<8x32xf32>
    %258 = math.tanh %257 : vector<8x32xf32>
    %259 = arith.mulf %254, %258 : vector<8x32xf32>
    %260 = vector.broadcast %232 : i32 to vector<8x1xi32>
    %261 = arith.cmpi sgt, %7, %260 : vector<8x1xi32>
    %262 = vector.shape_cast %261 : vector<8x1xi1> to vector<8x1xi1>
    %263 = vector.broadcast %262 : vector<8x1xi1> to vector<8x32xi1>
    %264 = arith.select %263, %259, %177 : vector<8x32xi1>, vector<8x32xf32>
    %265 = vector.shape_cast %261 : vector<8x1xi1> to vector<8x1xi1>
    %266 = vector.broadcast %265 : vector<8x1xi1> to vector<8x32xi1>
    %267 = arith.select %266, %257, %180 : vector<8x32xi1>, vector<8x32xf32>
    %268 = arith.index_cast %c2_i32 : i32 to index
    %c0_63 = arith.constant 0 : index
    %c0_64 = arith.constant 0 : index
    %269 = vector.load %arg5[%268, %c0_63, %c0_64] : memref<5x8x32xf32, #tpu.memory_space<vmem>>, vector<1x8x32xf32>
    %270 = vector.shape_cast %269 : vector<1x8x32xf32> to vector<8x32xf32>
    %271 = vector.shape_cast %225 : vector<8x32xf32> to vector<1x8x32xf32>
    tpu.vector_store %arg5[%268, %c0_63, %c0_64], %271 {strides = array<i32>} : memref<5x8x32xf32, #tpu.memory_space<vmem>>, vector<1x8x32xf32>,
    %272 = arith.index_cast %189 : i32 to index
    %c0_65 = arith.constant 0 : index
    %c0_66 = arith.constant 0 : index
    %273 = vector.load %arg6[%272, %c0_65, %c0_66] : memref<5x8x32xf32, #tpu.memory_space<vmem>>, vector<1x8x32xf32>
    %274 = vector.shape_cast %273 : vector<1x8x32xf32> to vector<8x32xf32>
    %275 = vector.shape_cast %264 : vector<8x32xf32> to vector<1x8x32xf32>
    tpu.vector_store %arg6[%272, %c0_65, %c0_66], %275 {strides = array<i32>} : memref<5x8x32xf32, #tpu.memory_space<vmem>>, vector<1x8x32xf32>,
    %c3_i32 = arith.constant 3 : i32
    %c4_i32_67 = arith.constant 4 : i32
    %276 = arith.subi %c4_i32_67, %c3_i32 : i32
    %277 = arith.index_cast %c3_i32 : i32 to index
    %c0_68 = arith.constant 0 : index
    %c0_69 = arith.constant 0 : index
    %278 = vector.load %arg1[%277, %c0_68, %c0_69] : memref<5x8x128xf32, #tpu.memory_space<vmem>>, vector<1x8x128xf32>
    %279 = vector.shape_cast %278 : vector<1x8x128xf32> to vector<8x128xf32>
    %280 = arith.addi %8, %c3_i32 : i32
    %cst_70 = arith.constant dense<0.000000e+00> : vector<8x128xf32>
    %281 = tpu.matmul %225, %4, %cst_70 {dimension_numbers = #tpu.dot_dimension_numbers<[1], [0], [0], [1], [0, 0, 1, 1], [], []>} : vector<8x32xf32>, vector<32x128xf32>, vector<8x128xf32> -> vector<8x128xf32>
    %282 = arith.addf %279, %281 : vector<8x128xf32>
    %283 = vector.extract_strided_slice %282 {offsets = [0, 0], sizes = [8, 32], strides = [1, 1]} : vector<8x128xf32> to vector<8x32xf32>
    %284 = arith.negf %283 : vector<8x32xf32>
    %285 = math.exp %284 : vector<8x32xf32>
    %cst_71 = arith.constant 1.000000e+00 : f32
    %286 = vector.broadcast %cst_71 : f32 to vector<8x32xf32>
    %287 = arith.addf %286, %285 : vector<8x32xf32>
    %288 = arith.divf %286, %287 : vector<8x32xf32>
    %289 = vector.extract_strided_slice %282 {offsets = [0, 32], sizes = [8, 32], strides = [1, 1]} : vector<8x128xf32> to vector<8x32xf32>
    %290 = arith.negf %289 : vector<8x32xf32>
    %291 = math.exp %290 : vector<8x32xf32>
    %cst_72 = arith.constant 1.000000e+00 : f32
    %292 = vector.broadcast %cst_72 : f32 to vector<8x32xf32>
    %293 = arith.addf %292, %291 : vector<8x32xf32>
    %294 = arith.divf %292, %293 : vector<8x32xf32>
    %295 = vector.extract_strided_slice %282 {offsets = [0, 64], sizes = [8, 32], strides = [1, 1]} : vector<8x128xf32> to vector<8x32xf32>
    %296 = math.tanh %295 : vector<8x32xf32>
    %297 = vector.extract_strided_slice %282 {offsets = [0, 96], sizes = [8, 32], strides = [1, 1]} : vector<8x128xf32> to vector<8x32xf32>
    %298 = arith.negf %297 : vector<8x32xf32>
    %299 = math.exp %298 : vector<8x32xf32>
    %cst_73 = arith.constant 1.000000e+00 : f32
    %300 = vector.broadcast %cst_73 : f32 to vector<8x32xf32>
    %301 = arith.addf %300, %299 : vector<8x32xf32>
    %302 = arith.divf %300, %301 : vector<8x32xf32>
    %303 = arith.mulf %294, %228 : vector<8x32xf32>
    %304 = arith.mulf %288, %296 : vector<8x32xf32>
    %305 = arith.addf %303, %304 : vector<8x32xf32>
    %306 = math.tanh %305 : vector<8x32xf32>
    %307 = arith.mulf %302, %306 : vector<8x32xf32>
    %308 = vector.broadcast %280 : i32 to vector<8x1xi32>
    %309 = arith.cmpi sgt, %7, %308 : vector<8x1xi32>
    %310 = vector.shape_cast %309 : vector<8x1xi1> to vector<8x1xi1>
    %311 = vector.broadcast %310 : vector<8x1xi1> to vector<8x32xi1>
    %312 = arith.select %311, %307, %225 : vector<8x32xi1>, vector<8x32xf32>
    %313 = vector.shape_cast %309 : vector<8x1xi1> to vector<8x1xi1>
    %314 = vector.broadcast %313 : vector<8x1xi1> to vector<8x32xi1>
    %315 = arith.select %314, %305, %228 : vector<8x32xi1>, vector<8x32xf32>
    %316 = arith.index_cast %276 : i32 to index
    %c0_74 = arith.constant 0 : index
    %c0_75 = arith.constant 0 : index
    %317 = vector.load %arg2[%316, %c0_74, %c0_75] : memref<5x8x128xf32, #tpu.memory_space<vmem>>, vector<1x8x128xf32>
    %318 = vector.shape_cast %317 : vector<1x8x128xf32> to vector<8x128xf32>
    %319 = arith.addi %10, %276 : i32
    %cst_76 = arith.constant dense<0.000000e+00> : vector<8x128xf32>
    %320 = tpu.matmul %264, %6, %cst_76 {dimension_numbers = #tpu.dot_dimension_numbers<[1], [0], [0], [1], [0, 0, 1, 1], [], []>} : vector<8x32xf32>, vector<32x128xf32>, vector<8x128xf32> -> vector<8x128xf32>
    %321 = arith.addf %318, %320 : vector<8x128xf32>
    %322 = vector.extract_strided_slice %321 {offsets = [0, 0], sizes = [8, 32], strides = [1, 1]} : vector<8x128xf32> to vector<8x32xf32>
    %323 = arith.negf %322 : vector<8x32xf32>
    %324 = math.exp %323 : vector<8x32xf32>
    %cst_77 = arith.constant 1.000000e+00 : f32
    %325 = vector.broadcast %cst_77 : f32 to vector<8x32xf32>
    %326 = arith.addf %325, %324 : vector<8x32xf32>
    %327 = arith.divf %325, %326 : vector<8x32xf32>
    %328 = vector.extract_strided_slice %321 {offsets = [0, 32], sizes = [8, 32], strides = [1, 1]} : vector<8x128xf32> to vector<8x32xf32>
    %329 = arith.negf %328 : vector<8x32xf32>
    %330 = math.exp %329 : vector<8x32xf32>
    %cst_78 = arith.constant 1.000000e+00 : f32
    %331 = vector.broadcast %cst_78 : f32 to vector<8x32xf32>
    %332 = arith.addf %331, %330 : vector<8x32xf32>
    %333 = arith.divf %331, %332 : vector<8x32xf32>
    %334 = vector.extract_strided_slice %321 {offsets = [0, 64], sizes = [8, 32], strides = [1, 1]} : vector<8x128xf32> to vector<8x32xf32>
    %335 = math.tanh %334 : vector<8x32xf32>
    %336 = vector.extract_strided_slice %321 {offsets = [0, 96], sizes = [8, 32], strides = [1, 1]} : vector<8x128xf32> to vector<8x32xf32>
    %337 = arith.negf %336 : vector<8x32xf32>
    %338 = math.exp %337 : vector<8x32xf32>
    %cst_79 = arith.constant 1.000000e+00 : f32
    %339 = vector.broadcast %cst_79 : f32 to vector<8x32xf32>
    %340 = arith.addf %339, %338 : vector<8x32xf32>
    %341 = arith.divf %339, %340 : vector<8x32xf32>
    %342 = arith.mulf %333, %267 : vector<8x32xf32>
    %343 = arith.mulf %327, %335 : vector<8x32xf32>
    %344 = arith.addf %342, %343 : vector<8x32xf32>
    %345 = math.tanh %344 : vector<8x32xf32>
    %346 = arith.mulf %341, %345 : vector<8x32xf32>
    %347 = vector.broadcast %319 : i32 to vector<8x1xi32>
    %348 = arith.cmpi sgt, %7, %347 : vector<8x1xi32>
    %349 = vector.shape_cast %348 : vector<8x1xi1> to vector<8x1xi1>
    %350 = vector.broadcast %349 : vector<8x1xi1> to vector<8x32xi1>
    %351 = arith.select %350, %346, %264 : vector<8x32xi1>, vector<8x32xf32>
    %352 = vector.shape_cast %348 : vector<8x1xi1> to vector<8x1xi1>
    %353 = vector.broadcast %352 : vector<8x1xi1> to vector<8x32xi1>
    %354 = arith.select %353, %344, %267 : vector<8x32xi1>, vector<8x32xf32>
    %355 = arith.index_cast %c3_i32 : i32 to index
    %c0_80 = arith.constant 0 : index
    %c0_81 = arith.constant 0 : index
    %356 = vector.load %arg5[%355, %c0_80, %c0_81] : memref<5x8x32xf32, #tpu.memory_space<vmem>>, vector<1x8x32xf32>
    %357 = vector.shape_cast %356 : vector<1x8x32xf32> to vector<8x32xf32>
    %358 = vector.shape_cast %312 : vector<8x32xf32> to vector<1x8x32xf32>
    tpu.vector_store %arg5[%355, %c0_80, %c0_81], %358 {strides = array<i32>} : memref<5x8x32xf32, #tpu.memory_space<vmem>>, vector<1x8x32xf32>,
    %359 = arith.index_cast %276 : i32 to index
    %c0_82 = arith.constant 0 : index
    %c0_83 = arith.constant 0 : index
    %360 = vector.load %arg6[%359, %c0_82, %c0_83] : memref<5x8x32xf32, #tpu.memory_space<vmem>>, vector<1x8x32xf32>
    %361 = vector.shape_cast %360 : vector<1x8x32xf32> to vector<8x32xf32>
    %362 = vector.shape_cast %351 : vector<8x32xf32> to vector<1x8x32xf32>
    tpu.vector_store %arg6[%359, %c0_82, %c0_83], %362 {strides = array<i32>} : memref<5x8x32xf32, #tpu.memory_space<vmem>>, vector<1x8x32xf32>,
    %c4_i32_84 = arith.constant 4 : i32
    %c4_i32_85 = arith.constant 4 : i32
    %363 = arith.subi %c4_i32_85, %c4_i32_84 : i32
    %364 = arith.index_cast %c4_i32_84 : i32 to index
    %c0_86 = arith.constant 0 : index
    %c0_87 = arith.constant 0 : index
    %365 = vector.load %arg1[%364, %c0_86, %c0_87] : memref<5x8x128xf32, #tpu.memory_space<vmem>>, vector<1x8x128xf32>
    %366 = vector.shape_cast %365 : vector<1x8x128xf32> to vector<8x128xf32>
    %367 = arith.addi %8, %c4_i32_84 : i32
    %cst_88 = arith.constant dense<0.000000e+00> : vector<8x128xf32>
    %368 = tpu.matmul %312, %4, %cst_88 {dimension_numbers = #tpu.dot_dimension_numbers<[1], [0], [0], [1], [0, 0, 1, 1], [], []>} : vector<8x32xf32>, vector<32x128xf32>, vector<8x128xf32> -> vector<8x128xf32>
    %369 = arith.addf %366, %368 : vector<8x128xf32>
    %370 = vector.extract_strided_slice %369 {offsets = [0, 0], sizes = [8, 32], strides = [1, 1]} : vector<8x128xf32> to vector<8x32xf32>
    %371 = arith.negf %370 : vector<8x32xf32>
    %372 = math.exp %371 : vector<8x32xf32>
    %cst_89 = arith.constant 1.000000e+00 : f32
    %373 = vector.broadcast %cst_89 : f32 to vector<8x32xf32>
    %374 = arith.addf %373, %372 : vector<8x32xf32>
    %375 = arith.divf %373, %374 : vector<8x32xf32>
    %376 = vector.extract_strided_slice %369 {offsets = [0, 32], sizes = [8, 32], strides = [1, 1]} : vector<8x128xf32> to vector<8x32xf32>
    %377 = arith.negf %376 : vector<8x32xf32>
    %378 = math.exp %377 : vector<8x32xf32>
    %cst_90 = arith.constant 1.000000e+00 : f32
    %379 = vector.broadcast %cst_90 : f32 to vector<8x32xf32>
    %380 = arith.addf %379, %378 : vector<8x32xf32>
    %381 = arith.divf %379, %380 : vector<8x32xf32>
    %382 = vector.extract_strided_slice %369 {offsets = [0, 64], sizes = [8, 32], strides = [1, 1]} : vector<8x128xf32> to vector<8x32xf32>
    %383 = math.tanh %382 : vector<8x32xf32>
    %384 = vector.extract_strided_slice %369 {offsets = [0, 96], sizes = [8, 32], strides = [1, 1]} : vector<8x128xf32> to vector<8x32xf32>
    %385 = arith.negf %384 : vector<8x32xf32>
    %386 = math.exp %385 : vector<8x32xf32>
    %cst_91 = arith.constant 1.000000e+00 : f32
    %387 = vector.broadcast %cst_91 : f32 to vector<8x32xf32>
    %388 = arith.addf %387, %386 : vector<8x32xf32>
    %389 = arith.divf %387, %388 : vector<8x32xf32>
    %390 = arith.mulf %381, %315 : vector<8x32xf32>
    %391 = arith.mulf %375, %383 : vector<8x32xf32>
    %392 = arith.addf %390, %391 : vector<8x32xf32>
    %393 = math.tanh %392 : vector<8x32xf32>
    %394 = arith.mulf %389, %393 : vector<8x32xf32>
    %395 = vector.broadcast %367 : i32 to vector<8x1xi32>
    %396 = arith.cmpi sgt, %7, %395 : vector<8x1xi32>
    %397 = vector.shape_cast %396 : vector<8x1xi1> to vector<8x1xi1>
    %398 = vector.broadcast %397 : vector<8x1xi1> to vector<8x32xi1>
    %399 = arith.select %398, %394, %312 : vector<8x32xi1>, vector<8x32xf32>
    %400 = vector.shape_cast %396 : vector<8x1xi1> to vector<8x1xi1>
    %401 = vector.broadcast %400 : vector<8x1xi1> to vector<8x32xi1>
    %402 = arith.select %401, %392, %315 : vector<8x32xi1>, vector<8x32xf32>
    %403 = arith.index_cast %363 : i32 to index
    %c0_92 = arith.constant 0 : index
    %c0_93 = arith.constant 0 : index
    %404 = vector.load %arg2[%403, %c0_92, %c0_93] : memref<5x8x128xf32, #tpu.memory_space<vmem>>, vector<1x8x128xf32>
    %405 = vector.shape_cast %404 : vector<1x8x128xf32> to vector<8x128xf32>
    %406 = arith.addi %10, %363 : i32
    %cst_94 = arith.constant dense<0.000000e+00> : vector<8x128xf32>
    %407 = tpu.matmul %351, %6, %cst_94 {dimension_numbers = #tpu.dot_dimension_numbers<[1], [0], [0], [1], [0, 0, 1, 1], [], []>} : vector<8x32xf32>, vector<32x128xf32>, vector<8x128xf32> -> vector<8x128xf32>
    %408 = arith.addf %405, %407 : vector<8x128xf32>
    %409 = vector.extract_strided_slice %408 {offsets = [0, 0], sizes = [8, 32], strides = [1, 1]} : vector<8x128xf32> to vector<8x32xf32>
    %410 = arith.negf %409 : vector<8x32xf32>
    %411 = math.exp %410 : vector<8x32xf32>
    %cst_95 = arith.constant 1.000000e+00 : f32
    %412 = vector.broadcast %cst_95 : f32 to vector<8x32xf32>
    %413 = arith.addf %412, %411 : vector<8x32xf32>
    %414 = arith.divf %412, %413 : vector<8x32xf32>
    %415 = vector.extract_strided_slice %408 {offsets = [0, 32], sizes = [8, 32], strides = [1, 1]} : vector<8x128xf32> to vector<8x32xf32>
    %416 = arith.negf %415 : vector<8x32xf32>
    %417 = math.exp %416 : vector<8x32xf32>
    %cst_96 = arith.constant 1.000000e+00 : f32
    %418 = vector.broadcast %cst_96 : f32 to vector<8x32xf32>
    %419 = arith.addf %418, %417 : vector<8x32xf32>
    %420 = arith.divf %418, %419 : vector<8x32xf32>
    %421 = vector.extract_strided_slice %408 {offsets = [0, 64], sizes = [8, 32], strides = [1, 1]} : vector<8x128xf32> to vector<8x32xf32>
    %422 = math.tanh %421 : vector<8x32xf32>
    %423 = vector.extract_strided_slice %408 {offsets = [0, 96], sizes = [8, 32], strides = [1, 1]} : vector<8x128xf32> to vector<8x32xf32>
    %424 = arith.negf %423 : vector<8x32xf32>
    %425 = math.exp %424 : vector<8x32xf32>
    %cst_97 = arith.constant 1.000000e+00 : f32
    %426 = vector.broadcast %cst_97 : f32 to vector<8x32xf32>
    %427 = arith.addf %426, %425 : vector<8x32xf32>
    %428 = arith.divf %426, %427 : vector<8x32xf32>
    %429 = arith.mulf %420, %354 : vector<8x32xf32>
    %430 = arith.mulf %414, %422 : vector<8x32xf32>
    %431 = arith.addf %429, %430 : vector<8x32xf32>
    %432 = math.tanh %431 : vector<8x32xf32>
    %433 = arith.mulf %428, %432 : vector<8x32xf32>
    %434 = vector.broadcast %406 : i32 to vector<8x1xi32>
    %435 = arith.cmpi sgt, %7, %434 : vector<8x1xi32>
    %436 = vector.shape_cast %435 : vector<8x1xi1> to vector<8x1xi1>
    %437 = vector.broadcast %436 : vector<8x1xi1> to vector<8x32xi1>
    %438 = arith.select %437, %433, %351 : vector<8x32xi1>, vector<8x32xf32>
    %439 = vector.shape_cast %435 : vector<8x1xi1> to vector<8x1xi1>
    %440 = vector.broadcast %439 : vector<8x1xi1> to vector<8x32xi1>
    %441 = arith.select %440, %431, %354 : vector<8x32xi1>, vector<8x32xf32>
    %442 = arith.index_cast %c4_i32_84 : i32 to index
    %c0_98 = arith.constant 0 : index
    %c0_99 = arith.constant 0 : index
    %443 = vector.load %arg5[%442, %c0_98, %c0_99] : memref<5x8x32xf32, #tpu.memory_space<vmem>>, vector<1x8x32xf32>
    %444 = vector.shape_cast %443 : vector<1x8x32xf32> to vector<8x32xf32>
    %445 = vector.shape_cast %399 : vector<8x32xf32> to vector<1x8x32xf32>
    tpu.vector_store %arg5[%442, %c0_98, %c0_99], %445 {strides = array<i32>} : memref<5x8x32xf32, #tpu.memory_space<vmem>>, vector<1x8x32xf32>,
    %446 = arith.index_cast %363 : i32 to index
    %c0_100 = arith.constant 0 : index
    %c0_101 = arith.constant 0 : index
    %447 = vector.load %arg6[%446, %c0_100, %c0_101] : memref<5x8x32xf32, #tpu.memory_space<vmem>>, vector<1x8x32xf32>
    %448 = vector.shape_cast %447 : vector<1x8x32xf32> to vector<8x32xf32>
    %449 = vector.shape_cast %438 : vector<8x32xf32> to vector<1x8x32xf32>
    tpu.vector_store %arg6[%446, %c0_100, %c0_101], %449 {strides = array<i32>} : memref<5x8x32xf32, #tpu.memory_space<vmem>>, vector<1x8x32xf32>,
    %c5_i32_102 = arith.constant 5 : i32
    %c0_103 = arith.constant 0 : index
    %c0_104 = arith.constant 0 : index
    %450 = vector.load %arg8[%c0_103, %c0_104] : memref<8x32xf32, #tpu.memory_space<vmem>>, vector<8x32xf32>
    tpu.vector_store %arg8[%c0_103, %c0_104], %399 {strides = array<i32>} : memref<8x32xf32, #tpu.memory_space<vmem>>, vector<8x32xf32>,
    %c0_105 = arith.constant 0 : index
    %c0_106 = arith.constant 0 : index
    %451 = vector.load %arg9[%c0_105, %c0_106] : memref<8x32xf32, #tpu.memory_space<vmem>>, vector<8x32xf32>
    tpu.vector_store %arg9[%c0_105, %c0_106], %402 {strides = array<i32>} : memref<8x32xf32, #tpu.memory_space<vmem>>, vector<8x32xf32>,
    %c0_107 = arith.constant 0 : index
    %c0_108 = arith.constant 0 : index
    %452 = vector.load %arg10[%c0_107, %c0_108] : memref<8x32xf32, #tpu.memory_space<vmem>>, vector<8x32xf32>
    tpu.vector_store %arg10[%c0_107, %c0_108], %438 {strides = array<i32>} : memref<8x32xf32, #tpu.memory_space<vmem>>, vector<8x32xf32>,
    %c0_109 = arith.constant 0 : index
    %c0_110 = arith.constant 0 : index
    %453 = vector.load %arg11[%c0_109, %c0_110] : memref<8x32xf32, #tpu.memory_space<vmem>>, vector<8x32xf32>
    tpu.vector_store %arg11[%c0_109, %c0_110], %441 {strides = array<i32>} : memref<8x32xf32, #tpu.memory_space<vmem>>, vector<8x32xf32>,
    %c1_i32_111 = arith.constant 1 : i32
    %454 = arith.cmpi eq, %arg0, %c1_i32_111 : i32
    %455 = arith.extui %454 : i1 to i32
    %c0_i32_112 = arith.constant 0 : i32
    %456 = arith.cmpi ne, %455, %c0_i32_112 : i32
    scf.if %456 {
      %c0_113 = arith.constant 0 : index
      %c0_114 = arith.constant 0 : index
      %c0_115 = arith.constant 0 : index
      %457 = vector.load %arg7[%c0_113, %c0_114, %c0_115] : memref<2x8x32xf32, #tpu.memory_space<vmem>>, vector<1x8x32xf32>
      %458 = vector.shape_cast %457 : vector<1x8x32xf32> to vector<8x32xf32>
      %459 = vector.shape_cast %399 : vector<8x32xf32> to vector<1x8x32xf32>
      tpu.vector_store %arg7[%c0_113, %c0_114, %c0_115], %459 {strides = array<i32>} : memref<2x8x32xf32, #tpu.memory_space<vmem>>, vector<1x8x32xf32>,
      %c1_116 = arith.constant 1 : index
      %c0_117 = arith.constant 0 : index
      %c0_118 = arith.constant 0 : index
      %460 = vector.load %arg7[%c1_116, %c0_117, %c0_118] : memref<2x8x32xf32, #tpu.memory_space<vmem>>, vector<1x8x32xf32>
      %461 = vector.shape_cast %460 : vector<1x8x32xf32> to vector<8x32xf32>
      %462 = vector.shape_cast %438 : vector<8x32xf32> to vector<1x8x32xf32>
      tpu.vector_store %arg7[%c1_116, %c0_117, %c0_118], %462 {strides = array<i32>} : memref<2x8x32xf32, #tpu.memory_space<vmem>>, vector<1x8x32xf32>,
    } else {
    }
    return
  }
  func.func @transform_0(%arg0: i32) -> (i32, i32, i32) {
    %c0_i32 = arith.constant 0 : i32
    %c0_i32_0 = arith.constant 0 : i32
    %c0_i32_1 = arith.constant 0 : i32
    return %arg0, %c0_i32, %c0_i32_0 : i32, i32, i32
  }
  func.func @transform_1(%arg0: i32) -> (i32, i32, i32) {
    %c1_i32 = arith.constant 1 : i32
    %0 = arith.subi %c1_i32, %arg0 : i32
    %c0_i32 = arith.constant 0 : i32
    %c0_i32_0 = arith.constant 0 : i32
    %c0_i32_1 = arith.constant 0 : i32
    return %0, %c0_i32, %c0_i32_0 : i32, i32, i32
  }
  func.func @transform_2(%arg0: i32) -> (i32, i32) {
    %c0_i32 = arith.constant 0 : i32
    %c0_i32_0 = arith.constant 0 : i32
    %c0_i32_1 = arith.constant 0 : i32
    return %c0_i32, %c0_i32_0 : i32, i32
  }
  func.func @transform_3(%arg0: i32) -> (i32, i32, i32) {
    %c0_i32 = arith.constant 0 : i32
    %c0_i32_0 = arith.constant 0 : i32
    %c0_i32_1 = arith.constant 0 : i32
    %c0_i32_2 = arith.constant 0 : i32
    return %c0_i32, %c0_i32_0, %c0_i32_1 : i32, i32, i32
  }
  func.func @transform_4(%arg0: i32) -> (i32, i32, i32) {
    %c0_i32 = arith.constant 0 : i32
    %c0_i32_0 = arith.constant 0 : i32
    %c0_i32_1 = arith.constant 0 : i32
    return %arg0, %c0_i32, %c0_i32_0 : i32, i32, i32
  }
  func.func @transform_5(%arg0: i32) -> (i32, i32, i32) {
    %c1_i32 = arith.constant 1 : i32
    %0 = arith.subi %c1_i32, %arg0 : i32
    %c0_i32 = arith.constant 0 : i32
    %c0_i32_0 = arith.constant 0 : i32
    %c0_i32_1 = arith.constant 0 : i32
    return %0, %c0_i32, %c0_i32_0 : i32, i32, i32
  }
  func.func @transform_6(%arg0: i32) -> (i32, i32, i32) {
    %c0_i32 = arith.constant 0 : i32
    %c0_i32_0 = arith.constant 0 : i32
    %c0_i32_1 = arith.constant 0 : i32
    %c0_i32_2 = arith.constant 0 : i32
    return %c0_i32, %c0_i32_0, %c0_i32_1 : i32, i32, i32
  }
}

module attributes {stable_mosaic.version = 11 : i64} {
  func.func @_head_kernel(%arg0: memref<2x32xf32, #tpu.memory_space<vmem>>, %arg1: memref<1x32xf32, #tpu.memory_space<vmem>>, %arg2: memref<1x32xf32, #tpu.memory_space<vmem>>, %arg3: memref<1x32xf32, #tpu.memory_space<vmem>>, %arg4: memref<1x32xf32, #tpu.memory_space<vmem>>, %arg5: memref<32x10xf32, #tpu.memory_space<vmem>>, %arg6: memref<1x10xf32, #tpu.memory_space<vmem>>, %arg7: memref<2x10xf32, #tpu.memory_space<vmem>>) attributes {dimension_semantics = [], scalar_prefetch = 0 : i64, scratch_operands = 0 : i64, tpu.core_type = #tpu.core_type<tc>} {
    %c0 = arith.constant 0 : index
    %c0_0 = arith.constant 0 : index
    %0 = vector.load %arg0[%c0, %c0_0] : memref<2x32xf32, #tpu.memory_space<vmem>>, vector<2x32xf32>
    %c0_1 = arith.constant 0 : index
    %c0_2 = arith.constant 0 : index
    %1 = vector.load %arg4[%c0_1, %c0_2] : memref<1x32xf32, #tpu.memory_space<vmem>>, vector<1x32xf32>
    %cst = arith.constant 9.99999974E-6 : f32
    %2 = vector.broadcast %cst : f32 to vector<1x32xf32>
    %3 = arith.addf %1, %2 : vector<1x32xf32>
    %4 = math.rsqrt %3 : vector<1x32xf32>
    %c0_3 = arith.constant 0 : index
    %c0_4 = arith.constant 0 : index
    %5 = vector.load %arg3[%c0_3, %c0_4] : memref<1x32xf32, #tpu.memory_space<vmem>>, vector<1x32xf32>
    %6 = vector.broadcast %5 : vector<1x32xf32> to vector<2x32xf32>
    %7 = arith.subf %0, %6 : vector<2x32xf32>
    %8 = vector.broadcast %4 : vector<1x32xf32> to vector<2x32xf32>
    %9 = arith.mulf %7, %8 : vector<2x32xf32>
    %c0_5 = arith.constant 0 : index
    %c0_6 = arith.constant 0 : index
    %10 = vector.load %arg1[%c0_5, %c0_6] : memref<1x32xf32, #tpu.memory_space<vmem>>, vector<1x32xf32>
    %11 = vector.broadcast %10 : vector<1x32xf32> to vector<2x32xf32>
    %12 = arith.mulf %9, %11 : vector<2x32xf32>
    %c0_7 = arith.constant 0 : index
    %c0_8 = arith.constant 0 : index
    %13 = vector.load %arg2[%c0_7, %c0_8] : memref<1x32xf32, #tpu.memory_space<vmem>>, vector<1x32xf32>
    %14 = vector.broadcast %13 : vector<1x32xf32> to vector<2x32xf32>
    %15 = arith.addf %12, %14 : vector<2x32xf32>
    %16 = math.tanh %15 : vector<2x32xf32>
    %c0_9 = arith.constant 0 : index
    %c0_10 = arith.constant 0 : index
    %17 = vector.load %arg5[%c0_9, %c0_10] : memref<32x10xf32, #tpu.memory_space<vmem>>, vector<32x10xf32>
    %cst_11 = arith.constant dense<0.000000e+00> : vector<2x10xf32>
    %18 = tpu.matmul %16, %17, %cst_11 {dimension_numbers = #tpu.dot_dimension_numbers<[1], [0], [0], [1], [0, 0, 1, 1], [], []>} : vector<2x32xf32>, vector<32x10xf32>, vector<2x10xf32> -> vector<2x10xf32>
    %c0_12 = arith.constant 0 : index
    %c0_13 = arith.constant 0 : index
    %19 = vector.load %arg6[%c0_12, %c0_13] : memref<1x10xf32, #tpu.memory_space<vmem>>, vector<1x10xf32>
    %20 = vector.broadcast %19 : vector<1x10xf32> to vector<2x10xf32>
    %21 = arith.addf %18, %20 : vector<2x10xf32>
    %c0_14 = arith.constant 0 : index
    %c0_15 = arith.constant 0 : index
    %22 = vector.load %arg7[%c0_14, %c0_15] : memref<2x10xf32, #tpu.memory_space<vmem>>, vector<2x10xf32>
    tpu.vector_store %arg7[%c0_14, %c0_15], %21 {strides = array<i32>} : memref<2x10xf32, #tpu.memory_space<vmem>>, vector<2x10xf32>,
    return
  }
}

module attributes {stable_mosaic.version = 11 : i64} {
  func.func @_bilstm_kernel(%arg0: i32, %arg1: memref<5x8x128xf32, #tpu.memory_space<vmem>>, %arg2: memref<5x8x128xf32, #tpu.memory_space<vmem>>, %arg3: memref<8x1xi32, #tpu.memory_space<vmem>>, %arg4: memref<2x32x128xf32, #tpu.memory_space<vmem>>, %arg5: memref<5x8x32xf32, #tpu.memory_space<vmem>>, %arg6: memref<5x8x32xf32, #tpu.memory_space<vmem>>, %arg7: memref<2x8x32xf32, #tpu.memory_space<vmem>>, %arg8: memref<8x32xf32, #tpu.memory_space<vmem>>, %arg9: memref<8x32xf32, #tpu.memory_space<vmem>>, %arg10: memref<8x32xf32, #tpu.memory_space<vmem>>, %arg11: memref<8x32xf32, #tpu.memory_space<vmem>>) attributes {dimension_semantics = [#tpu.dimension_semantics<arbitrary>], iteration_bounds = array<i64: 2>, scalar_prefetch = 0 : i64, scratch_operands = 4 : i64, tpu.core_type = #tpu.core_type<tc>, window_params = [{transform_indices = @transform_0, window_bounds = array<i64: 5, 8, 128>}, {transform_indices = @transform_1, window_bounds = array<i64: 5, 8, 128>}, {pipeline_mode = #tpu.pipeline_mode<synchronous>, transform_indices = @transform_2, window_bounds = array<i64: 8, 1>}, {pipeline_mode = #tpu.pipeline_mode<synchronous>, transform_indices = @transform_3, window_bounds = array<i64: 2, 32, 128>}, {transform_indices = @transform_4, window_bounds = array<i64: 5, 8, 32>}, {transform_indices = @transform_5, window_bounds = array<i64: 5, 8, 32>}, {pipeline_mode = #tpu.pipeline_mode<synchronous>, transform_indices = @transform_6, window_bounds = array<i64: 2, 8, 32>}]} {
    %c0_i32 = arith.constant 0 : i32
    %0 = arith.cmpi eq, %arg0, %c0_i32 : i32
    %1 = arith.extui %0 : i1 to i32
    %c0_i32_0 = arith.constant 0 : i32
    %2 = arith.cmpi ne, %1, %c0_i32_0 : i32
    scf.if %2 {
      %cst_113 = arith.constant 0.000000e+00 : f32
      %457 = vector.broadcast %cst_113 : f32 to vector<8x32xf32>
      %c0_114 = arith.constant 0 : index
      %c0_115 = arith.constant 0 : index
      %458 = vector.load %arg8[%c0_114, %c0_115] : memref<8x32xf32, #tpu.memory_space<vmem>>, vector<8x32xf32>
      tpu.vector_store %arg8[%c0_114, %c0_115], %457 {strides = array<i32>} : memref<8x32xf32, #tpu.memory_space<vmem>>, vector<8x32xf32>,
      %cst_116 = arith.constant 0.000000e+00 : f32
      %459 = vector.broadcast %cst_116 : f32 to vector<8x32xf32>
      %c0_117 = arith.constant 0 : index
      %c0_118 = arith.constant 0 : index
      %460 = vector.load %arg9[%c0_117, %c0_118] : memref<8x32xf32, #tpu.memory_space<vmem>>, vector<8x32xf32>
      tpu.vector_store %arg9[%c0_117, %c0_118], %459 {strides = array<i32>} : memref<8x32xf32, #tpu.memory_space<vmem>>, vector<8x32xf32>,
      %cst_119 = arith.constant 0.000000e+00 : f32
      %461 = vector.broadcast %cst_119 : f32 to vector<8x32xf32>
      %c0_120 = arith.constant 0 : index
      %c0_121 = arith.constant 0 : index
      %462 = vector.load %arg10[%c0_120, %c0_121] : memref<8x32xf32, #tpu.memory_space<vmem>>, vector<8x32xf32>
      tpu.vector_store %arg10[%c0_120, %c0_121], %461 {strides = array<i32>} : memref<8x32xf32, #tpu.memory_space<vmem>>, vector<8x32xf32>,
      %cst_122 = arith.constant 0.000000e+00 : f32
      %463 = vector.broadcast %cst_122 : f32 to vector<8x32xf32>
      %c0_123 = arith.constant 0 : index
      %c0_124 = arith.constant 0 : index
      %464 = vector.load %arg11[%c0_123, %c0_124] : memref<8x32xf32, #tpu.memory_space<vmem>>, vector<8x32xf32>
      tpu.vector_store %arg11[%c0_123, %c0_124], %463 {strides = array<i32>} : memref<8x32xf32, #tpu.memory_space<vmem>>, vector<8x32xf32>,
    } else {
    }
    %c0 = arith.constant 0 : index
    %c0_1 = arith.constant 0 : index
    %c0_2 = arith.constant 0 : index
    %3 = vector.load %arg4[%c0, %c0_1, %c0_2] : memref<2x32x128xf32, #tpu.memory_space<vmem>>, vector<1x32x128xf32>
    %4 = vector.shape_cast %3 : vector<1x32x128xf32> to vector<32x128xf32>
    %c1 = arith.constant 1 : index
    %c0_3 = arith.constant 0 : index
    %c0_4 = arith.constant 0 : index
    %5 = vector.load %arg4[%c1, %c0_3, %c0_4] : memref<2x32x128xf32, #tpu.memory_space<vmem>>, vector<1x32x128xf32>
    %6 = vector.shape_cast %5 : vector<1x32x128xf32> to vector<32x128xf32>
    %c0_5 = arith.constant 0 : index
    %c0_6 = arith.constant 0 : index
    %7 = vector.load %arg3[%c0_5, %c0_6] : memref<8x1xi32, #tpu.memory_space<vmem>>, vector<8x1xi32>
    %c5_i32 = arith.constant 5 : i32
    %8 = arith.muli %arg0, %c5_i32 : i32
    %c1_i32 = arith.constant 1 : i32
    %9 = arith.subi %c1_i32, %arg0 : i32
    %c5_i32_7 = arith.constant 5 : i32
    %10 = arith.muli %9, %c5_i32_7 : i32
    %c0_8 = arith.constant 0 : index
    %c0_9 = arith.constant 0 : index
    %11 = vector.load %arg8[%c0_8, %c0_9] : memref<8x32xf32, #tpu.memory_space<vmem>>, vector<8x32xf32>
    %c0_10 = arith.constant 0 : index
    %c0_11 = arith.constant 0 : index
    %12 = vector.load %arg9[%c0_10, %c0_11] : memref<8x32xf32, #tpu.memory_space<vmem>>, vector<8x32xf32>
    %c0_12 = arith.constant 0 : index
    %c0_13 = arith.constant 0 : index
    %13 = vector.load %arg10[%c0_12, %c0_13] : memref<8x32xf32, #tpu.memory_space<vmem>>, vector<8x32xf32>
    %c0_14 = arith.constant 0 : index
    %c0_15 = arith.constant 0 : index
    %14 = vector.load %arg11[%c0_14, %c0_15] : memref<8x32xf32, #tpu.memory_space<vmem>>, vector<8x32xf32>
    %c0_i32_16 = arith.constant 0 : i32
    %c4_i32 = arith.constant 4 : i32
    %15 = arith.subi %c4_i32, %c0_i32_16 : i32
    %16 = arith.index_cast %c0_i32_16 : i32 to index
    %c0_17 = arith.constant 0 : index
    %c0_18 = arith.constant 0 : index
    %17 = vector.load %arg1[%16, %c0_17, %c0_18] : memref<5x8x128xf32, #tpu.memory_space<vmem>>, vector<1x8x128xf32>
    %18 = vector.shape_cast %17 : vector<1x8x128xf32> to vector<8x128xf32>
    %19 = arith.addi %8, %c0_i32_16 : i32
    %cst = arith.constant dense<0.000000e+00> : vector<8x128xf32>
    %20 = tpu.matmul %11, %4, %cst {dimension_numbers = #tpu.dot_dimension_numbers<[1], [0], [0], [1], [0, 0, 1, 1], [], []>} : vector<8x32xf32>, vector<32x128xf32>, vector<8x128xf32> -> vector<8x128xf32>
    %21 = arith.addf %18, %20 : vector<8x128xf32>
    %22 = vector.extract_strided_slice %21 {offsets = [0, 0], sizes = [8, 32], strides = [1, 1]} : vector<8x128xf32> to vector<8x32xf32>
    %23 = arith.negf %22 : vector<8x32xf32>
    %24 = math.exp %23 : vector<8x32xf32>
    %cst_19 = arith.constant 1.000000e+00 : f32
    %25 = vector.broadcast %cst_19 : f32 to vector<8x32xf32>
    %26 = arith.addf %25, %24 : vector<8x32xf32>
    %27 = arith.divf %25, %26 : vector<8x32xf32>
    %28 = vector.extract_strided_slice %21 {offsets = [0, 32], sizes = [8, 32], strides = [1, 1]} : vector<8x128xf32> to vector<8x32xf32>
    %29 = arith.negf %28 : vector<8x32xf32>
    %30 = math.exp %29 : vector<8x32xf32>
    %cst_20 = arith.constant 1.000000e+00 : f32
    %31 = vector.broadcast %cst_20 : f32 to vector<8x32xf32>
    %32 = arith.addf %31, %30 : vector<8x32xf32>
    %33 = arith.divf %31, %32 : vector<8x32xf32>
    %34 = vector.extract_strided_slice %21 {offsets = [0, 64], sizes = [8, 32], strides = [1, 1]} : vector<8x128xf32> to vector<8x32xf32>
    %35 = math.tanh %34 : vector<8x32xf32>
    %36 = vector.extract_strided_slice %21 {offsets = [0, 96], sizes = [8, 32], strides = [1, 1]} : vector<8x128xf32> to vector<8x32xf32>
    %37 = arith.negf %36 : vector<8x32xf32>
    %38 = math.exp %37 : vector<8x32xf32>
    %cst_21 = arith.constant 1.000000e+00 : f32
    %39 = vector.broadcast %cst_21 : f32 to vector<8x32xf32>
    %40 = arith.addf %39, %38 : vector<8x32xf32>
    %41 = arith.divf %39, %40 : vector<8x32xf32>
    %42 = arith.mulf %33, %12 : vector<8x32xf32>
    %43 = arith.mulf %27, %35 : vector<8x32xf32>
    %44 = arith.addf %42, %43 : vector<8x32xf32>
    %45 = math.tanh %44 : vector<8x32xf32>
    %46 = arith.mulf %41, %45 : vector<8x32xf32>
    %47 = vector.broadcast %19 : i32 to vector<8x1xi32>
    %48 = arith.cmpi sgt, %7, %47 : vector<8x1xi32>
    %49 = vector.shape_cast %48 : vector<8x1xi1> to vector<8x1xi1>
    %50 = vector.broadcast %49 : vector<8x1xi1> to vector<8x32xi1>
    %51 = arith.select %50, %46, %11 : vector<8x32xi1>, vector<8x32xf32>
    %52 = vector.shape_cast %48 : vector<8x1xi1> to vector<8x1xi1>
    %53 = vector.broadcast %52 : vector<8x1xi1> to vector<8x32xi1>
    %54 = arith.select %53, %44, %12 : vector<8x32xi1>, vector<8x32xf32>
    %55 = arith.index_cast %15 : i32 to index
    %c0_22 = arith.constant 0 : index
    %c0_23 = arith.constant 0 : index
    %56 = vector.load %arg2[%55, %c0_22, %c0_23] : memref<5x8x128xf32, #tpu.memory_space<vmem>>, vector<1x8x128xf32>
    %57 = vector.shape_cast %56 : vector<1x8x128xf32> to vector<8x128xf32>
    %58 = arith.addi %10, %15 : i32
    %cst_24 = arith.constant dense<0.000000e+00> : vector<8x128xf32>
    %59 = tpu.matmul %13, %6, %cst_24 {dimension_numbers = #tpu.dot_dimension_numbers<[1], [0], [0], [1], [0, 0, 1, 1], [], []>} : vector<8x32xf32>, vector<32x128xf32>, vector<8x128xf32> -> vector<8x128xf32>
    %60 = arith.addf %57, %59 : vector<8x128xf32>
    %61 = vector.extract_strided_slice %60 {offsets = [0, 0], sizes = [8, 32], strides = [1, 1]} : vector<8x128xf32> to vector<8x32xf32>
    %62 = arith.negf %61 : vector<8x32xf32>
    %63 = math.exp %62 : vector<8x32xf32>
    %cst_25 = arith.constant 1.000000e+00 : f32
    %64 = vector.broadcast %cst_25 : f32 to vector<8x32xf32>
    %65 = arith.addf %64, %63 : vector<8x32xf32>
    %66 = arith.divf %64, %65 : vector<8x32xf32>
    %67 = vector.extract_strided_slice %60 {offsets = [0, 32], sizes = [8, 32], strides = [1, 1]} : vector<8x128xf32> to vector<8x32xf32>
    %68 = arith.negf %67 : vector<8x32xf32>
    %69 = math.exp %68 : vector<8x32xf32>
    %cst_26 = arith.constant 1.000000e+00 : f32
    %70 = vector.broadcast %cst_26 : f32 to vector<8x32xf32>
    %71 = arith.addf %70, %69 : vector<8x32xf32>
    %72 = arith.divf %70, %71 : vector<8x32xf32>
    %73 = vector.extract_strided_slice %60 {offsets = [0, 64], sizes = [8, 32], strides = [1, 1]} : vector<8x128xf32> to vector<8x32xf32>
    %74 = math.tanh %73 : vector<8x32xf32>
    %75 = vector.extract_strided_slice %60 {offsets = [0, 96], sizes = [8, 32], strides = [1, 1]} : vector<8x128xf32> to vector<8x32xf32>
    %76 = arith.negf %75 : vector<8x32xf32>
    %77 = math.exp %76 : vector<8x32xf32>
    %cst_27 = arith.constant 1.000000e+00 : f32
    %78 = vector.broadcast %cst_27 : f32 to vector<8x32xf32>
    %79 = arith.addf %78, %77 : vector<8x32xf32>
    %80 = arith.divf %78, %79 : vector<8x32xf32>
    %81 = arith.mulf %72, %14 : vector<8x32xf32>
    %82 = arith.mulf %66, %74 : vector<8x32xf32>
    %83 = arith.addf %81, %82 : vector<8x32xf32>
    %84 = math.tanh %83 : vector<8x32xf32>
    %85 = arith.mulf %80, %84 : vector<8x32xf32>
    %86 = vector.broadcast %58 : i32 to vector<8x1xi32>
    %87 = arith.cmpi sgt, %7, %86 : vector<8x1xi32>
    %88 = vector.shape_cast %87 : vector<8x1xi1> to vector<8x1xi1>
    %89 = vector.broadcast %88 : vector<8x1xi1> to vector<8x32xi1>
    %90 = arith.select %89, %85, %13 : vector<8x32xi1>, vector<8x32xf32>
    %91 = vector.shape_cast %87 : vector<8x1xi1> to vector<8x1xi1>
    %92 = vector.broadcast %91 : vector<8x1xi1> to vector<8x32xi1>
    %93 = arith.select %92, %83, %14 : vector<8x32xi1>, vector<8x32xf32>
    %94 = arith.index_cast %c0_i32_16 : i32 to index
    %c0_28 = arith.constant 0 : index
    %c0_29 = arith.constant 0 : index
    %95 = vector.load %arg5[%94, %c0_28, %c0_29] : memref<5x8x32xf32, #tpu.memory_space<vmem>>, vector<1x8x32xf32>
    %96 = vector.shape_cast %95 : vector<1x8x32xf32> to vector<8x32xf32>
    %97 = vector.shape_cast %51 : vector<8x32xf32> to vector<1x8x32xf32>
    tpu.vector_store %arg5[%94, %c0_28, %c0_29], %97 {strides = array<i32>} : memref<5x8x32xf32, #tpu.memory_space<vmem>>, vector<1x8x32xf32>,
    %98 = arith.index_cast %15 : i32 to index
    %c0_30 = arith.constant 0 : index
    %c0_31 = arith.constant 0 : index
    %99 = vector.load %arg6[%98, %c0_30, %c0_31] : memref<5x8x32xf32, #tpu.memory_space<vmem>>, vector<1x8x32xf32>
    %100 = vector.shape_cast %99 : vector<1x8x32xf32> to vector<8x32xf32>
    %101 = vector.shape_cast %90 : vector<8x32xf32> to vector<1x8x32xf32>
    tpu.vector_store %arg6[%98, %c0_30, %c0_31], %101 {strides = array<i32>} : memref<5x8x32xf32, #tpu.memory_space<vmem>>, vector<1x8x32xf32>,
    %c1_i32_32 = arith.constant 1 : i32
    %c4_i32_33 = arith.constant 4 : i32
    %102 = arith.subi %c4_i32_33, %c1_i32_32 : i32
    %103 = arith.index_cast %c1_i32_32 : i32 to index
    %c0_34 = arith.constant 0 : index
    %c0_35 = arith.constant 0 : index
    %104 = vector.load %arg1[%103, %c0_34, %c0_35] : memref<5x8x128xf32, #tpu.memory_space<vmem>>, vector<1x8x128xf32>
    %105 = vector.shape_cast %104 : vector<1x8x128xf32> to vector<8x128xf32>
    %106 = arith.addi %8, %c1_i32_32 : i32
    %cst_36 = arith.constant dense<0.000000e+00> : vector<8x128xf32>
    %107 = tpu.matmul %51, %4, %cst_36 {dimension_numbers = #tpu.dot_dimension_numbers<[1], [0], [0], [1], [0, 0, 1, 1], [], []>} : vector<8x32xf32>, vector<32x128xf32>, vector<8x128xf32> -> vector<8x128xf32>
    %108 = arith.addf %105, %107 : vector<8x128xf32>
    %109 = vector.extract_strided_slice %108 {offsets = [0, 0], sizes = [8, 32], strides = [1, 1]} : vector<8x128xf32> to vector<8x32xf32>
    %110 = arith.negf %109 : vector<8x32xf32>
    %111 = math.exp %110 : vector<8x32xf32>
    %cst_37 = arith.constant 1.000000e+00 : f32
    %112 = vector.broadcast %cst_37 : f32 to vector<8x32xf32>
    %113 = arith.addf %112, %111 : vector<8x32xf32>
    %114 = arith.divf %112, %113 : vector<8x32xf32>
    %115 = vector.extract_strided_slice %108 {offsets = [0, 32], sizes = [8, 32], strides = [1, 1]} : vector<8x128xf32> to vector<8x32xf32>
    %116 = arith.negf %115 : vector<8x32xf32>
    %117 = math.exp %116 : vector<8x32xf32>
    %cst_38 = arith.constant 1.000000e+00 : f32
    %118 = vector.broadcast %cst_38 : f32 to vector<8x32xf32>
    %119 = arith.addf %118, %117 : vector<8x32xf32>
    %120 = arith.divf %118, %119 : vector<8x32xf32>
    %121 = vector.extract_strided_slice %108 {offsets = [0, 64], sizes = [8, 32], strides = [1, 1]} : vector<8x128xf32> to vector<8x32xf32>
    %122 = math.tanh %121 : vector<8x32xf32>
    %123 = vector.extract_strided_slice %108 {offsets = [0, 96], sizes = [8, 32], strides = [1, 1]} : vector<8x128xf32> to vector<8x32xf32>
    %124 = arith.negf %123 : vector<8x32xf32>
    %125 = math.exp %124 : vector<8x32xf32>
    %cst_39 = arith.constant 1.000000e+00 : f32
    %126 = vector.broadcast %cst_39 : f32 to vector<8x32xf32>
    %127 = arith.addf %126, %125 : vector<8x32xf32>
    %128 = arith.divf %126, %127 : vector<8x32xf32>
    %129 = arith.mulf %120, %54 : vector<8x32xf32>
    %130 = arith.mulf %114, %122 : vector<8x32xf32>
    %131 = arith.addf %129, %130 : vector<8x32xf32>
    %132 = math.tanh %131 : vector<8x32xf32>
    %133 = arith.mulf %128, %132 : vector<8x32xf32>
    %134 = vector.broadcast %106 : i32 to vector<8x1xi32>
    %135 = arith.cmpi sgt, %7, %134 : vector<8x1xi32>
    %136 = vector.shape_cast %135 : vector<8x1xi1> to vector<8x1xi1>
    %137 = vector.broadcast %136 : vector<8x1xi1> to vector<8x32xi1>
    %138 = arith.select %137, %133, %51 : vector<8x32xi1>, vector<8x32xf32>
    %139 = vector.shape_cast %135 : vector<8x1xi1> to vector<8x1xi1>
    %140 = vector.broadcast %139 : vector<8x1xi1> to vector<8x32xi1>
    %141 = arith.select %140, %131, %54 : vector<8x32xi1>, vector<8x32xf32>
    %142 = arith.index_cast %102 : i32 to index
    %c0_40 = arith.constant 0 : index
    %c0_41 = arith.constant 0 : index
    %143 = vector.load %arg2[%142, %c0_40, %c0_41] : memref<5x8x128xf32, #tpu.memory_space<vmem>>, vector<1x8x128xf32>
    %144 = vector.shape_cast %143 : vector<1x8x128xf32> to vector<8x128xf32>
    %145 = arith.addi %10, %102 : i32
    %cst_42 = arith.constant dense<0.000000e+00> : vector<8x128xf32>
    %146 = tpu.matmul %90, %6, %cst_42 {dimension_numbers = #tpu.dot_dimension_numbers<[1], [0], [0], [1], [0, 0, 1, 1], [], []>} : vector<8x32xf32>, vector<32x128xf32>, vector<8x128xf32> -> vector<8x128xf32>
    %147 = arith.addf %144, %146 : vector<8x128xf32>
    %148 = vector.extract_strided_slice %147 {offsets = [0, 0], sizes = [8, 32], strides = [1, 1]} : vector<8x128xf32> to vector<8x32xf32>
    %149 = arith.negf %148 : vector<8x32xf32>
    %150 = math.exp %149 : vector<8x32xf32>
    %cst_43 = arith.constant 1.000000e+00 : f32
    %151 = vector.broadcast %cst_43 : f32 to vector<8x32xf32>
    %152 = arith.addf %151, %150 : vector<8x32xf32>
    %153 = arith.divf %151, %152 : vector<8x32xf32>
    %154 = vector.extract_strided_slice %147 {offsets = [0, 32], sizes = [8, 32], strides = [1, 1]} : vector<8x128xf32> to vector<8x32xf32>
    %155 = arith.negf %154 : vector<8x32xf32>
    %156 = math.exp %155 : vector<8x32xf32>
    %cst_44 = arith.constant 1.000000e+00 : f32
    %157 = vector.broadcast %cst_44 : f32 to vector<8x32xf32>
    %158 = arith.addf %157, %156 : vector<8x32xf32>
    %159 = arith.divf %157, %158 : vector<8x32xf32>
    %160 = vector.extract_strided_slice %147 {offsets = [0, 64], sizes = [8, 32], strides = [1, 1]} : vector<8x128xf32> to vector<8x32xf32>
    %161 = math.tanh %160 : vector<8x32xf32>
    %162 = vector.extract_strided_slice %147 {offsets = [0, 96], sizes = [8, 32], strides = [1, 1]} : vector<8x128xf32> to vector<8x32xf32>
    %163 = arith.negf %162 : vector<8x32xf32>
    %164 = math.exp %163 : vector<8x32xf32>
    %cst_45 = arith.constant 1.000000e+00 : f32
    %165 = vector.broadcast %cst_45 : f32 to vector<8x32xf32>
    %166 = arith.addf %165, %164 : vector<8x32xf32>
    %167 = arith.divf %165, %166 : vector<8x32xf32>
    %168 = arith.mulf %159, %93 : vector<8x32xf32>
    %169 = arith.mulf %153, %161 : vector<8x32xf32>
    %170 = arith.addf %168, %169 : vector<8x32xf32>
    %171 = math.tanh %170 : vector<8x32xf32>
    %172 = arith.mulf %167, %171 : vector<8x32xf32>
    %173 = vector.broadcast %145 : i32 to vector<8x1xi32>
    %174 = arith.cmpi sgt, %7, %173 : vector<8x1xi32>
    %175 = vector.shape_cast %174 : vector<8x1xi1> to vector<8x1xi1>
    %176 = vector.broadcast %175 : vector<8x1xi1> to vector<8x32xi1>
    %177 = arith.select %176, %172, %90 : vector<8x32xi1>, vector<8x32xf32>
    %178 = vector.shape_cast %174 : vector<8x1xi1> to vector<8x1xi1>
    %179 = vector.broadcast %178 : vector<8x1xi1> to vector<8x32xi1>
    %180 = arith.select %179, %170, %93 : vector<8x32xi1>, vector<8x32xf32>
    %181 = arith.index_cast %c1_i32_32 : i32 to index
    %c0_46 = arith.constant 0 : index
    %c0_47 = arith.constant 0 : index
    %182 = vector.load %arg5[%181, %c0_46, %c0_47] : memref<5x8x32xf32, #tpu.memory_space<vmem>>, vector<1x8x32xf32>
    %183 = vector.shape_cast %182 : vector<1x8x32xf32> to vector<8x32xf32>
    %184 = vector.shape_cast %138 : vector<8x32xf32> to vector<1x8x32xf32>
    tpu.vector_store %arg5[%181, %c0_46, %c0_47], %184 {strides = array<i32>} : memref<5x8x32xf32, #tpu.memory_space<vmem>>, vector<1x8x32xf32>,
    %185 = arith.index_cast %102 : i32 to index
    %c0_48 = arith.constant 0 : index
    %c0_49 = arith.constant 0 : index
    %186 = vector.load %arg6[%185, %c0_48, %c0_49] : memref<5x8x32xf32, #tpu.memory_space<vmem>>, vector<1x8x32xf32>
    %187 = vector.shape_cast %186 : vector<1x8x32xf32> to vector<8x32xf32>
    %188 = vector.shape_cast %177 : vector<8x32xf32> to vector<1x8x32xf32>
    tpu.vector_store %arg6[%185, %c0_48, %c0_49], %188 {strides = array<i32>} : memref<5x8x32xf32, #tpu.memory_space<vmem>>, vector<1x8x32xf32>,
    %c2_i32 = arith.constant 2 : i32
    %c4_i32_50 = arith.constant 4 : i32
    %189 = arith.subi %c4_i32_50, %c2_i32 : i32
    %190 = arith.index_cast %c2_i32 : i32 to index
    %c0_51 = arith.constant 0 : index
    %c0_52 = arith.constant 0 : index
    %191 = vector.load %arg1[%190, %c0_51, %c0_52] : memref<5x8x128xf32, #tpu.memory_space<vmem>>, vector<1x8x128xf32>
    %192 = vector.shape_cast %191 : vector<1x8x128xf32> to vector<8x128xf32>
    %193 = arith.addi %8, %c2_i32 : i32
    %cst_53 = arith.constant dense<0.000000e+00> : vector<8x128xf32>
    %194 = tpu.matmul %138, %4, %cst_53 {dimension_numbers = #tpu.dot_dimension_numbers<[1], [0], [0], [1], [0, 0, 1, 1], [], []>} : vector<8x32xf32>, vector<32x128xf32>, vector<8x128xf32> -> vector<8x128xf32>
    %195 = arith.addf %192, %194 : vector<8x128xf32>
    %196 = vector.extract_strided_slice %195 {offsets = [0, 0], sizes = [8, 32], strides = [1, 1]} : vector<8x128xf32> to vector<8x32xf32>
    %197 = arith.negf %196 : vector<8x32xf32>
    %198 = math.exp %197 : vector<8x32xf32>
    %cst_54 = arith.constant 1.000000e+00 : f32
    %199 = vector.broadcast %cst_54 : f32 to vector<8x32xf32>
    %200 = arith.addf %199, %198 : vector<8x32xf32>
    %201 = arith.divf %199, %200 : vector<8x32xf32>
    %202 = vector.extract_strided_slice %195 {offsets = [0, 32], sizes = [8, 32], strides = [1, 1]} : vector<8x128xf32> to vector<8x32xf32>
    %203 = arith.negf %202 : vector<8x32xf32>
    %204 = math.exp %203 : vector<8x32xf32>
    %cst_55 = arith.constant 1.000000e+00 : f32
    %205 = vector.broadcast %cst_55 : f32 to vector<8x32xf32>
    %206 = arith.addf %205, %204 : vector<8x32xf32>
    %207 = arith.divf %205, %206 : vector<8x32xf32>
    %208 = vector.extract_strided_slice %195 {offsets = [0, 64], sizes = [8, 32], strides = [1, 1]} : vector<8x128xf32> to vector<8x32xf32>
    %209 = math.tanh %208 : vector<8x32xf32>
    %210 = vector.extract_strided_slice %195 {offsets = [0, 96], sizes = [8, 32], strides = [1, 1]} : vector<8x128xf32> to vector<8x32xf32>
    %211 = arith.negf %210 : vector<8x32xf32>
    %212 = math.exp %211 : vector<8x32xf32>
    %cst_56 = arith.constant 1.000000e+00 : f32
    %213 = vector.broadcast %cst_56 : f32 to vector<8x32xf32>
    %214 = arith.addf %213, %212 : vector<8x32xf32>
    %215 = arith.divf %213, %214 : vector<8x32xf32>
    %216 = arith.mulf %207, %141 : vector<8x32xf32>
    %217 = arith.mulf %201, %209 : vector<8x32xf32>
    %218 = arith.addf %216, %217 : vector<8x32xf32>
    %219 = math.tanh %218 : vector<8x32xf32>
    %220 = arith.mulf %215, %219 : vector<8x32xf32>
    %221 = vector.broadcast %193 : i32 to vector<8x1xi32>
    %222 = arith.cmpi sgt, %7, %221 : vector<8x1xi32>
    %223 = vector.shape_cast %222 : vector<8x1xi1> to vector<8x1xi1>
    %224 = vector.broadcast %223 : vector<8x1xi1> to vector<8x32xi1>
    %225 = arith.select %224, %220, %138 : vector<8x32xi1>, vector<8x32xf32>
    %226 = vector.shape_cast %222 : vector<8x1xi1> to vector<8x1xi1>
    %227 = vector.broadcast %226 : vector<8x1xi1> to vector<8x32xi1>
    %228 = arith.select %227, %218, %141 : vector<8x32xi1>, vector<8x32xf32>
    %229 = arith.index_cast %189 : i32 to index
    %c0_57 = arith.constant 0 : index
    %c0_58 = arith.constant 0 : index
    %230 = vector.load %arg2[%229, %c0_57, %c0_58] : memref<5x8x128xf32, #tpu.memory_space<vmem>>, vector<1x8x128xf32>
    %231 = vector.shape_cast %230 : vector<1x8x128xf32> to vector<8x128xf32>
    %232 = arith.addi %10, %189 : i32
    %cst_59 = arith.constant dense<0.000000e+00> : vector<8x128xf32>
    %233 = tpu.matmul %177, %6, %cst_59 {dimension_numbers = #tpu.dot_dimension_numbers<[1], [0], [0], [1], [0, 0, 1, 1], [], []>} : vector<8x32xf32>, vector<32x128xf32>, vector<8x128xf32> -> vector<8x128xf32>
    %234 = arith.addf %231, %233 : vector<8x128xf32>
    %235 = vector.extract_strided_slice %234 {offsets = [0, 0], sizes = [8, 32], strides = [1, 1]} : vector<8x128xf32> to vector<8x32xf32>
    %236 = arith.negf %235 : vector<8x32xf32>
    %237 = math.exp %236 : vector<8x32xf32>
    %cst_60 = arith.constant 1.000000e+00 : f32
    %238 = vector.broadcast %cst_60 : f32 to vector<8x32xf32>
    %239 = arith.addf %238, %237 : vector<8x32xf32>
    %240 = arith.divf %238, %239 : vector<8x32xf32>
    %241 = vector.extract_strided_slice %234 {offsets = [0, 32], sizes = [8, 32], strides = [1, 1]} : vector<8x128xf32> to vector<8x32xf32>
    %242 = arith.negf %241 : vector<8x32xf32>
    %243 = math.exp %242 : vector<8x32xf32>
    %cst_61 = arith.constant 1.000000e+00 : f32
    %244 = vector.broadcast %cst_61 : f32 to vector<8x32xf32>
    %245 = arith.addf %244, %243 : vector<8x32xf32>
    %246 = arith.divf %244, %245 : vector<8x32xf32>
    %247 = vector.extract_strided_slice %234 {offsets = [0, 64], sizes = [8, 32], strides = [1, 1]} : vector<8x128xf32> to vector<8x32xf32>
    %248 = math.tanh %247 : vector<8x32xf32>
    %249 = vector.extract_strided_slice %234 {offsets = [0, 96], sizes = [8, 32], strides = [1, 1]} : vector<8x128xf32> to vector<8x32xf32>
    %250 = arith.negf %249 : vector<8x32xf32>
    %251 = math.exp %250 : vector<8x32xf32>
    %cst_62 = arith.constant 1.000000e+00 : f32
    %252 = vector.broadcast %cst_62 : f32 to vector<8x32xf32>
    %253 = arith.addf %252, %251 : vector<8x32xf32>
    %254 = arith.divf %252, %253 : vector<8x32xf32>
    %255 = arith.mulf %246, %180 : vector<8x32xf32>
    %256 = arith.mulf %240, %248 : vector<8x32xf32>
    %257 = arith.addf %255, %256 : vector<8x32xf32>
    %258 = math.tanh %257 : vector<8x32xf32>
    %259 = arith.mulf %254, %258 : vector<8x32xf32>
    %260 = vector.broadcast %232 : i32 to vector<8x1xi32>
    %261 = arith.cmpi sgt, %7, %260 : vector<8x1xi32>
    %262 = vector.shape_cast %261 : vector<8x1xi1> to vector<8x1xi1>
    %263 = vector.broadcast %262 : vector<8x1xi1> to vector<8x32xi1>
    %264 = arith.select %263, %259, %177 : vector<8x32xi1>, vector<8x32xf32>
    %265 = vector.shape_cast %261 : vector<8x1xi1> to vector<8x1xi1>
    %266 = vector.broadcast %265 : vector<8x1xi1> to vector<8x32xi1>
    %267 = arith.select %266, %257, %180 : vector<8x32xi1>, vector<8x32xf32>
    %268 = arith.index_cast %c2_i32 : i32 to index
    %c0_63 = arith.constant 0 : index
    %c0_64 = arith.constant 0 : index
    %269 = vector.load %arg5[%268, %c0_63, %c0_64] : memref<5x8x32xf32, #tpu.memory_space<vmem>>, vector<1x8x32xf32>
    %270 = vector.shape_cast %269 : vector<1x8x32xf32> to vector<8x32xf32>
    %271 = vector.shape_cast %225 : vector<8x32xf32> to vector<1x8x32xf32>
    tpu.vector_store %arg5[%268, %c0_63, %c0_64], %271 {strides = array<i32>} : memref<5x8x32xf32, #tpu.memory_space<vmem>>, vector<1x8x32xf32>,
    %272 = arith.index_cast %189 : i32 to index
    %c0_65 = arith.constant 0 : index
    %c0_66 = arith.constant 0 : index
    %273 = vector.load %arg6[%272, %c0_65, %c0_66] : memref<5x8x32xf32, #tpu.memory_space<vmem>>, vector<1x8x32xf32>
    %274 = vector.shape_cast %273 : vector<1x8x32xf32> to vector<8x32xf32>
    %275 = vector.shape_cast %264 : vector<8x32xf32> to vector<1x8x32xf32>
    tpu.vector_store %arg6[%272, %c0_65, %c0_66], %275 {strides = array<i32>} : memref<5x8x32xf32, #tpu.memory_space<vmem>>, vector<1x8x32xf32>,
    %c3_i32 = arith.constant 3 : i32
    %c4_i32_67 = arith.constant 4 : i32
    %276 = arith.subi %c4_i32_67, %c3_i32 : i32
    %277 = arith.index_cast %c3_i32 : i32 to index
    %c0_68 = arith.constant 0 : index
    %c0_69 = arith.constant 0 : index
    %278 = vector.load %arg1[%277, %c0_68, %c0_69] : memref<5x8x128xf32, #tpu.memory_space<vmem>>, vector<1x8x128xf32>
    %279 = vector.shape_cast %278 : vector<1x8x128xf32> to vector<8x128xf32>
    %280 = arith.addi %8, %c3_i32 : i32
    %cst_70 = arith.constant dense<0.000000e+00> : vector<8x128xf32>
    %281 = tpu.matmul %225, %4, %cst_70 {dimension_numbers = #tpu.dot_dimension_numbers<[1], [0], [0], [1], [0, 0, 1, 1], [], []>} : vector<8x32xf32>, vector<32x128xf32>, vector<8x128xf32> -> vector<8x128xf32>
    %282 = arith.addf %279, %281 : vector<8x128xf32>
    %283 = vector.extract_strided_slice %282 {offsets = [0, 0], sizes = [8, 32], strides = [1, 1]} : vector<8x128xf32> to vector<8x32xf32>
    %284 = arith.negf %283 : vector<8x32xf32>
    %285 = math.exp %284 : vector<8x32xf32>
    %cst_71 = arith.constant 1.000000e+00 : f32
    %286 = vector.broadcast %cst_71 : f32 to vector<8x32xf32>
    %287 = arith.addf %286, %285 : vector<8x32xf32>
    %288 = arith.divf %286, %287 : vector<8x32xf32>
    %289 = vector.extract_strided_slice %282 {offsets = [0, 32], sizes = [8, 32], strides = [1, 1]} : vector<8x128xf32> to vector<8x32xf32>
    %290 = arith.negf %289 : vector<8x32xf32>
    %291 = math.exp %290 : vector<8x32xf32>
    %cst_72 = arith.constant 1.000000e+00 : f32
    %292 = vector.broadcast %cst_72 : f32 to vector<8x32xf32>
    %293 = arith.addf %292, %291 : vector<8x32xf32>
    %294 = arith.divf %292, %293 : vector<8x32xf32>
    %295 = vector.extract_strided_slice %282 {offsets = [0, 64], sizes = [8, 32], strides = [1, 1]} : vector<8x128xf32> to vector<8x32xf32>
    %296 = math.tanh %295 : vector<8x32xf32>
    %297 = vector.extract_strided_slice %282 {offsets = [0, 96], sizes = [8, 32], strides = [1, 1]} : vector<8x128xf32> to vector<8x32xf32>
    %298 = arith.negf %297 : vector<8x32xf32>
    %299 = math.exp %298 : vector<8x32xf32>
    %cst_73 = arith.constant 1.000000e+00 : f32
    %300 = vector.broadcast %cst_73 : f32 to vector<8x32xf32>
    %301 = arith.addf %300, %299 : vector<8x32xf32>
    %302 = arith.divf %300, %301 : vector<8x32xf32>
    %303 = arith.mulf %294, %228 : vector<8x32xf32>
    %304 = arith.mulf %288, %296 : vector<8x32xf32>
    %305 = arith.addf %303, %304 : vector<8x32xf32>
    %306 = math.tanh %305 : vector<8x32xf32>
    %307 = arith.mulf %302, %306 : vector<8x32xf32>
    %308 = vector.broadcast %280 : i32 to vector<8x1xi32>
    %309 = arith.cmpi sgt, %7, %308 : vector<8x1xi32>
    %310 = vector.shape_cast %309 : vector<8x1xi1> to vector<8x1xi1>
    %311 = vector.broadcast %310 : vector<8x1xi1> to vector<8x32xi1>
    %312 = arith.select %311, %307, %225 : vector<8x32xi1>, vector<8x32xf32>
    %313 = vector.shape_cast %309 : vector<8x1xi1> to vector<8x1xi1>
    %314 = vector.broadcast %313 : vector<8x1xi1> to vector<8x32xi1>
    %315 = arith.select %314, %305, %228 : vector<8x32xi1>, vector<8x32xf32>
    %316 = arith.index_cast %276 : i32 to index
    %c0_74 = arith.constant 0 : index
    %c0_75 = arith.constant 0 : index
    %317 = vector.load %arg2[%316, %c0_74, %c0_75] : memref<5x8x128xf32, #tpu.memory_space<vmem>>, vector<1x8x128xf32>
    %318 = vector.shape_cast %317 : vector<1x8x128xf32> to vector<8x128xf32>
    %319 = arith.addi %10, %276 : i32
    %cst_76 = arith.constant dense<0.000000e+00> : vector<8x128xf32>
    %320 = tpu.matmul %264, %6, %cst_76 {dimension_numbers = #tpu.dot_dimension_numbers<[1], [0], [0], [1], [0, 0, 1, 1], [], []>} : vector<8x32xf32>, vector<32x128xf32>, vector<8x128xf32> -> vector<8x128xf32>
    %321 = arith.addf %318, %320 : vector<8x128xf32>
    %322 = vector.extract_strided_slice %321 {offsets = [0, 0], sizes = [8, 32], strides = [1, 1]} : vector<8x128xf32> to vector<8x32xf32>
    %323 = arith.negf %322 : vector<8x32xf32>
    %324 = math.exp %323 : vector<8x32xf32>
    %cst_77 = arith.constant 1.000000e+00 : f32
    %325 = vector.broadcast %cst_77 : f32 to vector<8x32xf32>
    %326 = arith.addf %325, %324 : vector<8x32xf32>
    %327 = arith.divf %325, %326 : vector<8x32xf32>
    %328 = vector.extract_strided_slice %321 {offsets = [0, 32], sizes = [8, 32], strides = [1, 1]} : vector<8x128xf32> to vector<8x32xf32>
    %329 = arith.negf %328 : vector<8x32xf32>
    %330 = math.exp %329 : vector<8x32xf32>
    %cst_78 = arith.constant 1.000000e+00 : f32
    %331 = vector.broadcast %cst_78 : f32 to vector<8x32xf32>
    %332 = arith.addf %331, %330 : vector<8x32xf32>
    %333 = arith.divf %331, %332 : vector<8x32xf32>
    %334 = vector.extract_strided_slice %321 {offsets = [0, 64], sizes = [8, 32], strides = [1, 1]} : vector<8x128xf32> to vector<8x32xf32>
    %335 = math.tanh %334 : vector<8x32xf32>
    %336 = vector.extract_strided_slice %321 {offsets = [0, 96], sizes = [8, 32], strides = [1, 1]} : vector<8x128xf32> to vector<8x32xf32>
    %337 = arith.negf %336 : vector<8x32xf32>
    %338 = math.exp %337 : vector<8x32xf32>
    %cst_79 = arith.constant 1.000000e+00 : f32
    %339 = vector.broadcast %cst_79 : f32 to vector<8x32xf32>
    %340 = arith.addf %339, %338 : vector<8x32xf32>
    %341 = arith.divf %339, %340 : vector<8x32xf32>
    %342 = arith.mulf %333, %267 : vector<8x32xf32>
    %343 = arith.mulf %327, %335 : vector<8x32xf32>
    %344 = arith.addf %342, %343 : vector<8x32xf32>
    %345 = math.tanh %344 : vector<8x32xf32>
    %346 = arith.mulf %341, %345 : vector<8x32xf32>
    %347 = vector.broadcast %319 : i32 to vector<8x1xi32>
    %348 = arith.cmpi sgt, %7, %347 : vector<8x1xi32>
    %349 = vector.shape_cast %348 : vector<8x1xi1> to vector<8x1xi1>
    %350 = vector.broadcast %349 : vector<8x1xi1> to vector<8x32xi1>
    %351 = arith.select %350, %346, %264 : vector<8x32xi1>, vector<8x32xf32>
    %352 = vector.shape_cast %348 : vector<8x1xi1> to vector<8x1xi1>
    %353 = vector.broadcast %352 : vector<8x1xi1> to vector<8x32xi1>
    %354 = arith.select %353, %344, %267 : vector<8x32xi1>, vector<8x32xf32>
    %355 = arith.index_cast %c3_i32 : i32 to index
    %c0_80 = arith.constant 0 : index
    %c0_81 = arith.constant 0 : index
    %356 = vector.load %arg5[%355, %c0_80, %c0_81] : memref<5x8x32xf32, #tpu.memory_space<vmem>>, vector<1x8x32xf32>
    %357 = vector.shape_cast %356 : vector<1x8x32xf32> to vector<8x32xf32>
    %358 = vector.shape_cast %312 : vector<8x32xf32> to vector<1x8x32xf32>
    tpu.vector_store %arg5[%355, %c0_80, %c0_81], %358 {strides = array<i32>} : memref<5x8x32xf32, #tpu.memory_space<vmem>>, vector<1x8x32xf32>,
    %359 = arith.index_cast %276 : i32 to index
    %c0_82 = arith.constant 0 : index
    %c0_83 = arith.constant 0 : index
    %360 = vector.load %arg6[%359, %c0_82, %c0_83] : memref<5x8x32xf32, #tpu.memory_space<vmem>>, vector<1x8x32xf32>
    %361 = vector.shape_cast %360 : vector<1x8x32xf32> to vector<8x32xf32>
    %362 = vector.shape_cast %351 : vector<8x32xf32> to vector<1x8x32xf32>
    tpu.vector_store %arg6[%359, %c0_82, %c0_83], %362 {strides = array<i32>} : memref<5x8x32xf32, #tpu.memory_space<vmem>>, vector<1x8x32xf32>,
    %c4_i32_84 = arith.constant 4 : i32
    %c4_i32_85 = arith.constant 4 : i32
    %363 = arith.subi %c4_i32_85, %c4_i32_84 : i32
    %364 = arith.index_cast %c4_i32_84 : i32 to index
    %c0_86 = arith.constant 0 : index
    %c0_87 = arith.constant 0 : index
    %365 = vector.load %arg1[%364, %c0_86, %c0_87] : memref<5x8x128xf32, #tpu.memory_space<vmem>>, vector<1x8x128xf32>
    %366 = vector.shape_cast %365 : vector<1x8x128xf32> to vector<8x128xf32>
    %367 = arith.addi %8, %c4_i32_84 : i32
    %cst_88 = arith.constant dense<0.000000e+00> : vector<8x128xf32>
    %368 = tpu.matmul %312, %4, %cst_88 {dimension_numbers = #tpu.dot_dimension_numbers<[1], [0], [0], [1], [0, 0, 1, 1], [], []>} : vector<8x32xf32>, vector<32x128xf32>, vector<8x128xf32> -> vector<8x128xf32>
    %369 = arith.addf %366, %368 : vector<8x128xf32>
    %370 = vector.extract_strided_slice %369 {offsets = [0, 0], sizes = [8, 32], strides = [1, 1]} : vector<8x128xf32> to vector<8x32xf32>
    %371 = arith.negf %370 : vector<8x32xf32>
    %372 = math.exp %371 : vector<8x32xf32>
    %cst_89 = arith.constant 1.000000e+00 : f32
    %373 = vector.broadcast %cst_89 : f32 to vector<8x32xf32>
    %374 = arith.addf %373, %372 : vector<8x32xf32>
    %375 = arith.divf %373, %374 : vector<8x32xf32>
    %376 = vector.extract_strided_slice %369 {offsets = [0, 32], sizes = [8, 32], strides = [1, 1]} : vector<8x128xf32> to vector<8x32xf32>
    %377 = arith.negf %376 : vector<8x32xf32>
    %378 = math.exp %377 : vector<8x32xf32>
    %cst_90 = arith.constant 1.000000e+00 : f32
    %379 = vector.broadcast %cst_90 : f32 to vector<8x32xf32>
    %380 = arith.addf %379, %378 : vector<8x32xf32>
    %381 = arith.divf %379, %380 : vector<8x32xf32>
    %382 = vector.extract_strided_slice %369 {offsets = [0, 64], sizes = [8, 32], strides = [1, 1]} : vector<8x128xf32> to vector<8x32xf32>
    %383 = math.tanh %382 : vector<8x32xf32>
    %384 = vector.extract_strided_slice %369 {offsets = [0, 96], sizes = [8, 32], strides = [1, 1]} : vector<8x128xf32> to vector<8x32xf32>
    %385 = arith.negf %384 : vector<8x32xf32>
    %386 = math.exp %385 : vector<8x32xf32>
    %cst_91 = arith.constant 1.000000e+00 : f32
    %387 = vector.broadcast %cst_91 : f32 to vector<8x32xf32>
    %388 = arith.addf %387, %386 : vector<8x32xf32>
    %389 = arith.divf %387, %388 : vector<8x32xf32>
    %390 = arith.mulf %381, %315 : vector<8x32xf32>
    %391 = arith.mulf %375, %383 : vector<8x32xf32>
    %392 = arith.addf %390, %391 : vector<8x32xf32>
    %393 = math.tanh %392 : vector<8x32xf32>
    %394 = arith.mulf %389, %393 : vector<8x32xf32>
    %395 = vector.broadcast %367 : i32 to vector<8x1xi32>
    %396 = arith.cmpi sgt, %7, %395 : vector<8x1xi32>
    %397 = vector.shape_cast %396 : vector<8x1xi1> to vector<8x1xi1>
    %398 = vector.broadcast %397 : vector<8x1xi1> to vector<8x32xi1>
    %399 = arith.select %398, %394, %312 : vector<8x32xi1>, vector<8x32xf32>
    %400 = vector.shape_cast %396 : vector<8x1xi1> to vector<8x1xi1>
    %401 = vector.broadcast %400 : vector<8x1xi1> to vector<8x32xi1>
    %402 = arith.select %401, %392, %315 : vector<8x32xi1>, vector<8x32xf32>
    %403 = arith.index_cast %363 : i32 to index
    %c0_92 = arith.constant 0 : index
    %c0_93 = arith.constant 0 : index
    %404 = vector.load %arg2[%403, %c0_92, %c0_93] : memref<5x8x128xf32, #tpu.memory_space<vmem>>, vector<1x8x128xf32>
    %405 = vector.shape_cast %404 : vector<1x8x128xf32> to vector<8x128xf32>
    %406 = arith.addi %10, %363 : i32
    %cst_94 = arith.constant dense<0.000000e+00> : vector<8x128xf32>
    %407 = tpu.matmul %351, %6, %cst_94 {dimension_numbers = #tpu.dot_dimension_numbers<[1], [0], [0], [1], [0, 0, 1, 1], [], []>} : vector<8x32xf32>, vector<32x128xf32>, vector<8x128xf32> -> vector<8x128xf32>
    %408 = arith.addf %405, %407 : vector<8x128xf32>
    %409 = vector.extract_strided_slice %408 {offsets = [0, 0], sizes = [8, 32], strides = [1, 1]} : vector<8x128xf32> to vector<8x32xf32>
    %410 = arith.negf %409 : vector<8x32xf32>
    %411 = math.exp %410 : vector<8x32xf32>
    %cst_95 = arith.constant 1.000000e+00 : f32
    %412 = vector.broadcast %cst_95 : f32 to vector<8x32xf32>
    %413 = arith.addf %412, %411 : vector<8x32xf32>
    %414 = arith.divf %412, %413 : vector<8x32xf32>
    %415 = vector.extract_strided_slice %408 {offsets = [0, 32], sizes = [8, 32], strides = [1, 1]} : vector<8x128xf32> to vector<8x32xf32>
    %416 = arith.negf %415 : vector<8x32xf32>
    %417 = math.exp %416 : vector<8x32xf32>
    %cst_96 = arith.constant 1.000000e+00 : f32
    %418 = vector.broadcast %cst_96 : f32 to vector<8x32xf32>
    %419 = arith.addf %418, %417 : vector<8x32xf32>
    %420 = arith.divf %418, %419 : vector<8x32xf32>
    %421 = vector.extract_strided_slice %408 {offsets = [0, 64], sizes = [8, 32], strides = [1, 1]} : vector<8x128xf32> to vector<8x32xf32>
    %422 = math.tanh %421 : vector<8x32xf32>
    %423 = vector.extract_strided_slice %408 {offsets = [0, 96], sizes = [8, 32], strides = [1, 1]} : vector<8x128xf32> to vector<8x32xf32>
    %424 = arith.negf %423 : vector<8x32xf32>
    %425 = math.exp %424 : vector<8x32xf32>
    %cst_97 = arith.constant 1.000000e+00 : f32
    %426 = vector.broadcast %cst_97 : f32 to vector<8x32xf32>
    %427 = arith.addf %426, %425 : vector<8x32xf32>
    %428 = arith.divf %426, %427 : vector<8x32xf32>
    %429 = arith.mulf %420, %354 : vector<8x32xf32>
    %430 = arith.mulf %414, %422 : vector<8x32xf32>
    %431 = arith.addf %429, %430 : vector<8x32xf32>
    %432 = math.tanh %431 : vector<8x32xf32>
    %433 = arith.mulf %428, %432 : vector<8x32xf32>
    %434 = vector.broadcast %406 : i32 to vector<8x1xi32>
    %435 = arith.cmpi sgt, %7, %434 : vector<8x1xi32>
    %436 = vector.shape_cast %435 : vector<8x1xi1> to vector<8x1xi1>
    %437 = vector.broadcast %436 : vector<8x1xi1> to vector<8x32xi1>
    %438 = arith.select %437, %433, %351 : vector<8x32xi1>, vector<8x32xf32>
    %439 = vector.shape_cast %435 : vector<8x1xi1> to vector<8x1xi1>
    %440 = vector.broadcast %439 : vector<8x1xi1> to vector<8x32xi1>
    %441 = arith.select %440, %431, %354 : vector<8x32xi1>, vector<8x32xf32>
    %442 = arith.index_cast %c4_i32_84 : i32 to index
    %c0_98 = arith.constant 0 : index
    %c0_99 = arith.constant 0 : index
    %443 = vector.load %arg5[%442, %c0_98, %c0_99] : memref<5x8x32xf32, #tpu.memory_space<vmem>>, vector<1x8x32xf32>
    %444 = vector.shape_cast %443 : vector<1x8x32xf32> to vector<8x32xf32>
    %445 = vector.shape_cast %399 : vector<8x32xf32> to vector<1x8x32xf32>
    tpu.vector_store %arg5[%442, %c0_98, %c0_99], %445 {strides = array<i32>} : memref<5x8x32xf32, #tpu.memory_space<vmem>>, vector<1x8x32xf32>,
    %446 = arith.index_cast %363 : i32 to index
    %c0_100 = arith.constant 0 : index
    %c0_101 = arith.constant 0 : index
    %447 = vector.load %arg6[%446, %c0_100, %c0_101] : memref<5x8x32xf32, #tpu.memory_space<vmem>>, vector<1x8x32xf32>
    %448 = vector.shape_cast %447 : vector<1x8x32xf32> to vector<8x32xf32>
    %449 = vector.shape_cast %438 : vector<8x32xf32> to vector<1x8x32xf32>
    tpu.vector_store %arg6[%446, %c0_100, %c0_101], %449 {strides = array<i32>} : memref<5x8x32xf32, #tpu.memory_space<vmem>>, vector<1x8x32xf32>,
    %c5_i32_102 = arith.constant 5 : i32
    %c0_103 = arith.constant 0 : index
    %c0_104 = arith.constant 0 : index
    %450 = vector.load %arg8[%c0_103, %c0_104] : memref<8x32xf32, #tpu.memory_space<vmem>>, vector<8x32xf32>
    tpu.vector_store %arg8[%c0_103, %c0_104], %399 {strides = array<i32>} : memref<8x32xf32, #tpu.memory_space<vmem>>, vector<8x32xf32>,
    %c0_105 = arith.constant 0 : index
    %c0_106 = arith.constant 0 : index
    %451 = vector.load %arg9[%c0_105, %c0_106] : memref<8x32xf32, #tpu.memory_space<vmem>>, vector<8x32xf32>
    tpu.vector_store %arg9[%c0_105, %c0_106], %402 {strides = array<i32>} : memref<8x32xf32, #tpu.memory_space<vmem>>, vector<8x32xf32>,
    %c0_107 = arith.constant 0 : index
    %c0_108 = arith.constant 0 : index
    %452 = vector.load %arg10[%c0_107, %c0_108] : memref<8x32xf32, #tpu.memory_space<vmem>>, vector<8x32xf32>
    tpu.vector_store %arg10[%c0_107, %c0_108], %438 {strides = array<i32>} : memref<8x32xf32, #tpu.memory_space<vmem>>, vector<8x32xf32>,
    %c0_109 = arith.constant 0 : index
    %c0_110 = arith.constant 0 : index
    %453 = vector.load %arg11[%c0_109, %c0_110] : memref<8x32xf32, #tpu.memory_space<vmem>>, vector<8x32xf32>
    tpu.vector_store %arg11[%c0_109, %c0_110], %441 {strides = array<i32>} : memref<8x32xf32, #tpu.memory_space<vmem>>, vector<8x32xf32>,
    %c1_i32_111 = arith.constant 1 : i32
    %454 = arith.cmpi eq, %arg0, %c1_i32_111 : i32
    %455 = arith.extui %454 : i1 to i32
    %c0_i32_112 = arith.constant 0 : i32
    %456 = arith.cmpi ne, %455, %c0_i32_112 : i32
    scf.if %456 {
      %c0_113 = arith.constant 0 : index
      %c0_114 = arith.constant 0 : index
      %c0_115 = arith.constant 0 : index
      %457 = vector.load %arg7[%c0_113, %c0_114, %c0_115] : memref<2x8x32xf32, #tpu.memory_space<vmem>>, vector<1x8x32xf32>
      %458 = vector.shape_cast %457 : vector<1x8x32xf32> to vector<8x32xf32>
      %459 = vector.shape_cast %399 : vector<8x32xf32> to vector<1x8x32xf32>
      tpu.vector_store %arg7[%c0_113, %c0_114, %c0_115], %459 {strides = array<i32>} : memref<2x8x32xf32, #tpu.memory_space<vmem>>, vector<1x8x32xf32>,
      %c1_116 = arith.constant 1 : index
      %c0_117 = arith.constant 0 : index
      %c0_118 = arith.constant 0 : index
      %460 = vector.load %arg7[%c1_116, %c0_117, %c0_118] : memref<2x8x32xf32, #tpu.memory_space<vmem>>, vector<1x8x32xf32>
      %461 = vector.shape_cast %460 : vector<1x8x32xf32> to vector<8x32xf32>
      %462 = vector.shape_cast %438 : vector<8x32xf32> to vector<1x8x32xf32>
      tpu.vector_store %arg7[%c1_116, %c0_117, %c0_118], %462 {strides = array<i32>} : memref<2x8x32xf32, #tpu.memory_space<vmem>>, vector<1x8x32xf32>,
    } else {
    }
    return
  }
  func.func @transform_0(%arg0: i32) -> (i32, i32, i32) {
    %c0_i32 = arith.constant 0 : i32
    %c0_i32_0 = arith.constant 0 : i32
    %c0_i32_1 = arith.constant 0 : i32
    return %arg0, %c0_i32, %c0_i32_0 : i32, i32, i32
  }
  func.func @transform_1(%arg0: i32) -> (i32, i32, i32) {
    %c1_i32 = arith.constant 1 : i32
    %0 = arith.subi %c1_i32, %arg0 : i32
    %c0_i32 = arith.constant 0 : i32
    %c0_i32_0 = arith.constant 0 : i32
    %c0_i32_1 = arith.constant 0 : i32
    return %0, %c0_i32, %c0_i32_0 : i32, i32, i32
  }
  func.func @transform_2(%arg0: i32) -> (i32, i32) {
    %c0_i32 = arith.constant 0 : i32
    %c0_i32_0 = arith.constant 0 : i32
    %c0_i32_1 = arith.constant 0 : i32
    return %c0_i32, %c0_i32_0 : i32, i32
  }
  func.func @transform_3(%arg0: i32) -> (i32, i32, i32) {
    %c0_i32 = arith.constant 0 : i32
    %c0_i32_0 = arith.constant 0 : i32
    %c0_i32_1 = arith.constant 0 : i32
    %c0_i32_2 = arith.constant 0 : i32
    return %c0_i32, %c0_i32_0, %c0_i32_1 : i32, i32, i32
  }
  func.func @transform_4(%arg0: i32) -> (i32, i32, i32) {
    %c0_i32 = arith.constant 0 : i32
    %c0_i32_0 = arith.constant 0 : i32
    %c0_i32_1 = arith.constant 0 : i32
    return %arg0, %c0_i32, %c0_i32_0 : i32, i32, i32
  }
  func.func @transform_5(%arg0: i32) -> (i32, i32, i32) {
    %c1_i32 = arith.constant 1 : i32
    %0 = arith.subi %c1_i32, %arg0 : i32
    %c0_i32 = arith.constant 0 : i32
    %c0_i32_0 = arith.constant 0 : i32
    %c0_i32_1 = arith.constant 0 : i32
    return %0, %c0_i32, %c0_i32_0 : i32, i32, i32
  }
  func.func @transform_6(%arg0: i32) -> (i32, i32, i32) {
    %c0_i32 = arith.constant 0 : i32
    %c0_i32_0 = arith.constant 0 : i32
    %c0_i32_1 = arith.constant 0 : i32
    %c0_i32_2 = arith.constant 0 : i32
    return %c0_i32, %c0_i32_0, %c0_i32_1 : i32, i32, i32
  }
}

</mosaic_0001>

<llo_original>
// kernel: lstm_model_forward.5
$region0: #{lstm_model_forward.5}
  #allocation0 [shape = 'u32[]', space=smem, size = 0x4, offset = 0x4, fixed_abs, tag = 'smem constant byte address 0x4 - core index']
  #allocation1 [shape = 'u32[144,128]{1,0:T(1,128)}', space=vmem, size = 0x12000, scoped, tag = 'internal scratch']
  %s0 = inlined_call_operand.vmem [shape: f32[2,32], index: 0, kind: input, shape index: {}]
  %s1 = inlined_call_operand.vmem [shape: f32[1,32], index: 1, kind: input, shape index: {}]
  %s2 = inlined_call_operand.vmem [shape: f32[1,32], index: 2, kind: input, shape index: {}]
  %s3 = inlined_call_operand.vmem [shape: f32[1,32], index: 3, kind: input, shape index: {}]
  %s4 = inlined_call_operand.vmem [shape: f32[1,32], index: 4, kind: input, shape index: {}]
  %s5 = inlined_call_operand.vmem [shape: f32[32,10], index: 5, kind: input, shape index: {}]
  %s6 = inlined_call_operand.vmem [shape: f32[1,10], index: 6, kind: input, shape index: {}]
  %s7 = inlined_call_operand.hbm [shape: f32[2,10], index: 7, kind: output, shape index: {}]
  %s8 = sld [smem:[#allocation0]]
  $region38: #{lstm_model_forward.5} parent=0
    _
  %s10 = ssub.s32 1, %s8
  %s11 = scalar_select 0, %s10, %s8
  $region1: #{lstm_model_forward.5} parent=0
    #allocation2 [shape = 'u8[1024]{0}', space=vmem, size = 0x400, scoped, tag = 'output window, operand 0, single buffered']
    #allocation3 [shape = 's32[1]{0}', space=sflag, size = 0x4, scoped, tag = 'scoped memory for lstm_model_forward.5']
    %12 = vsyncpa [#allocation3], 0
    // Predicated region
    $region2: #{lstm_model_forward.5} parent=1 // pred_check
      _
    $region3: #{lstm_model_forward.5} parent=1 // pred_check_branch
      %14 = sbr.rel (0) target = $region5
    $region4: #{lstm_model_forward.5} parent=1 // pred_region
      _
    $region5: #{lstm_model_forward.5} parent=1 // pred_fallthru
      _
    // Predicated region
    $region6: #{lstm_model_forward.5} parent=1 // pred_check
      _
    $region7: #{lstm_model_forward.5} parent=1 // pred_check_branch
      %16 = sbr.rel (0) target = $region9
    $region8: #{lstm_model_forward.5} parent=1 // pred_region
      _
    $region9: #{lstm_model_forward.5} parent=1 // pred_fallthru
      _
    // Predicated region
    $region10: #{lstm_model_forward.5} parent=1 // pred_check
      _
    $region11: #{lstm_model_forward.5} parent=1 // pred_check_branch
      %18 = sbr.rel (0) target = $region13
    $region12: #{lstm_model_forward.5} parent=1 // pred_region
      _
    $region13: #{lstm_model_forward.5} parent=1 // pred_fallthru
      _
    // Predicated region
    $region14: #{lstm_model_forward.5} parent=1 // pred_check
      _
    $region15: #{lstm_model_forward.5} parent=1 // pred_check_branch
      %20 = sbr.rel (0) target = $region17
    $region16: #{lstm_model_forward.5} parent=1 // pred_region
      _
    $region17: #{lstm_model_forward.5} parent=1 // pred_fallthru
      _
    // Predicated region
    $region18: #{lstm_model_forward.5} parent=1 // pred_check
      _
    $region19: #{lstm_model_forward.5} parent=1 // pred_check_branch
      %22 = sbr.rel (0) target = $region21
    $region20: #{lstm_model_forward.5} parent=1 // pred_region
      _
    $region21: #{lstm_model_forward.5} parent=1 // pred_fallthru
      _
    // Predicated region
    $region22: #{lstm_model_forward.5} parent=1 // pred_check
      _
    $region23: #{lstm_model_forward.5} parent=1 // pred_check_branch
      %24 = sbr.rel (0) target = $region25
    $region24: #{lstm_model_forward.5} parent=1 // pred_region
      _
    $region25: #{lstm_model_forward.5} parent=1 // pred_fallthru
      _
    // Predicated region
    $region26: #{lstm_model_forward.5} parent=1 // pred_check
      _
    $region27: #{lstm_model_forward.5} parent=1 // pred_check_branch
      %26 = sbr.rel (0) target = $region29
    $region28: #{lstm_model_forward.5} parent=1 // pred_region
      _
    $region29: #{lstm_model_forward.5} parent=1 // pred_fallthru
      _
    %v27 = vld [vmem:[%s0] sm:$0x3]
    %v28 = vld [vmem:[%s4] sm:$0x1]
    %v29 = vadd.f32 %v28, 1e-05
    %v30 = vrsqrt.pop %v29
    %v31 = vld [vmem:[%s3] sm:$0x1]
    %v33 = vlaneseq
    %v34 = vshrl.u32 %v33, 7
    %v35 = vsub.s32 0, %v34
    %v36 = vrot.slane %v31, %v35
    %v38 = vsub.f32 %v27, %v36
    %v40 = vlaneseq
    %v41 = vshrl.u32 %v40, 7
    %v42 = vsub.s32 0, %v41
    %v43 = vrot.slane %v30, %v42
    %v45 = vmul.f32 %v38, %v43
    %v46 = vld [vmem:[%s1] sm:$0x1]
    %v48 = vlaneseq
    %v49 = vshrl.u32 %v48, 7
    %v50 = vsub.s32 0, %v49
    %v51 = vrot.slane %v46, %v50
    %v53 = vmul.f32 %v45, %v51
    %v54 = vld [vmem:[%s2] sm:$0x1]
    %v56 = vlaneseq
    %v57 = vshrl.u32 %v56, 7
    %v58 = vsub.s32 0, %v57
    %v59 = vrot.slane %v54, %v58
    %v61 = vadd.f32 %v53, %v59
    %v62 = vtanh.pop %v61
    %v63 = vld [vmem:[%s5] sm:$0xff]
    %v64 = vld [vmem:[%s5 + $0x8] sm:$0xff]
    %v65 = vld [vmem:[%s5 + $0x10] sm:$0xff]
    %v66 = vld [vmem:[%s5 + $0x18] sm:$0xff]
    %v67 = vld [vmem:[%s6] sm:$0x1]
    %v69 = vlaneseq
    %v70 = vshrl.u32 %v69, 7
    %v71 = vsub.s32 0, %v70
    %v72 = vrot.slane %v67, %v71
    %vm74 = vcmask 261120
    %v76 = vsel %vm74, %v62, 0
    %78 = vmatprep.subr.mxu0 0.0
    %79 = vmatpush1.msra.mxu0 %v63
    %80 = vmatprep.subr.mxu0 0.0
    %81 = vmatpush1.msra.mxu0 %v64
    %82 = vmatprep.subr.mxu0 0.0
    %83 = vmatpush1.msra.mxu0 %v65
    %84 = vmatprep.subr.mxu0 0.0
    %85 = vmatpush1.msra.mxu0 %v66
    %86 = vmatprep.subr.mxu0 0.0
    %87 = vmatpush1.msra.mxu0 0.0
    %88 = vmatprep.subr.mxu0 0.0
    %89 = vmatpush1.msra.mxu0 0.0
    %90 = vmatprep.subr.mxu0 0.0
    %91 = vmatpush1.msra.mxu0 0.0
    %92 = vmatprep.subr.mxu0 0.0
    %93 = vmatpush1.msra.mxu0 0.0
    %94 = vmatprep.subr.mxu0 0.0
    %95 = vmatpush1.msra.mxu0 0.0
    %96 = vmatprep.subr.mxu0 0.0
    %97 = vmatpush1.msra.mxu0 0.0
    %98 = vmatprep.subr.mxu0 0.0
    %99 = vmatpush1.msra.mxu0 0.0
    %100 = vmatprep.subr.mxu0 0.0
    %101 = vmatpush1.msra.mxu0 0.0
    %102 = vmatprep.subr.mxu0 0.0
    %103 = vmatpush1.msra.mxu0 0.0
    %104 = vmatprep.subr.mxu0 0.0
    %105 = vmatpush1.msra.mxu0 0.0
    %106 = vmatprep.subr.mxu0 0.0
    %107 = vmatpush1.msra.mxu0 0.0
    %108 = vmatprep.subr.mxu0 0.0
    %109 = vmatpush1.msra.mxu0 0.0
    %110 = vmatprep.subr.mxu0 0.0
    %111 = vmatpush1.msra.mxu0 0.0
    %112 = vmatprep.subr.mxu0 0.0
    %113 = vmatpush1.msra.mxu0 0.0
    %114 = vmatprep.subr.mxu0 0.0
    %115 = vmatpush1.msra.mxu0 0.0
    %116 = vmatprep.subr.mxu0 0.0
    %117 = vmatpush1.msra.mxu0 0.0
    %118 = vmatprep.subr.mxu0 0.0
    %119 = vmatpush1.msra.mxu0 0.0
    %120 = vmatprep.subr.mxu0 0.0
    %121 = vmatpush1.msra.mxu0 0.0
    %122 = vmatprep.subr.mxu0 0.0
    %123 = vmatpush1.msra.mxu0 0.0
    %124 = vmatprep.subr.mxu0 0.0
    %125 = vmatpush1.msra.mxu0 0.0
    %126 = vmatprep.subr.mxu0 0.0
    %127 = vmatpush1.msra.mxu0 0.0
    %128 = vmatprep.subr.mxu0 0.0
    %129 = vmatpush1.msra.mxu0 0.0
    %130 = vmatprep.subr.mxu0 0.0
    %131 = vmatpush1.msra.mxu0 0.0
    %132 = vmatprep.subr.mxu0 0.0
    %133 = vmatpush1.msra.mxu0 0.0
    %134 = vmatprep.subr.mxu0 0.0
    %135 = vmatpush1.msra.mxu0 0.0
    %136 = vmatprep.subr.mxu0 0.0
    %137 = vmatpush1.msra.mxu0 0.0
    %138 = vmatprep.subr.mxu0 0.0
    %139 = vmatpush1.msra.mxu0 0.0
    %140 = vmatprep.subr.mxu0 0.0
    %141 = vmatpush1.msra.mxu0 0.0
    %142 = vmatprep.mubr.f32.mxu0 0.0
    %143 = vmatmul.mubr.f32.gmra.mrb[0].mxu0 %v76
    %v144 = vpop.f32.mrb[0].mxu0
    %v145 = vadd.f32 %v72, %v144
    %v146 = vpop.f32.mrb[0].mxu0
    %147 = vdwg.mxu0
    %vm148 = vcmask 74752
    %149 = vst.msk [vmem:[#allocation2] sm:$0x3] %vm148, %v145
    // Predicated region
    $region30: #{lstm_model_forward.5} parent=1 // pred_check
      _
    $region31: #{lstm_model_forward.5} parent=1 // pred_check_branch
      %151 = sbr.rel (0) target = $region33
    $region32: #{lstm_model_forward.5} parent=1 // pred_region
      %s153 = ssub.s32 32, 32
      %154 = vsyncadd [#allocation3], %s153
      %s156 = sshll.u32 [#allocation2], 4
      %s157 = int_to_ptr.vmem [resolvable:$true] %s156
      %159 = dma.vmem_to_hbm [thread:$0]  %s157, 32, %s7, [#allocation3]
    $region33: #{lstm_model_forward.5} parent=1 // pred_fallthru
      _
    // Predicated region
    $region34: #{lstm_model_forward.5} parent=1 // pred_check
      _
    $region35: #{lstm_model_forward.5} parent=1 // pred_check_branch
      %161 = sbr.rel (0) target = $region37
    $region36: #{lstm_model_forward.5} parent=1 // pred_region
      %162 = dma.done [#allocation3], 32
    $region37: #{lstm_model_forward.5} parent=1 // pred_fallthru
      _
    %163 = vsyncpa [#allocation3], 1

// kernel: lstm_model_forward.3
$region0: #{lstm_model_forward.3}
  #allocation0 [shape = 'u32[]', space=smem, size = 0x4, offset = 0x4, fixed_abs, tag = 'smem constant byte address 0x4 - core index']
  #allocation1 [shape = 'u32[144,128]{1,0:T(1,128)}', space=vmem, size = 0x12000, scoped, tag = 'internal scratch']
  #allocation2 [shape = 'f32[8,32]{1,0:T(8,128)}', space=vmem, size = 0x1000, scoped, tag = 'scratch operand']
  #allocation3 [shape = 'f32[8,32]{1,0:T(8,128)}', space=vmem, size = 0x1000, scoped, tag = 'scratch operand']
  #allocation4 [shape = 'f32[8,32]{1,0:T(8,128)}', space=vmem, size = 0x1000, scoped, tag = 'scratch operand']
  #allocation5 [shape = 'f32[8,32]{1,0:T(8,128)}', space=vmem, size = 0x1000, scoped, tag = 'scratch operand']
  %s0 = inlined_call_operand.vmem [shape: f32[10,8,128], index: 0, kind: input, shape index: {}]
  %s1 = inlined_call_operand.vmem [shape: f32[10,8,128], index: 1, kind: input, shape index: {}]
  %s2 = inlined_call_operand.vmem [shape: s32[8,1], index: 2, kind: input, shape index: {}]
  %s3 = inlined_call_operand.vmem [shape: f32[2,32,128], index: 3, kind: input, shape index: {}]
  %s4 = inlined_call_operand.vmem [shape: f32[10,8,32], index: 4, kind: output, shape index: {0}]
  %s5 = inlined_call_operand.vmem [shape: f32[10,8,32], index: 5, kind: output, shape index: {1}]
  %s6 = inlined_call_operand.hbm [shape: f32[2,8,32], index: 6, kind: output, shape index: {2}]
  %7 = xla_tuple %s4, %s5, %s6
  %s8 = sld [smem:[#allocation0]]
  $region73: #{lstm_model_forward.3} parent=0
    _
  %s10 = ssub.s32 1, %s8
  %s11 = scalar_select 0, %s10, %s8
  $region1: #{lstm_model_forward.3} parent=0
    #allocation6 [shape = 'u8[8192]{0}', space=vmem, size = 0x2000, scoped, tag = 'output window, operand 2, single buffered']
    #allocation7 [shape = 's32[2]{0}', space=sflag, size = 0x8, scoped, tag = 'scoped memory for lstm_model_forward.3']
    %12 = vsyncpa [#allocation7], 0
    loop: start=0, step=1, limit=4
    $region2: #{lstm_model_forward.3} parent=1 // loop_pre_header
      _
    $region3: #{lstm_model_forward.3} parent=1 // loop_header
      %s14 = sphi 0, %s18
      %p15 = scmp.ge.s32.totalorder %s14, 4
      %s24 = sphi 0, %s26
      %s27 = sphi 0, %s24
      %s28 = sphi 0, %s27
      %s44 = sphi 0, %s28
      %s52 = sphi 0, %s54
      %s55 = sphi 0, %s52
      %s56 = sphi 0, %s55
      %s72 = sphi 0, %s56
      %s76 = sphi 0, %s76
      %s78 = sphi 0, %s76
      %s79 = sphi 0, %s78
      %s93 = sphi 0, %s79
      %s97 = sphi 0, %s97
      %s99 = sphi 0, %s97
      %s100 = sphi 0, %s99
      %s114 = sphi 0, %s100
      %s120 = sphi 0, %s122
      %s123 = sphi 0, %s120
      %s124 = sphi 0, %s123
      %s140 = sphi 0, %s124
      %s148 = sphi 0, %s150
      %s151 = sphi 0, %s148
      %s152 = sphi 0, %s151
      %s168 = sphi 0, %s152
      %s172 = sphi 0, %s172
      %s174 = sphi 0, %s172
      %s175 = sphi 0, %s174
      %s189 = sphi 0, %s175
    $region4: #{lstm_model_forward.3} parent=1 // loop_header_branch
      %17 = sbr.rel (%p15) target = $region8
    $region5: #{lstm_model_forward.3} parent=1 // loop_body
      %s19 = ssub.s32 %s14, 1
      %s20 = ssub.s32 %s14, 2
      %s21 = sadd.s32 %s14, 1
      %s22 = ssub.s32 %s14, %s21
      %p23 = scmp.eq.s32.totalorder %s22, 0
      %s25 = sadd.s32 %s24, 1
      %s26 = scalar_select %p23, %s24, %s25
      %p29 = pneg %p23
      %p30 = scmp.eq.s32.totalorder %s14, 1
      %p31 = por %p29, %p30
      %p32 = scmp.ne.s32.totalorder %s24, %s27
      %p33 = scmp.eq.s32.totalorder %s14, 0
      %p34 = por %p32, %p33
      %p35 = scmp.ne.s32.totalorder %s24, %s27
      %p36 = scmp.eq.s32.totalorder %s19, 1
      %p37 = por %p35, %p36
      %p38 = scmp.ne.s32.totalorder %s27, %s28
      %p39 = scmp.eq.s32.totalorder %s19, 0
      %p40 = por %p38, %p39
      %p41 = scmp.ne.s32.totalorder %s27, %s28
      %p42 = scmp.eq.s32.totalorder %s20, 1
      %p43 = por %p41, %p42
      %p45 = scmp.ne.s32.totalorder %s28, %s44
      %p46 = scmp.eq.s32.totalorder %s20, 0
      %p47 = por %p45, %p46
      %s48 = ssub.s32 1, %s14
      %s49 = ssub.s32 1, %s21
      %s50 = ssub.s32 %s48, %s49
      %p51 = scmp.eq.s32.totalorder %s50, 0
      %s53 = sadd.s32 %s52, 1
      %s54 = scalar_select %p51, %s52, %s53
      %p57 = pneg %p51
      %p58 = scmp.eq.s32.totalorder %s14, 1
      %p59 = por %p57, %p58
      %p60 = scmp.ne.s32.totalorder %s52, %s55
      %p61 = scmp.eq.s32.totalorder %s14, 0
      %p62 = por %p60, %p61
      %p63 = scmp.ne.s32.totalorder %s52, %s55
      %p64 = scmp.eq.s32.totalorder %s19, 1
      %p65 = por %p63, %p64
      %p66 = scmp.ne.s32.totalorder %s55, %s56
      %p67 = scmp.eq.s32.totalorder %s19, 0
      %p68 = por %p66, %p67
      %p69 = scmp.ne.s32.totalorder %s55, %s56
      %p70 = scmp.eq.s32.totalorder %s20, 1
      %p71 = por %p69, %p70
      %p73 = scmp.ne.s32.totalorder %s56, %s72
      %p74 = scmp.eq.s32.totalorder %s20, 0
      %p75 = por %p73, %p74
      %s77 = sadd.s32 %s76, 1
      %p80 = scmp.eq.s32.totalorder %s14, 1
      %p81 = scmp.ne.s32.totalorder %s76, %s78
      %p82 = scmp.eq.s32.totalorder %s14, 0
      %p83 = por %p81, %p82
      %p84 = scmp.ne.s32.totalorder %s76, %s78
      %p85 = scmp.eq.s32.totalorder %s19, 1
      %p86 = por %p84, %p85
      %p87 = scmp.ne.s32.totalorder %s78, %s79
      %p88 = scmp.eq.s32.totalorder %s19, 0
      %p89 = por %p87, %p88
      %p90 = scmp.ne.s32.totalorder %s78, %s79
      %p91 = scmp.eq.s32.totalorder %s20, 1
      %p92 = por %p90, %p91
      %p94 = scmp.ne.s32.totalorder %s79, %s93
      %p95 = scmp.eq.s32.totalorder %s20, 0
      %p96 = por %p94, %p95
      %s98 = sadd.s32 %s97, 1
      %p101 = scmp.eq.s32.totalorder %s14, 1
      %p102 = scmp.ne.s32.totalorder %s97, %s99
      %p103 = scmp.eq.s32.totalorder %s14, 0
      %p104 = por %p102, %p103
      %p105 = scmp.ne.s32.totalorder %s97, %s99
      %p106 = scmp.eq.s32.totalorder %s19, 1
      %p107 = por %p105, %p106
      %p108 = scmp.ne.s32.totalorder %s99, %s100
      %p109 = scmp.eq.s32.totalorder %s19, 0
      %p110 = por %p108, %p109
      %p111 = scmp.ne.s32.totalorder %s99, %s100
      %p112 = scmp.eq.s32.totalorder %s20, 1
      %p113 = por %p111, %p112
      %p115 = scmp.ne.s32.totalorder %s100, %s114
      %p116 = scmp.eq.s32.totalorder %s20, 0
      %p117 = por %p115, %p116
      %s118 = ssub.s32 %s14, %s21
      %p119 = scmp.eq.s32.totalorder %s118, 0
      %s121 = sadd.s32 %s120, 1
      %s122 = scalar_select %p119, %s120, %s121
      %p125 = pneg %p119
      %p126 = scmp.eq.s32.totalorder %s14, 1
      %p127 = por %p125, %p126
      %p128 = scmp.ne.s32.totalorder %s120, %s123
      %p129 = scmp.eq.s32.totalorder %s14, 0
      %p130 = por %p128, %p129
      %p131 = scmp.ne.s32.totalorder %s120, %s123
      %p132 = scmp.eq.s32.totalorder %s19, 1
      %p133 = por %p131, %p132
      %p134 = scmp.ne.s32.totalorder %s123, %s124
      %p135 = scmp.eq.s32.totalorder %s19, 0
      %p136 = por %p134, %p135
      %p137 = scmp.ne.s32.totalorder %s123, %s124
      %p138 = scmp.eq.s32.totalorder %s20, 1
      %p139 = por %p137, %p138
      %p141 = scmp.ne.s32.totalorder %s124, %s140
      %p142 = scmp.eq.s32.totalorder %s20, 0
      %p143 = por %p141, %p142
      %s144 = ssub.s32 1, %s14
      %s145 = ssub.s32 1, %s21
      %s146 = ssub.s32 %s144, %s145
      %p147 = scmp.eq.s32.totalorder %s146, 0
      %s149 = sadd.s32 %s148, 1
      %s150 = scalar_select %p147, %s148, %s149
      %p153 = pneg %p147
      %p154 = scmp.eq.s32.totalorder %s14, 1
      %p155 = por %p153, %p154
      %p156 = scmp.ne.s32.totalorder %s148, %s151
      %p157 = scmp.eq.s32.totalorder %s14, 0
      %p158 = por %p156, %p157
      %p159 = scmp.ne.s32.totalorder %s148, %s151
      %p160 = scmp.eq.s32.totalorder %s19, 1
      %p161 = por %p159, %p160
      %p162 = scmp.ne.s32.totalorder %s151, %s152
      %p163 = scmp.eq.s32.totalorder %s19, 0
      %p164 = por %p162, %p163
      %p165 = scmp.ne.s32.totalorder %s151, %s152
      %p166 = scmp.eq.s32.totalorder %s20, 1
      %p167 = por %p165, %p166
      %p169 = scmp.ne.s32.totalorder %s152, %s168
      %p170 = scmp.eq.s32.totalorder %s20, 0
      %p171 = por %p169, %p170
      %s173 = sadd.s32 %s172, 1
      %p176 = scmp.eq.s32.totalorder %s14, 1
      %p177 = scmp.ne.s32.totalorder %s172, %s174
      %p178 = scmp.eq.s32.totalorder %s14, 0
      %p179 = por %p177, %p178
      %p180 = scmp.ne.s32.totalorder %s172, %s174
      %p181 = scmp.eq.s32.totalorder %s19, 1
      %p182 = por %p180, %p181
      %p183 = scmp.ne.s32.totalorder %s174, %s175
      %p184 = scmp.eq.s32.totalorder %s19, 0
      %p185 = por %p183, %p184
      %p186 = scmp.ne.s32.totalorder %s174, %s175
      %p187 = scmp.eq.s32.totalorder %s20, 1
      %p188 = por %p186, %p187
      %p190 = scmp.ne.s32.totalorder %s175, %s189
      %p191 = scmp.eq.s32.totalorder %s20, 0
      %p192 = por %p190, %p191
      %p193 = scmp.le.s32.totalorder 1, %s14
      %p194 = scmp.lt.s32.totalorder %s14, 3
      %p195 = pnand %p193, %p194
      %p196 = pneg %p195
      // Predicated region
      $region9: #{lstm_model_forward.3} parent=5 // pred_check
        _
      $region10: #{lstm_model_forward.3} parent=5 // pred_check_branch
        %198 = sbr.rel (%p195) target = $region12
      $region11: #{lstm_model_forward.3} parent=5 // pred_region
        %s199 = ssub.s32 %s14, 1
        // Predicated region
        $region13: #{lstm_model_forward.3} parent=11 // pred_check
          %p200 = pneg %p89
        $region14: #{lstm_model_forward.3} parent=11 // pred_check_branch
          %202 = sbr.rel (%p200) target = $region16
        $region15: #{lstm_model_forward.3} parent=11 // pred_region
          _
        $region16: #{lstm_model_forward.3} parent=11 // pred_fallthru
          _
        // Predicated region
        $region17: #{lstm_model_forward.3} parent=11 // pred_check
          %p203 = pneg %p110
        $region18: #{lstm_model_forward.3} parent=11 // pred_check_branch
          %205 = sbr.rel (%p203) target = $region20
        $region19: #{lstm_model_forward.3} parent=11 // pred_region
          _
        $region20: #{lstm_model_forward.3} parent=11 // pred_fallthru
          _
      $region12: #{lstm_model_forward.3} parent=5 // pred_fallthru
        _
      %p206 = scmp.lt.s32.totalorder %s14, 2
      // Predicated region
      $region21: #{lstm_model_forward.3} parent=5 // pred_check
        %p207 = pneg %p206
      $region22: #{lstm_model_forward.3} parent=5 // pred_check_branch
        %209 = sbr.rel (%p207) target = $region24
      $region23: #{lstm_model_forward.3} parent=5 // pred_region
        // Predicated region
        $region25: #{lstm_model_forward.3} parent=23 // pred_check
          %p210 = pneg %p34
        $region26: #{lstm_model_forward.3} parent=23 // pred_check_branch
          %212 = sbr.rel (%p210) target = $region28
        $region27: #{lstm_model_forward.3} parent=23 // pred_region
          %s213 = smul.u32 5, %s14
          %p214 = scmp.lt.s32.totalorder %s213, 9
          %s215 = scalar_select %p214, %s213, 9
          %s216 = smul.addr %s215, 8
          %s217 = scalar_lea.vmem %s0, %s216
          %s218 = smul.u32 5, %s14
        $region28: #{lstm_model_forward.3} parent=23 // pred_fallthru
          _
        // Predicated region
        $region29: #{lstm_model_forward.3} parent=23 // pred_check
          %p219 = pneg %p62
        $region30: #{lstm_model_forward.3} parent=23 // pred_check_branch
          %221 = sbr.rel (%p219) target = $region32
        $region31: #{lstm_model_forward.3} parent=23 // pred_region
          %s222 = ssub.s32 1, %s14
          %s223 = smul.u32 5, %s222
          %p224 = scmp.lt.s32.totalorder %s223, 9
          %s225 = scalar_select %p224, %s223, 9
          %s226 = smul.addr %s225, 8
          %s227 = scalar_lea.vmem %s1, %s226
          %s228 = ssub.s32 1, %s14
          %s229 = smul.u32 5, %s228
        $region32: #{lstm_model_forward.3} parent=23 // pred_fallthru
          _
      $region24: #{lstm_model_forward.3} parent=5 // pred_fallthru
        _
      %p230 = scmp.le.s32.totalorder 1, %s14
      %p231 = scmp.lt.s32.totalorder %s14, 3
      %p232 = pnand %p230, %p231
      %p233 = pneg %p232
      // Predicated region
      $region33: #{lstm_model_forward.3} parent=5 // pred_check
        _
      $region34: #{lstm_model_forward.3} parent=5 // pred_check_branch
        %235 = sbr.rel (%p232) target = $region36
      $region35: #{lstm_model_forward.3} parent=5 // pred_region
        %s236 = ssub.s32 %s14, 1
        %s237 = smul.u32 5, %s19
        %p238 = scmp.lt.s32.totalorder %s237, 9
        %s239 = scalar_select %p238, %s237, 9
        %s240 = smul.addr %s239, 8
        %s241 = scalar_lea.vmem %s0, %s240
        %p242 = pneg %p40
        %p243 = pneg %p37
        %s244 = ssub.s32 1, %s19
        %s245 = smul.u32 5, %s244
        %p246 = scmp.lt.s32.totalorder %s245, 9
        %s247 = scalar_select %p246, %s245, 9
        %s248 = smul.addr %s247, 8
        %s249 = scalar_lea.vmem %s1, %s248
        %p250 = pneg %p68
        %p251 = pneg %p65
        %p252 = pneg %p89
        %p253 = pneg %p86
        %p254 = pneg %p110
        %p255 = pneg %p107
        %p256 = pneg %p136
        %p257 = pneg %p133
        %s258 = smul.u32 5, %s19
        %p259 = scmp.lt.s32.totalorder %s258, 9
        %s260 = scalar_select %p259, %s258, 9
        %s261 = smul.addr %s260, 8
        %s262 = scalar_lea.vmem %s4, %s261
        %p263 = pneg %p164
        %p264 = pneg %p161
        %s265 = ssub.s32 1, %s19
        %s266 = smul.u32 5, %s265
        %p267 = scmp.lt.s32.totalorder %s266, 9
        %s268 = scalar_select %p267, %s266, 9
        %s269 = smul.addr %s268, 8
        %s270 = scalar_lea.vmem %s5, %s269
        %p271 = pneg %p185
        %p272 = pneg %p182
        %s273 = smul.u32 5, %s19
        %p274 = scmp.lt.s32.totalorder %s273, 9
        %s275 = scalar_select %p274, %s273, 9
        %s276 = smul.addr %s275, 8
        %s277 = scalar_lea.vmem %s0, %s276
        %s278 = smul.u32 5, %s19
        %s279 = ssub.s32 1, %s19
        %s280 = smul.u32 5, %s279
        %p281 = scmp.lt.s32.totalorder %s280, 9
        %s282 = scalar_select %p281, %s280, 9
        %s283 = smul.addr %s282, 8
        %s284 = scalar_lea.vmem %s1, %s283
        %s285 = ssub.s32 1, %s19
        %s286 = smul.u32 5, %s285
        %s287 = smul.u32 5, %s19
        %p288 = scmp.lt.s32.totalorder %s287, 9
        %s289 = scalar_select %p288, %s287, 9
        %s290 = smul.addr %s289, 8
        %s291 = scalar_lea.vmem %s4, %s290
        %s292 = smul.u32 5, %s19
        %s293 = ssub.s32 1, %s19
        %s294 = smul.u32 5, %s293
        %p295 = scmp.lt.s32.totalorder %s294, 9
        %s296 = scalar_select %p295, %s294, 9
        %s297 = smul.addr %s296, 8
        %s298 = scalar_lea.vmem %s5, %s297
        %s299 = ssub.s32 1, %s19
        %s300 = smul.u32 5, %s299
        %p301 = scmp.eq.s32.totalorder %s19, 0
        // Predicated region
        $region37: #{lstm_model_forward.3} parent=35 // pred_check
          %p302 = pneg %p301
        $region38: #{lstm_model_forward.3} parent=35 // pred_check_branch
          %304 = sbr.rel (%p302) target = $region40
        $region39: #{lstm_model_forward.3} parent=35 // pred_region
          %vm305 = vcmask 261120
          %306 = vst.msk [vmem:[#allocation2] sm:$0xff] %vm305, 0.0
          %307 = vst.msk [vmem:[#allocation3] sm:$0xff] %vm305, 0.0
          %308 = vst.msk [vmem:[#allocation4] sm:$0xff] %vm305, 0.0
          %309 = vst.msk [vmem:[#allocation5] sm:$0xff] %vm305, 0.0
        $region40: #{lstm_model_forward.3} parent=35 // pred_fallthru
          _
        %v310 = vld [vmem:[%s3] sm:$0xff]
        %v311 = vld [vmem:[%s3 + $0x8] sm:$0xff]
        %v312 = vld [vmem:[%s3 + $0x10] sm:$0xff]
        %v313 = vld [vmem:[%s3 + $0x18] sm:$0xff]
        %s314 = scalar_lea.vmem %s3, 32
        %v315 = vld [vmem:[%s314] sm:$0xff]
        %v316 = vld [vmem:[%s314 + $0x8] sm:$0xff]
        %v317 = vld [vmem:[%s314 + $0x10] sm:$0xff]
        %v318 = vld [vmem:[%s314 + $0x18] sm:$0xff]
        %v319 = vld [vmem:[%s2] sm:$0xff]
        %s320 = smul.u32 %s19, 5
        %s321 = ssub.s32 1, %s19
        %s322 = smul.u32 %s321, 5
        %v323 = vld [vmem:[#allocation2] sm:$0xff]
        %v324 = vld [vmem:[#allocation3] sm:$0xff]
        %v325 = vld [vmem:[#allocation4] sm:$0xff]
        %v326 = vld [vmem:[#allocation5] sm:$0xff]
        %v327 = vld [vmem:[%s277] sm:$0xff]
        %vm328 = vcmask 261120
        %v330 = vsel %vm328, %v323, 0
        %332 = vmatprep.subr.mxu0 0.0
        %333 = vmatpush1.msra.mxu0 %v310
        %334 = vmatprep.subr.mxu0 0.0
        %335 = vmatpush1.msra.mxu0 %v311
        %336 = vmatprep.subr.mxu0 0.0
        %337 = vmatpush1.msra.mxu0 %v312
        %338 = vmatprep.subr.mxu0 0.0
        %339 = vmatpush1.msra.mxu0 %v313
        %340 = vmatprep.subr.mxu0 0.0
        %341 = vmatpush1.msra.mxu0 0.0
        %342 = vmatprep.subr.mxu0 0.0
        %343 = vmatpush1.msra.mxu0 0.0
        %344 = vmatprep.subr.mxu0 0.0
        %345 = vmatpush1.msra.mxu0 0.0
        %346 = vmatprep.subr.mxu0 0.0
        %347 = vmatpush1.msra.mxu0 0.0
        %348 = vmatprep.subr.mxu0 0.0
        %349 = vmatpush1.msra.mxu0 0.0
        %350 = vmatprep.subr.mxu0 0.0
        %351 = vmatpush1.msra.mxu0 0.0
        %352 = vmatprep.subr.mxu0 0.0
        %353 = vmatpush1.msra.mxu0 0.0
        %354 = vmatprep.subr.mxu0 0.0
        %355 = vmatpush1.msra.mxu0 0.0
        %356 = vmatprep.subr.mxu0 0.0
        %357 = vmatpush1.msra.mxu0 0.0
        %358 = vmatprep.subr.mxu0 0.0
        %359 = vmatpush1.msra.mxu0 0.0
        %360 = vmatprep.subr.mxu0 0.0
        %361 = vmatpush1.msra.mxu0 0.0
        %362 = vmatprep.subr.mxu0 0.0
        %363 = vmatpush1.msra.mxu0 0.0
        %364 = vmatprep.subr.mxu0 0.0
        %365 = vmatpush1.msra.mxu0 0.0
        %366 = vmatprep.subr.mxu0 0.0
        %367 = vmatpush1.msra.mxu0 0.0
        %368 = vmatprep.subr.mxu0 0.0
        %369 = vmatpush1.msra.mxu0 0.0
        %370 = vmatprep.subr.mxu0 0.0
        %371 = vmatpush1.msra.mxu0 0.0
        %372 = vmatprep.subr.mxu0 0.0
        %373 = vmatpush1.msra.mxu0 0.0
        %374 = vmatprep.subr.mxu0 0.0
        %375 = vmatpush1.msra.mxu0 0.0
        %376 = vmatprep.subr.mxu0 0.0
        %377 = vmatpush1.msra.mxu0 0.0
        %378 = vmatprep.subr.mxu0 0.0
        %379 = vmatpush1.msra.mxu0 0.0
        %380 = vmatprep.subr.mxu0 0.0
        %381 = vmatpush1.msra.mxu0 0.0
        %382 = vmatprep.subr.mxu0 0.0
        %383 = vmatpush1.msra.mxu0 0.0
        %384 = vmatprep.subr.mxu0 0.0
        %385 = vmatpush1.msra.mxu0 0.0
        %386 = vmatprep.subr.mxu0 0.0
        %387 = vmatpush1.msra.mxu0 0.0
        %388 = vmatprep.subr.mxu0 0.0
        %389 = vmatpush1.msra.mxu0 0.0
        %390 = vmatprep.subr.mxu0 0.0
        %391 = vmatpush1.msra.mxu0 0.0
        %392 = vmatprep.subr.mxu0 0.0
        %393 = vmatpush1.msra.mxu0 0.0
        %394 = vmatprep.subr.mxu0 0.0
        %395 = vmatpush1.msra.mxu0 0.0
        %396 = vmatprep.mubr.f32.mxu0 0.0
        %397 = vmatmul.mubr.f32.gmra.mrb[0].mxu0 %v330
        %v398 = vpop.f32.mrb[0].mxu0
        %v399 = vadd.f32 0.0, %v398
        %v400 = vpop.f32.mrb[0].mxu0
        %401 = vdwg.mxu0
        %v402 = vadd.f32 %v327, %v399
        %v403 = vxor.u32 %v402, 2147483648
        %v404 = vmul.f32 %v403, 1.442695
        %v405 = vpow.pop %v404
        %v406 = vadd.f32 %v405, 1.0
        %v407 = vrcp.pop %v406
        %v408 = vmul.f32 1.0, %v407
        %v409 = vtanh.pop %v402
        %411 = vrot.lane.b32.xlu0 %v324, 32
        %v412 = vpop.permute.xlu0 %411
        %v414 = vmul.f32 %v408, %v412
        %416 = vrot.lane.b32.xlu0 %v409, 64
        %v417 = vpop.permute.xlu0 %416
        %v419 = vmul.f32 %v408, %v417
        %421 = vrot.lane.b32.xlu0 %v419, 32
        %v422 = vpop.permute.xlu0 %421
        %v424 = vadd.f32 %v414, %v422
        %v425 = vtanh.pop %v424
        %427 = vrot.lane.b32.xlu0 %v425, 64
        %v428 = vpop.permute.xlu0 %427
        %v430 = vmul.f32 %v408, %v428
        %v431 = vstv %s320
        %vm432 = vcmp.gt.s32.totalorder %v319, %v431
        %v433 = vsel %vm432, 1, 0
        %434 = vset.pattern.permute.xlu0 0
        %435 = vperm.xlu0 %434, %v433
        %v436 = vpop.permute.xlu0 %435
        %vm437 = vcmp.eq.s32.totalorder %v436, 1
        %438 = vrot.lane.b32.xlu0 %v323, 96
        %v439 = vpop.permute.xlu0 %438
        %v441 = vsel %vm437, %v430, %v439
        %v442 = vsel %vm437, %v424, %v412
        %s443 = scalar_lea.vmem %s284, 32
        %v444 = vld [vmem:[%s443] sm:$0xff]
        %s445 = sadd.s32 %s322, 4
        %v447 = vsel %vm328, %v325, 0
        %449 = vmatprep.subr.mxu0 0.0
        %450 = vmatpush1.msra.mxu0 %v315
        %451 = vmatprep.subr.mxu0 0.0
        %452 = vmatpush1.msra.mxu0 %v316
        %453 = vmatprep.subr.mxu0 0.0
        %454 = vmatpush1.msra.mxu0 %v317
        %455 = vmatprep.subr.mxu0 0.0
        %456 = vmatpush1.msra.mxu0 %v318
        %457 = vmatprep.subr.mxu0 0.0
        %458 = vmatpush1.msra.mxu0 0.0
        %459 = vmatprep.subr.mxu0 0.0
        %460 = vmatpush1.msra.mxu0 0.0
        %461 = vmatprep.subr.mxu0 0.0
        %462 = vmatpush1.msra.mxu0 0.0
        %463 = vmatprep.subr.mxu0 0.0
        %464 = vmatpush1.msra.mxu0 0.0
        %465 = vmatprep.subr.mxu0 0.0
        %466 = vmatpush1.msra.mxu0 0.0
        %467 = vmatprep.subr.mxu0 0.0
        %468 = vmatpush1.msra.mxu0 0.0
        %469 = vmatprep.subr.mxu0 0.0
        %470 = vmatpush1.msra.mxu0 0.0
        %471 = vmatprep.subr.mxu0 0.0
        %472 = vmatpush1.msra.mxu0 0.0
        %473 = vmatprep.subr.mxu0 0.0
        %474 = vmatpush1.msra.mxu0 0.0
        %475 = vmatprep.subr.mxu0 0.0
        %476 = vmatpush1.msra.mxu0 0.0
        %477 = vmatprep.subr.mxu0 0.0
        %478 = vmatpush1.msra.mxu0 0.0
        %479 = vmatprep.subr.mxu0 0.0
        %480 = vmatpush1.msra.mxu0 0.0
        %481 = vmatprep.subr.mxu0 0.0
        %482 = vmatpush1.msra.mxu0 0.0
        %483 = vmatprep.subr.mxu0 0.0
        %484 = vmatpush1.msra.mxu0 0.0
        %485 = vmatprep.subr.mxu0 0.0
        %486 = vmatpush1.msra.mxu0 0.0
        %487 = vmatprep.subr.mxu0 0.0
        %488 = vmatpush1.msra.mxu0 0.0
        %489 = vmatprep.subr.mxu0 0.0
        %490 = vmatpush1.msra.mxu0 0.0
        %491 = vmatprep.subr.mxu0 0.0
        %492 = vmatpush1.msra.mxu0 0.0
        %493 = vmatprep.subr.mxu0 0.0
        %494 = vmatpush1.msra.mxu0 0.0
        %495 = vmatprep.subr.mxu0 0.0
        %496 = vmatpush1.msra.mxu0 0.0
        %497 = vmatprep.subr.mxu0 0.0
        %498 = vmatpush1.msra.mxu0 0.0
        %499 = vmatprep.subr.mxu0 0.0
        %500 = vmatpush1.msra.mxu0 0.0
        %501 = vmatprep.subr.mxu0 0.0
        %502 = vmatpush1.msra.mxu0 0.0
        %503 = vmatprep.subr.mxu0 0.0
        %504 = vmatpush1.msra.mxu0 0.0
        %505 = vmatprep.subr.mxu0 0.0
        %506 = vmatpush1.msra.mxu0 0.0
        %507 = vmatprep.subr.mxu0 0.0
        %508 = vmatpush1.msra.mxu0 0.0
        %509 = vmatprep.subr.mxu0 0.0
        %510 = vmatpush1.msra.mxu0 0.0
        %511 = vmatprep.subr.mxu0 0.0
        %512 = vmatpush1.msra.mxu0 0.0
        %513 = vmatprep.mubr.f32.mxu0 0.0
        %514 = vmatmul.mubr.f32.gmra.mrb[0].mxu0 %v447
        %v515 = vpop.f32.mrb[0].mxu0
        %v516 = vadd.f32 0.0, %v515
        %v517 = vpop.f32.mrb[0].mxu0
        %518 = vdwg.mxu0
        %v519 = vadd.f32 %v444, %v516
        %v520 = vxor.u32 %v519, 2147483648
        %v521 = vmul.f32 %v520, 1.442695
        %v522 = vpow.pop %v521
        %v523 = vadd.f32 %v522, 1.0
        %v524 = vrcp.pop %v523
        %v525 = vmul.f32 1.0, %v524
        %v526 = vtanh.pop %v519
        %528 = vrot.lane.b32.xlu0 %v326, 32
        %v529 = vpop.permute.xlu0 %528
        %v531 = vmul.f32 %v525, %v529
        %533 = vrot.lane.b32.xlu0 %v526, 64
        %v534 = vpop.permute.xlu0 %533
        %v536 = vmul.f32 %v525, %v534
        %538 = vrot.lane.b32.xlu0 %v536, 32
        %v539 = vpop.permute.xlu0 %538
        %v541 = vadd.f32 %v531, %v539
        %v542 = vtanh.pop %v541
        %544 = vrot.lane.b32.xlu0 %v542, 64
        %v545 = vpop.permute.xlu0 %544
        %v547 = vmul.f32 %v525, %v545
        %v548 = vstv %s445
        %vm549 = vcmp.gt.s32.totalorder %v319, %v548
        %v550 = vsel %vm549, 1, 0
        %551 = vset.pattern.permute.xlu0 0
        %552 = vperm.xlu0 %551, %v550
        %v553 = vpop.permute.xlu0 %552
        %vm554 = vcmp.eq.s32.totalorder %v553, 1
        %555 = vrot.lane.b32.xlu0 %v325, 96
        %v556 = vpop.permute.xlu0 %555
        %v558 = vsel %vm554, %v547, %v556
        %v559 = vsel %vm554, %v541, %v529
        %561 = vrot.lane.b32.xlu0 %v441, 32
        %v562 = vpop.permute.xlu0 %561
        %564 = vst.msk [vmem:[%s291] sm:$0xff] %vm328, %v562
        %566 = vrot.lane.b32.xlu0 %v558, 32
        %v567 = vpop.permute.xlu0 %566
        %s569 = scalar_lea.vmem %s298, 32
        %570 = vst.msk [vmem:[%s569] sm:$0xff] %vm328, %v567
        %s571 = scalar_lea.vmem %s277, 8
        %v572 = vld [vmem:[%s571] sm:$0xff]
        %s573 = sadd.s32 %s320, 1
        %v574 = vsel %vm328, %v562, 0
        %576 = vmatprep.subr.mxu0 0.0
        %577 = vmatpush1.msra.mxu0 %v310
        %578 = vmatprep.subr.mxu0 0.0
        %579 = vmatpush1.msra.mxu0 %v311
        %580 = vmatprep.subr.mxu0 0.0
        %581 = vmatpush1.msra.mxu0 %v312
        %582 = vmatprep.subr.mxu0 0.0
        %583 = vmatpush1.msra.mxu0 %v313
        %584 = vmatprep.subr.mxu0 0.0
        %585 = vmatpush1.msra.mxu0 0.0
        %586 = vmatprep.subr.mxu0 0.0
        %587 = vmatpush1.msra.mxu0 0.0
        %588 = vmatprep.subr.mxu0 0.0
        %589 = vmatpush1.msra.mxu0 0.0
        %590 = vmatprep.subr.mxu0 0.0
        %591 = vmatpush1.msra.mxu0 0.0
        %592 = vmatprep.subr.mxu0 0.0
        %593 = vmatpush1.msra.mxu0 0.0
        %594 = vmatprep.subr.mxu0 0.0
        %595 = vmatpush1.msra.mxu0 0.0
        %596 = vmatprep.subr.mxu0 0.0
        %597 = vmatpush1.msra.mxu0 0.0
        %598 = vmatprep.subr.mxu0 0.0
        %599 = vmatpush1.msra.mxu0 0.0
        %600 = vmatprep.subr.mxu0 0.0
        %601 = vmatpush1.msra.mxu0 0.0
        %602 = vmatprep.subr.mxu0 0.0
        %603 = vmatpush1.msra.mxu0 0.0
        %604 = vmatprep.subr.mxu0 0.0
        %605 = vmatpush1.msra.mxu0 0.0
        %606 = vmatprep.subr.mxu0 0.0
        %607 = vmatpush1.msra.mxu0 0.0
        %608 = vmatprep.subr.mxu0 0.0
        %609 = vmatpush1.msra.mxu0 0.0
        %610 = vmatprep.subr.mxu0 0.0
        %611 = vmatpush1.msra.mxu0 0.0
        %612 = vmatprep.subr.mxu0 0.0
        %613 = vmatpush1.msra.mxu0 0.0
        %614 = vmatprep.subr.mxu0 0.0
        %615 = vmatpush1.msra.mxu0 0.0
        %616 = vmatprep.subr.mxu0 0.0
        %617 = vmatpush1.msra.mxu0 0.0
        %618 = vmatprep.subr.mxu0 0.0
        %619 = vmatpush1.msra.mxu0 0.0
        %620 = vmatprep.subr.mxu0 0.0
        %621 = vmatpush1.msra.mxu0 0.0
        %622 = vmatprep.subr.mxu0 0.0
        %623 = vmatpush1.msra.mxu0 0.0
        %624 = vmatprep.subr.mxu0 0.0
        %625 = vmatpush1.msra.mxu0 0.0
        %626 = vmatprep.subr.mxu0 0.0
        %627 = vmatpush1.msra.mxu0 0.0
        %628 = vmatprep.subr.mxu0 0.0
        %629 = vmatpush1.msra.mxu0 0.0
        %630 = vmatprep.subr.mxu0 0.0
        %631 = vmatpush1.msra.mxu0 0.0
        %632 = vmatprep.subr.mxu0 0.0
        %633 = vmatpush1.msra.mxu0 0.0
        %634 = vmatprep.subr.mxu0 0.0
        %635 = vmatpush1.msra.mxu0 0.0
        %636 = vmatprep.subr.mxu0 0.0
        %637 = vmatpush1.msra.mxu0 0.0
        %638 = vmatprep.subr.mxu0 0.0
        %639 = vmatpush1.msra.mxu0 0.0
        %640 = vmatprep.mubr.f32.mxu0 0.0
        %641 = vmatmul.mubr.f32.gmra.mrb[0].mxu0 %v574
        %v642 = vpop.f32.mrb[0].mxu0
        %v643 = vadd.f32 0.0, %v642
        %v644 = vpop.f32.mrb[0].mxu0
        %645 = vdwg.mxu0
        %v646 = vadd.f32 %v572, %v643
        %v647 = vxor.u32 %v646, 2147483648
        %v648 = vmul.f32 %v647, 1.442695
        %v649 = vpow.pop %v648
        %v650 = vadd.f32 %v649, 1.0
        %v651 = vrcp.pop %v650
        %v652 = vmul.f32 1.0, %v651
        %v653 = vtanh.pop %v646
        %v654 = vmul.f32 %v652, %v442
        %656 = vrot.lane.b32.xlu0 %v653, 64
        %v657 = vpop.permute.xlu0 %656
        %v659 = vmul.f32 %v652, %v657
        %661 = vrot.lane.b32.xlu0 %v659, 32
        %v662 = vpop.permute.xlu0 %661
        %v664 = vadd.f32 %v654, %v662
        %v665 = vtanh.pop %v664
        %667 = vrot.lane.b32.xlu0 %v665, 64
        %v668 = vpop.permute.xlu0 %667
        %v670 = vmul.f32 %v652, %v668
        %v671 = vstv %s573
        %vm672 = vcmp.gt.s32.totalorder %v319, %v671
        %v673 = vsel %vm672, 1, 0
        %674 = vset.pattern.permute.xlu0 0
        %675 = vperm.xlu0 %674, %v673
        %v676 = vpop.permute.xlu0 %675
        %vm677 = vcmp.eq.s32.totalorder %v676, 1
        %v678 = vsel %vm677, %v670, %v441
        %v679 = vsel %vm677, %v664, %v442
        %s680 = scalar_lea.vmem %s284, 24
        %v681 = vld [vmem:[%s680] sm:$0xff]
        %s682 = sadd.s32 %s322, 3
        %v683 = vsel %vm328, %v567, 0
        %685 = vmatprep.subr.mxu0 0.0
        %686 = vmatpush1.msra.mxu0 %v315
        %687 = vmatprep.subr.mxu0 0.0
        %688 = vmatpush1.msra.mxu0 %v316
        %689 = vmatprep.subr.mxu0 0.0
        %690 = vmatpush1.msra.mxu0 %v317
        %691 = vmatprep.subr.mxu0 0.0
        %692 = vmatpush1.msra.mxu0 %v318
        %693 = vmatprep.subr.mxu0 0.0
        %694 = vmatpush1.msra.mxu0 0.0
        %695 = vmatprep.subr.mxu0 0.0
        %696 = vmatpush1.msra.mxu0 0.0
        %697 = vmatprep.subr.mxu0 0.0
        %698 = vmatpush1.msra.mxu0 0.0
        %699 = vmatprep.subr.mxu0 0.0
        %700 = vmatpush1.msra.mxu0 0.0
        %701 = vmatprep.subr.mxu0 0.0
        %702 = vmatpush1.msra.mxu0 0.0
        %703 = vmatprep.subr.mxu0 0.0
        %704 = vmatpush1.msra.mxu0 0.0
        %705 = vmatprep.subr.mxu0 0.0
        %706 = vmatpush1.msra.mxu0 0.0
        %707 = vmatprep.subr.mxu0 0.0
        %708 = vmatpush1.msra.mxu0 0.0
        %709 = vmatprep.subr.mxu0 0.0
        %710 = vmatpush1.msra.mxu0 0.0
        %711 = vmatprep.subr.mxu0 0.0
        %712 = vmatpush1.msra.mxu0 0.0
        %713 = vmatprep.subr.mxu0 0.0
        %714 = vmatpush1.msra.mxu0 0.0
        %715 = vmatprep.subr.mxu0 0.0
        %716 = vmatpush1.msra.mxu0 0.0
        %717 = vmatprep.subr.mxu0 0.0
        %718 = vmatpush1.msra.mxu0 0.0
        %719 = vmatprep.subr.mxu0 0.0
        %720 = vmatpush1.msra.mxu0 0.0
        %721 = vmatprep.subr.mxu0 0.0
        %722 = vmatpush1.msra.mxu0 0.0
        %723 = vmatprep.subr.mxu0 0.0
        %724 = vmatpush1.msra.mxu0 0.0
        %725 = vmatprep.subr.mxu0 0.0
        %726 = vmatpush1.msra.mxu0 0.0
        %727 = vmatprep.subr.mxu0 0.0
        %728 = vmatpush1.msra.mxu0 0.0
        %729 = vmatprep.subr.mxu0 0.0
        %730 = vmatpush1.msra.mxu0 0.0
        %731 = vmatprep.subr.mxu0 0.0
        %732 = vmatpush1.msra.mxu0 0.0
        %733 = vmatprep.subr.mxu0 0.0
        %734 = vmatpush1.msra.mxu0 0.0
        %735 = vmatprep.subr.mxu0 0.0
        %736 = vmatpush1.msra.mxu0 0.0
        %737 = vmatprep.subr.mxu0 0.0
        %738 = vmatpush1.msra.mxu0 0.0
        %739 = vmatprep.subr.mxu0 0.0
        %740 = vmatpush1.msra.mxu0 0.0
        %741 = vmatprep.subr.mxu0 0.0
        %742 = vmatpush1.msra.mxu0 0.0
        %743 = vmatprep.subr.mxu0 0.0
        %744 = vmatpush1.msra.mxu0 0.0
        %745 = vmatprep.subr.mxu0 0.0
        %746 = vmatpush1.msra.mxu0 0.0
        %747 = vmatprep.subr.mxu0 0.0
        %748 = vmatpush1.msra.mxu0 0.0
        %749 = vmatprep.mubr.f32.mxu0 0.0
        %750 = vmatmul.mubr.f32.gmra.mrb[0].mxu0 %v683
        %v751 = vpop.f32.mrb[0].mxu0
        %v752 = vadd.f32 0.0, %v751
        %v753 = vpop.f32.mrb[0].mxu0
        %754 = vdwg.mxu0
        %v755 = vadd.f32 %v681, %v752
        %v756 = vxor.u32 %v755, 2147483648
        %v757 = vmul.f32 %v756, 1.442695
        %v758 = vpow.pop %v757
        %v759 = vadd.f32 %v758, 1.0
        %v760 = vrcp.pop %v759
        %v761 = vmul.f32 1.0, %v760
        %v762 = vtanh.pop %v755
        %v763 = vmul.f32 %v761, %v559
        %765 = vrot.lane.b32.xlu0 %v762, 64
        %v766 = vpop.permute.xlu0 %765
        %v768 = vmul.f32 %v761, %v766
        %770 = vrot.lane.b32.xlu0 %v768, 32
        %v771 = vpop.permute.xlu0 %770
        %v773 = vadd.f32 %v763, %v771
        %v774 = vtanh.pop %v773
        %776 = vrot.lane.b32.xlu0 %v774, 64
        %v777 = vpop.permute.xlu0 %776
        %v779 = vmul.f32 %v761, %v777
        %v780 = vstv %s682
        %vm781 = vcmp.gt.s32.totalorder %v319, %v780
        %v782 = vsel %vm781, 1, 0
        %783 = vset.pattern.permute.xlu0 0
        %784 = vperm.xlu0 %783, %v782
        %v785 = vpop.permute.xlu0 %784
        %vm786 = vcmp.eq.s32.totalorder %v785, 1
        %v787 = vsel %vm786, %v779, %v558
        %v788 = vsel %vm786, %v773, %v559
        %790 = vrot.lane.b32.xlu0 %v678, 32
        %v791 = vpop.permute.xlu0 %790
        %s793 = scalar_lea.vmem %s291, 8
        %794 = vst.msk [vmem:[%s793] sm:$0xff] %vm328, %v791
        %796 = vrot.lane.b32.xlu0 %v787, 32
        %v797 = vpop.permute.xlu0 %796
        %s799 = scalar_lea.vmem %s298, 24
        %800 = vst.msk [vmem:[%s799] sm:$0xff] %vm328, %v797
        %s801 = scalar_lea.vmem %s277, 16
        %v802 = vld [vmem:[%s801] sm:$0xff]
        %s803 = sadd.s32 %s320, 2
        %v804 = vsel %vm328, %v791, 0
        %806 = vmatprep.subr.mxu0 0.0
        %807 = vmatpush1.msra.mxu0 %v310
        %808 = vmatprep.subr.mxu0 0.0
        %809 = vmatpush1.msra.mxu0 %v311
        %810 = vmatprep.subr.mxu0 0.0
        %811 = vmatpush1.msra.mxu0 %v312
        %812 = vmatprep.subr.mxu0 0.0
        %813 = vmatpush1.msra.mxu0 %v313
        %814 = vmatprep.subr.mxu0 0.0
        %815 = vmatpush1.msra.mxu0 0.0
        %816 = vmatprep.subr.mxu0 0.0
        %817 = vmatpush1.msra.mxu0 0.0
        %818 = vmatprep.subr.mxu0 0.0
        %819 = vmatpush1.msra.mxu0 0.0
        %820 = vmatprep.subr.mxu0 0.0
        %821 = vmatpush1.msra.mxu0 0.0
        %822 = vmatprep.subr.mxu0 0.0
        %823 = vmatpush1.msra.mxu0 0.0
        %824 = vmatprep.subr.mxu0 0.0
        %825 = vmatpush1.msra.mxu0 0.0
        %826 = vmatprep.subr.mxu0 0.0
        %827 = vmatpush1.msra.mxu0 0.0
        %828 = vmatprep.subr.mxu0 0.0
        %829 = vmatpush1.msra.mxu0 0.0
        %830 = vmatprep.subr.mxu0 0.0
        %831 = vmatpush1.msra.mxu0 0.0
        %832 = vmatprep.subr.mxu0 0.0
        %833 = vmatpush1.msra.mxu0 0.0
        %834 = vmatprep.subr.mxu0 0.0
        %835 = vmatpush1.msra.mxu0 0.0
        %836 = vmatprep.subr.mxu0 0.0
        %837 = vmatpush1.msra.mxu0 0.0
        %838 = vmatprep.subr.mxu0 0.0
        %839 = vmatpush1.msra.mxu0 0.0
        %840 = vmatprep.subr.mxu0 0.0
        %841 = vmatpush1.msra.mxu0 0.0
        %842 = vmatprep.subr.mxu0 0.0
        %843 = vmatpush1.msra.mxu0 0.0
        %844 = vmatprep.subr.mxu0 0.0
        %845 = vmatpush1.msra.mxu0 0.0
        %846 = vmatprep.subr.mxu0 0.0
        %847 = vmatpush1.msra.mxu0 0.0
        %848 = vmatprep.subr.mxu0 0.0
        %849 = vmatpush1.msra.mxu0 0.0
        %850 = vmatprep.subr.mxu0 0.0
        %851 = vmatpush1.msra.mxu0 0.0
        %852 = vmatprep.subr.mxu0 0.0
        %853 = vmatpush1.msra.mxu0 0.0
        %854 = vmatprep.subr.mxu0 0.0
        %855 = vmatpush1.msra.mxu0 0.0
        %856 = vmatprep.subr.mxu0 0.0
        %857 = vmatpush1.msra.mxu0 0.0
        %858 = vmatprep.subr.mxu0 0.0
        %859 = vmatpush1.msra.mxu0 0.0
        %860 = vmatprep.subr.mxu0 0.0
        %861 = vmatpush1.msra.mxu0 0.0
        %862 = vmatprep.subr.mxu0 0.0
        %863 = vmatpush1.msra.mxu0 0.0
        %864 = vmatprep.subr.mxu0 0.0
        %865 = vmatpush1.msra.mxu0 0.0
        %866 = vmatprep.subr.mxu0 0.0
        %867 = vmatpush1.msra.mxu0 0.0
        %868 = vmatprep.subr.mxu0 0.0
        %869 = vmatpush1.msra.mxu0 0.0
        %870 = vmatprep.mubr.f32.mxu0 0.0
        %871 = vmatmul.mubr.f32.gmra.mrb[0].mxu0 %v804
        %v872 = vpop.f32.mrb[0].mxu0
        %v873 = vadd.f32 0.0, %v872
        %v874 = vpop.f32.mrb[0].mxu0
        %875 = vdwg.mxu0
        %v876 = vadd.f32 %v802, %v873
        %v877 = vxor.u32 %v876, 2147483648
        %v878 = vmul.f32 %v877, 1.442695
        %v879 = vpow.pop %v878
        %v880 = vadd.f32 %v879, 1.0
        %v881 = vrcp.pop %v880
        %v882 = vmul.f32 1.0, %v881
        %v883 = vtanh.pop %v876
        %v884 = vmul.f32 %v882, %v679
        %886 = vrot.lane.b32.xlu0 %v883, 64
        %v887 = vpop.permute.xlu0 %886
        %v889 = vmul.f32 %v882, %v887
        %891 = vrot.lane.b32.xlu0 %v889, 32
        %v892 = vpop.permute.xlu0 %891
        %v894 = vadd.f32 %v884, %v892
        %v895 = vtanh.pop %v894
        %897 = vrot.lane.b32.xlu0 %v895, 64
        %v898 = vpop.permute.xlu0 %897
        %v900 = vmul.f32 %v882, %v898
        %v901 = vstv %s803
        %vm902 = vcmp.gt.s32.totalorder %v319, %v901
        %v903 = vsel %vm902, 1, 0
        %904 = vset.pattern.permute.xlu0 0
        %905 = vperm.xlu0 %904, %v903
        %v906 = vpop.permute.xlu0 %905
        %vm907 = vcmp.eq.s32.totalorder %v906, 1
        %v908 = vsel %vm907, %v900, %v678
        %v909 = vsel %vm907, %v894, %v679
        %s910 = scalar_lea.vmem %s284, 16
        %v911 = vld [vmem:[%s910] sm:$0xff]
        %s912 = sadd.s32 %s322, 2
        %v913 = vsel %vm328, %v797, 0
        %915 = vmatprep.subr.mxu0 0.0
        %916 = vmatpush1.msra.mxu0 %v315
        %917 = vmatprep.subr.mxu0 0.0
        %918 = vmatpush1.msra.mxu0 %v316
        %919 = vmatprep.subr.mxu0 0.0
        %920 = vmatpush1.msra.mxu0 %v317
        %921 = vmatprep.subr.mxu0 0.0
        %922 = vmatpush1.msra.mxu0 %v318
        %923 = vmatprep.subr.mxu0 0.0
        %924 = vmatpush1.msra.mxu0 0.0
        %925 = vmatprep.subr.mxu0 0.0
        %926 = vmatpush1.msra.mxu0 0.0
        %927 = vmatprep.subr.mxu0 0.0
        %928 = vmatpush1.msra.mxu0 0.0
        %929 = vmatprep.subr.mxu0 0.0
        %930 = vmatpush1.msra.mxu0 0.0
        %931 = vmatprep.subr.mxu0 0.0
        %932 = vmatpush1.msra.mxu0 0.0
        %933 = vmatprep.subr.mxu0 0.0
        %934 = vmatpush1.msra.mxu0 0.0
        %935 = vmatprep.subr.mxu0 0.0
        %936 = vmatpush1.msra.mxu0 0.0
        %937 = vmatprep.subr.mxu0 0.0
        %938 = vmatpush1.msra.mxu0 0.0
        %939 = vmatprep.subr.mxu0 0.0
        %940 = vmatpush1.msra.mxu0 0.0
        %941 = vmatprep.subr.mxu0 0.0
        %942 = vmatpush1.msra.mxu0 0.0
        %943 = vmatprep.subr.mxu0 0.0
        %944 = vmatpush1.msra.mxu0 0.0
        %945 = vmatprep.subr.mxu0 0.0
        %946 = vmatpush1.msra.mxu0 0.0
        %947 = vmatprep.subr.mxu0 0.0
        %948 = vmatpush1.msra.mxu0 0.0
        %949 = vmatprep.subr.mxu0 0.0
        %950 = vmatpush1.msra.mxu0 0.0
        %951 = vmatprep.subr.mxu0 0.0
        %952 = vmatpush1.msra.mxu0 0.0
        %953 = vmatprep.subr.mxu0 0.0
        %954 = vmatpush1.msra.mxu0 0.0
        %955 = vmatprep.subr.mxu0 0.0
        %956 = vmatpush1.msra.mxu0 0.0
        %957 = vmatprep.subr.mxu0 0.0
        %958 = vmatpush1.msra.mxu0 0.0
        %959 = vmatprep.subr.mxu0 0.0
        %960 = vmatpush1.msra.mxu0 0.0
        %961 = vmatprep.subr.mxu0 0.0
        %962 = vmatpush1.msra.mxu0 0.0
        %963 = vmatprep.subr.mxu0 0.0
        %964 = vmatpush1.msra.mxu0 0.0
        %965 = vmatprep.subr.mxu0 0.0
        %966 = vmatpush1.msra.mxu0 0.0
        %967 = vmatprep.subr.mxu0 0.0
        %968 = vmatpush1.msra.mxu0 0.0
        %969 = vmatprep.subr.mxu0 0.0
        %970 = vmatpush1.msra.mxu0 0.0
        %971 = vmatprep.subr.mxu0 0.0
        %972 = vmatpush1.msra.mxu0 0.0
        %973 = vmatprep.subr.mxu0 0.0
        %974 = vmatpush1.msra.mxu0 0.0
        %975 = vmatprep.subr.mxu0 0.0
        %976 = vmatpush1.msra.mxu0 0.0
        %977 = vmatprep.subr.mxu0 0.0
        %978 = vmatpush1.msra.mxu0 0.0
        %979 = vmatprep.mubr.f32.mxu0 0.0
        %980 = vmatmul.mubr.f32.gmra.mrb[0].mxu0 %v913
        %v981 = vpop.f32.mrb[0].mxu0
        %v982 = vadd.f32 0.0, %v981
        %v983 = vpop.f32.mrb[0].mxu0
        %984 = vdwg.mxu0
        %v985 = vadd.f32 %v911, %v982
        %v986 = vxor.u32 %v985, 2147483648
        %v987 = vmul.f32 %v986, 1.442695
        %v988 = vpow.pop %v987
        %v989 = vadd.f32 %v988, 1.0
        %v990 = vrcp.pop %v989
        %v991 = vmul.f32 1.0, %v990
        %v992 = vtanh.pop %v985
        %v993 = vmul.f32 %v991, %v788
        %995 = vrot.lane.b32.xlu0 %v992, 64
        %v996 = vpop.permute.xlu0 %995
        %v998 = vmul.f32 %v991, %v996
        %1000 = vrot.lane.b32.xlu0 %v998, 32
        %v1001 = vpop.permute.xlu0 %1000
        %v1003 = vadd.f32 %v993, %v1001
        %v1004 = vtanh.pop %v1003
        %1006 = vrot.lane.b32.xlu0 %v1004, 64
        %v1007 = vpop.permute.xlu0 %1006
        %v1009 = vmul.f32 %v991, %v1007
        %v1010 = vstv %s912
        %vm1011 = vcmp.gt.s32.totalorder %v319, %v1010
        %v1012 = vsel %vm1011, 1, 0
        %1013 = vset.pattern.permute.xlu0 0
        %1014 = vperm.xlu0 %1013, %v1012
        %v1015 = vpop.permute.xlu0 %1014
        %vm1016 = vcmp.eq.s32.totalorder %v1015, 1
        %v1017 = vsel %vm1016, %v1009, %v787
        %v1018 = vsel %vm1016, %v1003, %v788
        %1020 = vrot.lane.b32.xlu0 %v908, 32
        %v1021 = vpop.permute.xlu0 %1020
        %s1023 = scalar_lea.vmem %s291, 16
        %1024 = vst.msk [vmem:[%s1023] sm:$0xff] %vm328, %v1021
        %1026 = vrot.lane.b32.xlu0 %v1017, 32
        %v1027 = vpop.permute.xlu0 %1026
        %s1029 = scalar_lea.vmem %s298, 16
        %1030 = vst.msk [vmem:[%s1029] sm:$0xff] %vm328, %v1027
        %s1031 = scalar_lea.vmem %s277, 24
        %v1032 = vld [vmem:[%s1031] sm:$0xff]
        %s1033 = sadd.s32 %s320, 3
        %v1034 = vsel %vm328, %v1021, 0
        %1036 = vmatprep.subr.mxu0 0.0
        %1037 = vmatpush1.msra.mxu0 %v310
        %1038 = vmatprep.subr.mxu0 0.0
        %1039 = vmatpush1.msra.mxu0 %v311
        %1040 = vmatprep.subr.mxu0 0.0
        %1041 = vmatpush1.msra.mxu0 %v312
        %1042 = vmatprep.subr.mxu0 0.0
        %1043 = vmatpush1.msra.mxu0 %v313
        %1044 = vmatprep.subr.mxu0 0.0
        %1045 = vmatpush1.msra.mxu0 0.0
        %1046 = vmatprep.subr.mxu0 0.0
        %1047 = vmatpush1.msra.mxu0 0.0
        %1048 = vmatprep.subr.mxu0 0.0
        %1049 = vmatpush1.msra.mxu0 0.0
        %1050 = vmatprep.subr.mxu0 0.0
        %1051 = vmatpush1.msra.mxu0 0.0
        %1052 = vmatprep.subr.mxu0 0.0
        %1053 = vmatpush1.msra.mxu0 0.0
        %1054 = vmatprep.subr.mxu0 0.0
        %1055 = vmatpush1.msra.mxu0 0.0
        %1056 = vmatprep.subr.mxu0 0.0
        %1057 = vmatpush1.msra.mxu0 0.0
        %1058 = vmatprep.subr.mxu0 0.0
        %1059 = vmatpush1.msra.mxu0 0.0
        %1060 = vmatprep.subr.mxu0 0.0
        %1061 = vmatpush1.msra.mxu0 0.0
        %1062 = vmatprep.subr.mxu0 0.0
        %1063 = vmatpush1.msra.mxu0 0.0
        %1064 = vmatprep.subr.mxu0 0.0
        %1065 = vmatpush1.msra.mxu0 0.0
        %1066 = vmatprep.subr.mxu0 0.0
        %1067 = vmatpush1.msra.mxu0 0.0
        %1068 = vmatprep.subr.mxu0 0.0
        %1069 = vmatpush1.msra.mxu0 0.0
        %1070 = vmatprep.subr.mxu0 0.0
        %1071 = vmatpush1.msra.mxu0 0.0
        %1072 = vmatprep.subr.mxu0 0.0
        %1073 = vmatpush1.msra.mxu0 0.0
        %1074 = vmatprep.subr.mxu0 0.0
        %1075 = vmatpush1.msra.mxu0 0.0
        %1076 = vmatprep.subr.mxu0 0.0
        %1077 = vmatpush1.msra.mxu0 0.0
        %1078 = vmatprep.subr.mxu0 0.0
        %1079 = vmatpush1.msra.mxu0 0.0
        %1080 = vmatprep.subr.mxu0 0.0
        %1081 = vmatpush1.msra.mxu0 0.0
        %1082 = vmatprep.subr.mxu0 0.0
        %1083 = vmatpush1.msra.mxu0 0.0
        %1084 = vmatprep.subr.mxu0 0.0
        %1085 = vmatpush1.msra.mxu0 0.0
        %1086 = vmatprep.subr.mxu0 0.0
        %1087 = vmatpush1.msra.mxu0 0.0
        %1088 = vmatprep.subr.mxu0 0.0
        %1089 = vmatpush1.msra.mxu0 0.0
        %1090 = vmatprep.subr.mxu0 0.0
        %1091 = vmatpush1.msra.mxu0 0.0
        %1092 = vmatprep.subr.mxu0 0.0
        %1093 = vmatpush1.msra.mxu0 0.0
        %1094 = vmatprep.subr.mxu0 0.0
        %1095 = vmatpush1.msra.mxu0 0.0
        %1096 = vmatprep.subr.mxu0 0.0
        %1097 = vmatpush1.msra.mxu0 0.0
        %1098 = vmatprep.subr.mxu0 0.0
        %1099 = vmatpush1.msra.mxu0 0.0
        %1100 = vmatprep.mubr.f32.mxu0 0.0
        %1101 = vmatmul.mubr.f32.gmra.mrb[0].mxu0 %v1034
        %v1102 = vpop.f32.mrb[0].mxu0
        %v1103 = vadd.f32 0.0, %v1102
        %v1104 = vpop.f32.mrb[0].mxu0
        %1105 = vdwg.mxu0
        %v1106 = vadd.f32 %v1032, %v1103
        %v1107 = vxor.u32 %v1106, 2147483648
        %v1108 = vmul.f32 %v1107, 1.442695
        %v1109 = vpow.pop %v1108
        %v1110 = vadd.f32 %v1109, 1.0
        %v1111 = vrcp.pop %v1110
        %v1112 = vmul.f32 1.0, %v1111
        %v1113 = vtanh.pop %v1106
        %v1114 = vmul.f32 %v1112, %v909
        %1116 = vrot.lane.b32.xlu0 %v1113, 64
        %v1117 = vpop.permute.xlu0 %1116
        %v1119 = vmul.f32 %v1112, %v1117
        %1121 = vrot.lane.b32.xlu0 %v1119, 32
        %v1122 = vpop.permute.xlu0 %1121
        %v1124 = vadd.f32 %v1114, %v1122
        %v1125 = vtanh.pop %v1124
        %1127 = vrot.lane.b32.xlu0 %v1125, 64
        %v1128 = vpop.permute.xlu0 %1127
        %v1130 = vmul.f32 %v1112, %v1128
        %v1131 = vstv %s1033
        %vm1132 = vcmp.gt.s32.totalorder %v319, %v1131
        %v1133 = vsel %vm1132, 1, 0
        %1134 = vset.pattern.permute.xlu0 0
        %1135 = vperm.xlu0 %1134, %v1133
        %v1136 = vpop.permute.xlu0 %1135
        %vm1137 = vcmp.eq.s32.totalorder %v1136, 1
        %v1138 = vsel %vm1137, %v1130, %v908
        %v1139 = vsel %vm1137, %v1124, %v909
        %s1140 = scalar_lea.vmem %s284, 8
        %v1141 = vld [vmem:[%s1140] sm:$0xff]
        %s1142 = sadd.s32 %s322, 1
        %v1143 = vsel %vm328, %v1027, 0
        %1145 = vmatprep.subr.mxu0 0.0
        %1146 = vmatpush1.msra.mxu0 %v315
        %1147 = vmatprep.subr.mxu0 0.0
        %1148 = vmatpush1.msra.mxu0 %v316
        %1149 = vmatprep.subr.mxu0 0.0
        %1150 = vmatpush1.msra.mxu0 %v317
        %1151 = vmatprep.subr.mxu0 0.0
        %1152 = vmatpush1.msra.mxu0 %v318
        %1153 = vmatprep.subr.mxu0 0.0
        %1154 = vmatpush1.msra.mxu0 0.0
        %1155 = vmatprep.subr.mxu0 0.0
        %1156 = vmatpush1.msra.mxu0 0.0
        %1157 = vmatprep.subr.mxu0 0.0
        %1158 = vmatpush1.msra.mxu0 0.0
        %1159 = vmatprep.subr.mxu0 0.0
        %1160 = vmatpush1.msra.mxu0 0.0
        %1161 = vmatprep.subr.mxu0 0.0
        %1162 = vmatpush1.msra.mxu0 0.0
        %1163 = vmatprep.subr.mxu0 0.0
        %1164 = vmatpush1.msra.mxu0 0.0
        %1165 = vmatprep.subr.mxu0 0.0
        %1166 = vmatpush1.msra.mxu0 0.0
        %1167 = vmatprep.subr.mxu0 0.0
        %1168 = vmatpush1.msra.mxu0 0.0
        %1169 = vmatprep.subr.mxu0 0.0
        %1170 = vmatpush1.msra.mxu0 0.0
        %1171 = vmatprep.subr.mxu0 0.0
        %1172 = vmatpush1.msra.mxu0 0.0
        %1173 = vmatprep.subr.mxu0 0.0
        %1174 = vmatpush1.msra.mxu0 0.0
        %1175 = vmatprep.subr.mxu0 0.0
        %1176 = vmatpush1.msra.mxu0 0.0
        %1177 = vmatprep.subr.mxu0 0.0
        %1178 = vmatpush1.msra.mxu0 0.0
        %1179 = vmatprep.subr.mxu0 0.0
        %1180 = vmatpush1.msra.mxu0 0.0
        %1181 = vmatprep.subr.mxu0 0.0
        %1182 = vmatpush1.msra.mxu0 0.0
        %1183 = vmatprep.subr.mxu0 0.0
        %1184 = vmatpush1.msra.mxu0 0.0
        %1185 = vmatprep.subr.mxu0 0.0
        %1186 = vmatpush1.msra.mxu0 0.0
        %1187 = vmatprep.subr.mxu0 0.0
        %1188 = vmatpush1.msra.mxu0 0.0
        %1189 = vmatprep.subr.mxu0 0.0
        %1190 = vmatpush1.msra.mxu0 0.0
        %1191 = vmatprep.subr.mxu0 0.0
        %1192 = vmatpush1.msra.mxu0 0.0
        %1193 = vmatprep.subr.mxu0 0.0
        %1194 = vmatpush1.msra.mxu0 0.0
        %1195 = vmatprep.subr.mxu0 0.0
        %1196 = vmatpush1.msra.mxu0 0.0
        %1197 = vmatprep.subr.mxu0 0.0
        %1198 = vmatpush1.msra.mxu0 0.0
        %1199 = vmatprep.subr.mxu0 0.0
        %1200 = vmatpush1.msra.mxu0 0.0
        %1201 = vmatprep.subr.mxu0 0.0
        %1202 = vmatpush1.msra.mxu0 0.0
        %1203 = vmatprep.subr.mxu0 0.0
        %1204 = vmatpush1.msra.mxu0 0.0
        %1205 = vmatprep.subr.mxu0 0.0
        %1206 = vmatpush1.msra.mxu0 0.0
        %1207 = vmatprep.subr.mxu0 0.0
        %1208 = vmatpush1.msra.mxu0 0.0
        %1209 = vmatprep.mubr.f32.mxu0 0.0
        %1210 = vmatmul.mubr.f32.gmra.mrb[0].mxu0 %v1143
        %v1211 = vpop.f32.mrb[0].mxu0
        %v1212 = vadd.f32 0.0, %v1211
        %v1213 = vpop.f32.mrb[0].mxu0
        %1214 = vdwg.mxu0
        %v1215 = vadd.f32 %v1141, %v1212
        %v1216 = vxor.u32 %v1215, 2147483648
        %v1217 = vmul.f32 %v1216, 1.442695
        %v1218 = vpow.pop %v1217
        %v1219 = vadd.f32 %v1218, 1.0
        %v1220 = vrcp.pop %v1219
        %v1221 = vmul.f32 1.0, %v1220
        %v1222 = vtanh.pop %v1215
        %v1223 = vmul.f32 %v1221, %v1018
        %1225 = vrot.lane.b32.xlu0 %v1222, 64
        %v1226 = vpop.permute.xlu0 %1225
        %v1228 = vmul.f32 %v1221, %v1226
        %1230 = vrot.lane.b32.xlu0 %v1228, 32
        %v1231 = vpop.permute.xlu0 %1230
        %v1233 = vadd.f32 %v1223, %v1231
        %v1234 = vtanh.pop %v1233
        %1236 = vrot.lane.b32.xlu0 %v1234, 64
        %v1237 = vpop.permute.xlu0 %1236
        %v1239 = vmul.f32 %v1221, %v1237
        %v1240 = vstv %s1142
        %vm1241 = vcmp.gt.s32.totalorder %v319, %v1240
        %v1242 = vsel %vm1241, 1, 0
        %1243 = vset.pattern.permute.xlu0 0
        %1244 = vperm.xlu0 %1243, %v1242
        %v1245 = vpop.permute.xlu0 %1244
        %vm1246 = vcmp.eq.s32.totalorder %v1245, 1
        %v1247 = vsel %vm1246, %v1239, %v1017
        %v1248 = vsel %vm1246, %v1233, %v1018
        %1250 = vrot.lane.b32.xlu0 %v1138, 32
        %v1251 = vpop.permute.xlu0 %1250
        %s1253 = scalar_lea.vmem %s291, 24
        %1254 = vst.msk [vmem:[%s1253] sm:$0xff] %vm328, %v1251
        %1256 = vrot.lane.b32.xlu0 %v1247, 32
        %v1257 = vpop.permute.xlu0 %1256
        %s1259 = scalar_lea.vmem %s298, 8
        %1260 = vst.msk [vmem:[%s1259] sm:$0xff] %vm328, %v1257
        %s1261 = scalar_lea.vmem %s277, 32
        %v1262 = vld [vmem:[%s1261] sm:$0xff]
        %s1263 = sadd.s32 %s320, 4
        %v1264 = vsel %vm328, %v1251, 0
        %1266 = vmatprep.subr.mxu0 0.0
        %1267 = vmatpush1.msra.mxu0 %v310
        %1268 = vmatprep.subr.mxu0 0.0
        %1269 = vmatpush1.msra.mxu0 %v311
        %1270 = vmatprep.subr.mxu0 0.0
        %1271 = vmatpush1.msra.mxu0 %v312
        %1272 = vmatprep.subr.mxu0 0.0
        %1273 = vmatpush1.msra.mxu0 %v313
        %1274 = vmatprep.subr.mxu0 0.0
        %1275 = vmatpush1.msra.mxu0 0.0
        %1276 = vmatprep.subr.mxu0 0.0
        %1277 = vmatpush1.msra.mxu0 0.0
        %1278 = vmatprep.subr.mxu0 0.0
        %1279 = vmatpush1.msra.mxu0 0.0
        %1280 = vmatprep.subr.mxu0 0.0
        %1281 = vmatpush1.msra.mxu0 0.0
        %1282 = vmatprep.subr.mxu0 0.0
        %1283 = vmatpush1.msra.mxu0 0.0
        %1284 = vmatprep.subr.mxu0 0.0
        %1285 = vmatpush1.msra.mxu0 0.0
        %1286 = vmatprep.subr.mxu0 0.0
        %1287 = vmatpush1.msra.mxu0 0.0
        %1288 = vmatprep.subr.mxu0 0.0
        %1289 = vmatpush1.msra.mxu0 0.0
        %1290 = vmatprep.subr.mxu0 0.0
        %1291 = vmatpush1.msra.mxu0 0.0
        %1292 = vmatprep.subr.mxu0 0.0
        %1293 = vmatpush1.msra.mxu0 0.0
        %1294 = vmatprep.subr.mxu0 0.0
        %1295 = vmatpush1.msra.mxu0 0.0
        %1296 = vmatprep.subr.mxu0 0.0
        %1297 = vmatpush1.msra.mxu0 0.0
        %1298 = vmatprep.subr.mxu0 0.0
        %1299 = vmatpush1.msra.mxu0 0.0
        %1300 = vmatprep.subr.mxu0 0.0
        %1301 = vmatpush1.msra.mxu0 0.0
        %1302 = vmatprep.subr.mxu0 0.0
        %1303 = vmatpush1.msra.mxu0 0.0
        %1304 = vmatprep.subr.mxu0 0.0
        %1305 = vmatpush1.msra.mxu0 0.0
        %1306 = vmatprep.subr.mxu0 0.0
        %1307 = vmatpush1.msra.mxu0 0.0
        %1308 = vmatprep.subr.mxu0 0.0
        %1309 = vmatpush1.msra.mxu0 0.0
        %1310 = vmatprep.subr.mxu0 0.0
        %1311 = vmatpush1.msra.mxu0 0.0
        %1312 = vmatprep.subr.mxu0 0.0
        %1313 = vmatpush1.msra.mxu0 0.0
        %1314 = vmatprep.subr.mxu0 0.0
        %1315 = vmatpush1.msra.mxu0 0.0
        %1316 = vmatprep.subr.mxu0 0.0
        %1317 = vmatpush1.msra.mxu0 0.0
        %1318 = vmatprep.subr.mxu0 0.0
        %1319 = vmatpush1.msra.mxu0 0.0
        %1320 = vmatprep.subr.mxu0 0.0
        %1321 = vmatpush1.msra.mxu0 0.0
        %1322 = vmatprep.subr.mxu0 0.0
        %1323 = vmatpush1.msra.mxu0 0.0
        %1324 = vmatprep.subr.mxu0 0.0
        %1325 = vmatpush1.msra.mxu0 0.0
        %1326 = vmatprep.subr.mxu0 0.0
        %1327 = vmatpush1.msra.mxu0 0.0
        %1328 = vmatprep.subr.mxu0 0.0
        %1329 = vmatpush1.msra.mxu0 0.0
        %1330 = vmatprep.mubr.f32.mxu0 0.0
        %1331 = vmatmul.mubr.f32.gmra.mrb[0].mxu0 %v1264
        %v1332 = vpop.f32.mrb[0].mxu0
        %v1333 = vadd.f32 0.0, %v1332
        %v1334 = vpop.f32.mrb[0].mxu0
        %1335 = vdwg.mxu0
        %v1336 = vadd.f32 %v1262, %v1333
        %v1337 = vxor.u32 %v1336, 2147483648
        %v1338 = vmul.f32 %v1337, 1.442695
        %v1339 = vpow.pop %v1338
        %v1340 = vadd.f32 %v1339, 1.0
        %v1341 = vrcp.pop %v1340
        %v1342 = vmul.f32 1.0, %v1341
        %v1343 = vtanh.pop %v1336
        %v1344 = vmul.f32 %v1342, %v1139
        %1346 = vrot.lane.b32.xlu0 %v1343, 64
        %v1347 = vpop.permute.xlu0 %1346
        %v1349 = vmul.f32 %v1342, %v1347
        %1351 = vrot.lane.b32.xlu0 %v1349, 32
        %v1352 = vpop.permute.xlu0 %1351
        %v1354 = vadd.f32 %v1344, %v1352
        %v1355 = vtanh.pop %v1354
        %1357 = vrot.lane.b32.xlu0 %v1355, 64
        %v1358 = vpop.permute.xlu0 %1357
        %v1360 = vmul.f32 %v1342, %v1358
        %v1361 = vstv %s1263
        %vm1362 = vcmp.gt.s32.totalorder %v319, %v1361
        %v1363 = vsel %vm1362, 1, 0
        %1364 = vset.pattern.permute.xlu0 0
        %1365 = vperm.xlu0 %1364, %v1363
        %v1366 = vpop.permute.xlu0 %1365
        %vm1367 = vcmp.eq.s32.totalorder %v1366, 1
        %v1368 = vsel %vm1367, %v1360, %v1138
        %v1369 = vsel %vm1367, %v1354, %v1139
        %v1370 = vld [vmem:[%s284] sm:$0xff]
        %v1371 = vsel %vm328, %v1257, 0
        %1373 = vmatprep.subr.mxu0 0.0
        %1374 = vmatpush1.msra.mxu0 %v315
        %1375 = vmatprep.subr.mxu0 0.0
        %1376 = vmatpush1.msra.mxu0 %v316
        %1377 = vmatprep.subr.mxu0 0.0
        %1378 = vmatpush1.msra.mxu0 %v317
        %1379 = vmatprep.subr.mxu0 0.0
        %1380 = vmatpush1.msra.mxu0 %v318
        %1381 = vmatprep.subr.mxu0 0.0
        %1382 = vmatpush1.msra.mxu0 0.0
        %1383 = vmatprep.subr.mxu0 0.0
        %1384 = vmatpush1.msra.mxu0 0.0
        %1385 = vmatprep.subr.mxu0 0.0
        %1386 = vmatpush1.msra.mxu0 0.0
        %1387 = vmatprep.subr.mxu0 0.0
        %1388 = vmatpush1.msra.mxu0 0.0
        %1389 = vmatprep.subr.mxu0 0.0
        %1390 = vmatpush1.msra.mxu0 0.0
        %1391 = vmatprep.subr.mxu0 0.0
        %1392 = vmatpush1.msra.mxu0 0.0
        %1393 = vmatprep.subr.mxu0 0.0
        %1394 = vmatpush1.msra.mxu0 0.0
        %1395 = vmatprep.subr.mxu0 0.0
        %1396 = vmatpush1.msra.mxu0 0.0
        %1397 = vmatprep.subr.mxu0 0.0
        %1398 = vmatpush1.msra.mxu0 0.0
        %1399 = vmatprep.subr.mxu0 0.0
        %1400 = vmatpush1.msra.mxu0 0.0
        %1401 = vmatprep.subr.mxu0 0.0
        %1402 = vmatpush1.msra.mxu0 0.0
        %1403 = vmatprep.subr.mxu0 0.0
        %1404 = vmatpush1.msra.mxu0 0.0
        %1405 = vmatprep.subr.mxu0 0.0
        %1406 = vmatpush1.msra.mxu0 0.0
        %1407 = vmatprep.subr.mxu0 0.0
        %1408 = vmatpush1.msra.mxu0 0.0
        %1409 = vmatprep.subr.mxu0 0.0
        %1410 = vmatpush1.msra.mxu0 0.0
        %1411 = vmatprep.subr.mxu0 0.0
        %1412 = vmatpush1.msra.mxu0 0.0
        %1413 = vmatprep.subr.mxu0 0.0
        %1414 = vmatpush1.msra.mxu0 0.0
        %1415 = vmatprep.subr.mxu0 0.0
        %1416 = vmatpush1.msra.mxu0 0.0
        %1417 = vmatprep.subr.mxu0 0.0
        %1418 = vmatpush1.msra.mxu0 0.0
        %1419 = vmatprep.subr.mxu0 0.0
        %1420 = vmatpush1.msra.mxu0 0.0
        %1421 = vmatprep.subr.mxu0 0.0
        %1422 = vmatpush1.msra.mxu0 0.0
        %1423 = vmatprep.subr.mxu0 0.0
        %1424 = vmatpush1.msra.mxu0 0.0
        %1425 = vmatprep.subr.mxu0 0.0
        %1426 = vmatpush1.msra.mxu0 0.0
        %1427 = vmatprep.subr.mxu0 0.0
        %1428 = vmatpush1.msra.mxu0 0.0
        %1429 = vmatprep.subr.mxu0 0.0
        %1430 = vmatpush1.msra.mxu0 0.0
        %1431 = vmatprep.subr.mxu0 0.0
        %1432 = vmatpush1.msra.mxu0 0.0
        %1433 = vmatprep.subr.mxu0 0.0
        %1434 = vmatpush1.msra.mxu0 0.0
        %1435 = vmatprep.subr.mxu0 0.0
        %1436 = vmatpush1.msra.mxu0 0.0
        %1437 = vmatprep.mubr.f32.mxu0 0.0
        %1438 = vmatmul.mubr.f32.gmra.mrb[0].mxu0 %v1371
        %v1439 = vpop.f32.mrb[0].mxu0
        %v1440 = vadd.f32 0.0, %v1439
        %v1441 = vpop.f32.mrb[0].mxu0
        %1442 = vdwg.mxu0
        %v1443 = vadd.f32 %v1370, %v1440
        %v1444 = vxor.u32 %v1443, 2147483648
        %v1445 = vmul.f32 %v1444, 1.442695
        %v1446 = vpow.pop %v1445
        %v1447 = vadd.f32 %v1446, 1.0
        %v1448 = vrcp.pop %v1447
        %v1449 = vmul.f32 1.0, %v1448
        %v1450 = vtanh.pop %v1443
        %v1451 = vmul.f32 %v1449, %v1248
        %1453 = vrot.lane.b32.xlu0 %v1450, 64
        %v1454 = vpop.permute.xlu0 %1453
        %v1456 = vmul.f32 %v1449, %v1454
        %1458 = vrot.lane.b32.xlu0 %v1456, 32
        %v1459 = vpop.permute.xlu0 %1458
        %v1461 = vadd.f32 %v1451, %v1459
        %v1462 = vtanh.pop %v1461
        %1464 = vrot.lane.b32.xlu0 %v1462, 64
        %v1465 = vpop.permute.xlu0 %1464
        %v1467 = vmul.f32 %v1449, %v1465
        %v1468 = vstv %s322
        %vm1469 = vcmp.gt.s32.totalorder %v319, %v1468
        %v1470 = vsel %vm1469, 1, 0
        %1471 = vset.pattern.permute.xlu0 0
        %1472 = vperm.xlu0 %1471, %v1470
        %v1473 = vpop.permute.xlu0 %1472
        %vm1474 = vcmp.eq.s32.totalorder %v1473, 1
        %v1475 = vsel %vm1474, %v1467, %v1247
        %v1476 = vsel %vm1474, %v1461, %v1248
        %1478 = vrot.lane.b32.xlu0 %v1368, 32
        %v1479 = vpop.permute.xlu0 %1478
        %s1481 = scalar_lea.vmem %s291, 32
        %1482 = vst.msk [vmem:[%s1481] sm:$0xff] %vm328, %v1479
        %1484 = vrot.lane.b32.xlu0 %v1475, 32
        %v1485 = vpop.permute.xlu0 %1484
        %1487 = vst.msk [vmem:[%s298] sm:$0xff] %vm328, %v1485
        %1488 = vst.msk [vmem:[#allocation2] sm:$0xff] %vm328, %v1479
        %1490 = vrot.lane.b32.xlu0 %v1369, 96
        %v1491 = vpop.permute.xlu0 %1490
        %1493 = vst.msk [vmem:[#allocation3] sm:$0xff] %vm328, %v1491
        %1494 = vst.msk [vmem:[#allocation4] sm:$0xff] %vm328, %v1485
        %1496 = vrot.lane.b32.xlu0 %v1476, 96
        %v1497 = vpop.permute.xlu0 %1496
        %1499 = vst.msk [vmem:[#allocation5] sm:$0xff] %vm328, %v1497
        %p1500 = scmp.eq.s32.totalorder %s19, 1
        // Predicated region
        $region41: #{lstm_model_forward.3} parent=35 // pred_check
          %p1501 = pneg %p1500
        $region42: #{lstm_model_forward.3} parent=35 // pred_check_branch
          %1503 = sbr.rel (%p1501) target = $region44
        $region43: #{lstm_model_forward.3} parent=35 // pred_region
          %1504 = vst.msk [vmem:[#allocation6] sm:$0xff] %vm328, %v1479
          %s1505 = scalar_lea.vmem [#allocation6], 8
          %1506 = vst.msk [vmem:[%s1505] sm:$0xff] %vm328, %v1485
        $region44: #{lstm_model_forward.3} parent=35 // pred_fallthru
          _
        %s1507 = smul.u32 5, %s19
        %p1508 = scmp.lt.s32.totalorder %s1507, 9
        %s1509 = scalar_select %p1508, %s1507, 9
        %s1510 = smul.addr %s1509, 8
        %s1511 = scalar_lea.vmem %s4, %s1510
        %s1512 = ssub.s32 1, %s19
        %s1513 = smul.u32 5, %s1512
        %p1514 = scmp.lt.s32.totalorder %s1513, 9
        %s1515 = scalar_select %p1514, %s1513, 9
        %s1516 = smul.addr %s1515, 8
        %s1517 = scalar_lea.vmem %s5, %s1516
        // Predicated region
        $region45: #{lstm_model_forward.3} parent=35 // pred_check
          %p1518 = pneg %p133
        $region46: #{lstm_model_forward.3} parent=35 // pred_check_branch
          %1520 = sbr.rel (%p1518) target = $region48
        $region47: #{lstm_model_forward.3} parent=35 // pred_region
          %s1521 = smul.u32 5, %s19
        $region48: #{lstm_model_forward.3} parent=35 // pred_fallthru
          _
        // Predicated region
        $region49: #{lstm_model_forward.3} parent=35 // pred_check
          %p1522 = pneg %p161
        $region50: #{lstm_model_forward.3} parent=35 // pred_check_branch
          %1524 = sbr.rel (%p1522) target = $region52
        $region51: #{lstm_model_forward.3} parent=35 // pred_region
          %s1525 = ssub.s32 1, %s19
          %s1526 = smul.u32 5, %s1525
        $region52: #{lstm_model_forward.3} parent=35 // pred_fallthru
          _
        // Predicated region
        $region53: #{lstm_model_forward.3} parent=35 // pred_check
          %p1527 = pneg %p182
        $region54: #{lstm_model_forward.3} parent=35 // pred_check_branch
          %1529 = sbr.rel (%p1527) target = $region56
        $region55: #{lstm_model_forward.3} parent=35 // pred_region
          %s1531 = ssub.s32 256, 256
          %1532 = vsyncadd [#allocation7], %s1531
          %s1533 = sshll.u32 [#allocation6], 4
          %s1534 = int_to_ptr.vmem [resolvable:$true] %s1533
          %1539 = dma.vmem_to_hbm [thread:$0]  %s1534, 256, %s6, [#allocation7], 128, 128, 8
        $region56: #{lstm_model_forward.3} parent=35 // pred_fallthru
          _
        // Predicated region
        $region57: #{lstm_model_forward.3} parent=35 // pred_check
          %p1540 = pneg %p182
        $region58: #{lstm_model_forward.3} parent=35 // pred_check_branch
          %1542 = sbr.rel (%p1540) target = $region60
        $region59: #{lstm_model_forward.3} parent=35 // pred_region
          %1543 = dma.done [#allocation7], 256
        $region60: #{lstm_model_forward.3} parent=35 // pred_fallthru
          _
      $region36: #{lstm_model_forward.3} parent=5 // pred_fallthru
        _
      %p1544 = scmp.le.s32.totalorder 2, %s14
      // Predicated region
      $region61: #{lstm_model_forward.3} parent=5 // pred_check
        %p1545 = pneg %p1544
      $region62: #{lstm_model_forward.3} parent=5 // pred_check_branch
        %1547 = sbr.rel (%p1545) target = $region64
      $region63: #{lstm_model_forward.3} parent=5 // pred_region
        %s1548 = ssub.s32 %s14, 2
        // Predicated region
        $region65: #{lstm_model_forward.3} parent=63 // pred_check
          %p1549 = pneg %p139
        $region66: #{lstm_model_forward.3} parent=63 // pred_check_branch
          %1551 = sbr.rel (%p1549) target = $region68
        $region67: #{lstm_model_forward.3} parent=63 // pred_region
          %s1552 = smul.u32 5, %s20
          %p1553 = scmp.lt.s32.totalorder %s1552, 9
          %s1554 = scalar_select %p1553, %s1552, 9
          %s1555 = smul.addr %s1554, 8
          %s1556 = scalar_lea.vmem %s4, %s1555
        $region68: #{lstm_model_forward.3} parent=63 // pred_fallthru
          _
        // Predicated region
        $region69: #{lstm_model_forward.3} parent=63 // pred_check
          %p1557 = pneg %p167
        $region70: #{lstm_model_forward.3} parent=63 // pred_check_branch
          %1559 = sbr.rel (%p1557) target = $region72
        $region71: #{lstm_model_forward.3} parent=63 // pred_region
          %s1560 = ssub.s32 1, %s20
          %s1561 = smul.u32 5, %s1560
          %p1562 = scmp.lt.s32.totalorder %s1561, 9
          %s1563 = scalar_select %p1562, %s1561, 9
          %s1564 = smul.addr %s1563, 8
          %s1565 = scalar_lea.vmem %s5, %s1564
        $region72: #{lstm_model_forward.3} parent=63 // pred_fallthru
          _
      $region64: #{lstm_model_forward.3} parent=5 // pred_fallthru
        _
    $region6: #{lstm_model_forward.3} parent=1 // loop_footer
      %s18 = sadd.s32 1, %s14
    $region7: #{lstm_model_forward.3} parent=1 // loop_footer_branch
      %13 = sbr.rel target = $region3
    $region8: #{lstm_model_forward.3} parent=1 // loop_exit
      _
    %1566 = vsyncpa [#allocation7], 1
    %s1567 = scalar_lea.sflag [#allocation7], 1
    %1568 = vsyncpa %s1567, 1

// kernel: lstm_model_forward.4
$region0: #{lstm_model_forward.4}
  #allocation0 [shape = 'u32[]', space=smem, size = 0x4, offset = 0x4, fixed_abs, tag = 'smem constant byte address 0x4 - core index']
  #allocation1 [shape = 'u32[144,128]{1,0:T(1,128)}', space=vmem, size = 0x12000, scoped, tag = 'internal scratch']
  #allocation2 [shape = 'f32[8,32]{1,0:T(8,128)}', space=vmem, size = 0x1000, scoped, tag = 'scratch operand']
  #allocation3 [shape = 'f32[8,32]{1,0:T(8,128)}', space=vmem, size = 0x1000, scoped, tag = 'scratch operand']
  #allocation4 [shape = 'f32[8,32]{1,0:T(8,128)}', space=vmem, size = 0x1000, scoped, tag = 'scratch operand']
  #allocation5 [shape = 'f32[8,32]{1,0:T(8,128)}', space=vmem, size = 0x1000, scoped, tag = 'scratch operand']
  %s0 = inlined_call_operand.vmem [shape: f32[10,8,128], index: 0, kind: input, shape index: {}]
  %s1 = inlined_call_operand.vmem [shape: f32[10,8,128], index: 1, kind: input, shape index: {}]
  %s2 = inlined_call_operand.vmem [shape: s32[8,1], index: 2, kind: input, shape index: {}]
  %s3 = inlined_call_operand.vmem [shape: f32[2,32,128], index: 3, kind: input, shape index: {}]
  %s4 = inlined_call_operand.hbm [shape: f32[10,8,32], index: 4, kind: output, shape index: {0}]
  %s5 = inlined_call_operand.hbm [shape: f32[10,8,32], index: 5, kind: output, shape index: {1}]
  %s6 = inlined_call_operand.vmem [shape: f32[2,8,32], index: 6, kind: output, shape index: {2}]
  %7 = xla_tuple %s4, %s5, %s6
  %s8 = sld [smem:[#allocation0]]
  $region73: #{lstm_model_forward.4} parent=0
    _
  %s10 = ssub.s32 1, %s8
  %s11 = scalar_select 0, %s10, %s8
  $region1: #{lstm_model_forward.4} parent=0
    #allocation6 [shape = 'u8[40960]{0}', space=vmem, size = 0xa000, scoped, tag = 'output window, operand 0']
    #allocation7 [shape = 's32[2]{0}', space=sflag, size = 0x8, scoped, tag = 'scoped memory for lstm_model_forward.4']
    #allocation8 [shape = 'u8[40960]{0}', space=vmem, size = 0xa000, scoped, tag = 'output window, operand 1']
    #allocation9 [shape = 's32[2]{0}', space=sflag, size = 0x8, scoped, tag = 'scoped memory for lstm_model_forward.4']
    %12 = vsyncpa [#allocation7], 0
    %s13 = scalar_lea.sflag [#allocation7], 1
    %14 = vsyncpa %s13, 0
    %15 = vsyncpa [#allocation9], 0
    %s16 = scalar_lea.sflag [#allocation9], 1
    %17 = vsyncpa %s16, 0
    loop: start=0, step=1, limit=4
    $region2: #{lstm_model_forward.4} parent=1 // loop_pre_header
      _
    $region3: #{lstm_model_forward.4} parent=1 // loop_header
      %s19 = sphi 0, %s23
      %p20 = scmp.ge.s32.totalorder %s19, 4
      %s29 = sphi 0, %s31
      %s32 = sphi 0, %s29
      %s33 = sphi 0, %s32
      %s49 = sphi 0, %s33
      %s57 = sphi 0, %s59
      %s60 = sphi 0, %s57
      %s61 = sphi 0, %s60
      %s77 = sphi 0, %s61
      %s81 = sphi 0, %s81
      %s83 = sphi 0, %s81
      %s84 = sphi 0, %s83
      %s98 = sphi 0, %s84
      %s102 = sphi 0, %s102
      %s104 = sphi 0, %s102
      %s105 = sphi 0, %s104
      %s119 = sphi 0, %s105
      %s125 = sphi 0, %s127
      %s128 = sphi 0, %s125
      %s129 = sphi 0, %s128
      %s145 = sphi 0, %s129
      %s153 = sphi 0, %s155
      %s156 = sphi 0, %s153
      %s157 = sphi 0, %s156
      %s173 = sphi 0, %s157
      %s177 = sphi 0, %s177
      %s179 = sphi 0, %s177
      %s180 = sphi 0, %s179
      %s194 = sphi 0, %s180
    $region4: #{lstm_model_forward.4} parent=1 // loop_header_branch
      %22 = sbr.rel (%p20) target = $region8
    $region5: #{lstm_model_forward.4} parent=1 // loop_body
      %s24 = ssub.s32 %s19, 1
      %s25 = ssub.s32 %s19, 2
      %s26 = sadd.s32 %s19, 1
      %s27 = ssub.s32 %s19, %s26
      %p28 = scmp.eq.s32.totalorder %s27, 0
      %s30 = sadd.s32 %s29, 1
      %s31 = scalar_select %p28, %s29, %s30
      %p34 = pneg %p28
      %p35 = scmp.eq.s32.totalorder %s19, 1
      %p36 = por %p34, %p35
      %p37 = scmp.ne.s32.totalorder %s29, %s32
      %p38 = scmp.eq.s32.totalorder %s19, 0
      %p39 = por %p37, %p38
      %p40 = scmp.ne.s32.totalorder %s29, %s32
      %p41 = scmp.eq.s32.totalorder %s24, 1
      %p42 = por %p40, %p41
      %p43 = scmp.ne.s32.totalorder %s32, %s33
      %p44 = scmp.eq.s32.totalorder %s24, 0
      %p45 = por %p43, %p44
      %p46 = scmp.ne.s32.totalorder %s32, %s33
      %p47 = scmp.eq.s32.totalorder %s25, 1
      %p48 = por %p46, %p47
      %p50 = scmp.ne.s32.totalorder %s33, %s49
      %p51 = scmp.eq.s32.totalorder %s25, 0
      %p52 = por %p50, %p51
      %s53 = ssub.s32 1, %s19
      %s54 = ssub.s32 1, %s26
      %s55 = ssub.s32 %s53, %s54
      %p56 = scmp.eq.s32.totalorder %s55, 0
      %s58 = sadd.s32 %s57, 1
      %s59 = scalar_select %p56, %s57, %s58
      %p62 = pneg %p56
      %p63 = scmp.eq.s32.totalorder %s19, 1
      %p64 = por %p62, %p63
      %p65 = scmp.ne.s32.totalorder %s57, %s60
      %p66 = scmp.eq.s32.totalorder %s19, 0
      %p67 = por %p65, %p66
      %p68 = scmp.ne.s32.totalorder %s57, %s60
      %p69 = scmp.eq.s32.totalorder %s24, 1
      %p70 = por %p68, %p69
      %p71 = scmp.ne.s32.totalorder %s60, %s61
      %p72 = scmp.eq.s32.totalorder %s24, 0
      %p73 = por %p71, %p72
      %p74 = scmp.ne.s32.totalorder %s60, %s61
      %p75 = scmp.eq.s32.totalorder %s25, 1
      %p76 = por %p74, %p75
      %p78 = scmp.ne.s32.totalorder %s61, %s77
      %p79 = scmp.eq.s32.totalorder %s25, 0
      %p80 = por %p78, %p79
      %s82 = sadd.s32 %s81, 1
      %p85 = scmp.eq.s32.totalorder %s19, 1
      %p86 = scmp.ne.s32.totalorder %s81, %s83
      %p87 = scmp.eq.s32.totalorder %s19, 0
      %p88 = por %p86, %p87
      %p89 = scmp.ne.s32.totalorder %s81, %s83
      %p90 = scmp.eq.s32.totalorder %s24, 1
      %p91 = por %p89, %p90
      %p92 = scmp.ne.s32.totalorder %s83, %s84
      %p93 = scmp.eq.s32.totalorder %s24, 0
      %p94 = por %p92, %p93
      %p95 = scmp.ne.s32.totalorder %s83, %s84
      %p96 = scmp.eq.s32.totalorder %s25, 1
      %p97 = por %p95, %p96
      %p99 = scmp.ne.s32.totalorder %s84, %s98
      %p100 = scmp.eq.s32.totalorder %s25, 0
      %p101 = por %p99, %p100
      %s103 = sadd.s32 %s102, 1
      %p106 = scmp.eq.s32.totalorder %s19, 1
      %p107 = scmp.ne.s32.totalorder %s102, %s104
      %p108 = scmp.eq.s32.totalorder %s19, 0
      %p109 = por %p107, %p108
      %p110 = scmp.ne.s32.totalorder %s102, %s104
      %p111 = scmp.eq.s32.totalorder %s24, 1
      %p112 = por %p110, %p111
      %p113 = scmp.ne.s32.totalorder %s104, %s105
      %p114 = scmp.eq.s32.totalorder %s24, 0
      %p115 = por %p113, %p114
      %p116 = scmp.ne.s32.totalorder %s104, %s105
      %p117 = scmp.eq.s32.totalorder %s25, 1
      %p118 = por %p116, %p117
      %p120 = scmp.ne.s32.totalorder %s105, %s119
      %p121 = scmp.eq.s32.totalorder %s25, 0
      %p122 = por %p120, %p121
      %s123 = ssub.s32 %s19, %s26
      %p124 = scmp.eq.s32.totalorder %s123, 0
      %s126 = sadd.s32 %s125, 1
      %s127 = scalar_select %p124, %s125, %s126
      %p130 = pneg %p124
      %p131 = scmp.eq.s32.totalorder %s19, 1
      %p132 = por %p130, %p131
      %p133 = scmp.ne.s32.totalorder %s125, %s128
      %p134 = scmp.eq.s32.totalorder %s19, 0
      %p135 = por %p133, %p134
      %p136 = scmp.ne.s32.totalorder %s125, %s128
      %p137 = scmp.eq.s32.totalorder %s24, 1
      %p138 = por %p136, %p137
      %p139 = scmp.ne.s32.totalorder %s128, %s129
      %p140 = scmp.eq.s32.totalorder %s24, 0
      %p141 = por %p139, %p140
      %p142 = scmp.ne.s32.totalorder %s128, %s129
      %p143 = scmp.eq.s32.totalorder %s25, 1
      %p144 = por %p142, %p143
      %p146 = scmp.ne.s32.totalorder %s129, %s145
      %p147 = scmp.eq.s32.totalorder %s25, 0
      %p148 = por %p146, %p147
      %s149 = ssub.s32 1, %s19
      %s150 = ssub.s32 1, %s26
      %s151 = ssub.s32 %s149, %s150
      %p152 = scmp.eq.s32.totalorder %s151, 0
      %s154 = sadd.s32 %s153, 1
      %s155 = scalar_select %p152, %s153, %s154
      %p158 = pneg %p152
      %p159 = scmp.eq.s32.totalorder %s19, 1
      %p160 = por %p158, %p159
      %p161 = scmp.ne.s32.totalorder %s153, %s156
      %p162 = scmp.eq.s32.totalorder %s19, 0
      %p163 = por %p161, %p162
      %p164 = scmp.ne.s32.totalorder %s153, %s156
      %p165 = scmp.eq.s32.totalorder %s24, 1
      %p166 = por %p164, %p165
      %p167 = scmp.ne.s32.totalorder %s156, %s157
      %p168 = scmp.eq.s32.totalorder %s24, 0
      %p169 = por %p167, %p168
      %p170 = scmp.ne.s32.totalorder %s156, %s157
      %p171 = scmp.eq.s32.totalorder %s25, 1
      %p172 = por %p170, %p171
      %p174 = scmp.ne.s32.totalorder %s157, %s173
      %p175 = scmp.eq.s32.totalorder %s25, 0
      %p176 = por %p174, %p175
      %s178 = sadd.s32 %s177, 1
      %p181 = scmp.eq.s32.totalorder %s19, 1
      %p182 = scmp.ne.s32.totalorder %s177, %s179
      %p183 = scmp.eq.s32.totalorder %s19, 0
      %p184 = por %p182, %p183
      %p185 = scmp.ne.s32.totalorder %s177, %s179
      %p186 = scmp.eq.s32.totalorder %s24, 1
      %p187 = por %p185, %p186
      %p188 = scmp.ne.s32.totalorder %s179, %s180
      %p189 = scmp.eq.s32.totalorder %s24, 0
      %p190 = por %p188, %p189
      %p191 = scmp.ne.s32.totalorder %s179, %s180
      %p192 = scmp.eq.s32.totalorder %s25, 1
      %p193 = por %p191, %p192
      %p195 = scmp.ne.s32.totalorder %s180, %s194
      %p196 = scmp.eq.s32.totalorder %s25, 0
      %p197 = por %p195, %p196
      %p198 = scmp.le.s32.totalorder 1, %s19
      %p199 = scmp.lt.s32.totalorder %s19, 3
      %p200 = pnand %p198, %p199
      %p201 = pneg %p200
      // Predicated region
      $region9: #{lstm_model_forward.4} parent=5 // pred_check
        _
      $region10: #{lstm_model_forward.4} parent=5 // pred_check_branch
        %203 = sbr.rel (%p200) target = $region12
      $region11: #{lstm_model_forward.4} parent=5 // pred_region
        %s204 = ssub.s32 %s19, 1
        // Predicated region
        $region13: #{lstm_model_forward.4} parent=11 // pred_check
          %p205 = pneg %p94
        $region14: #{lstm_model_forward.4} parent=11 // pred_check_branch
          %207 = sbr.rel (%p205) target = $region16
        $region15: #{lstm_model_forward.4} parent=11 // pred_region
          _
        $region16: #{lstm_model_forward.4} parent=11 // pred_fallthru
          _
        // Predicated region
        $region17: #{lstm_model_forward.4} parent=11 // pred_check
          %p208 = pneg %p115
        $region18: #{lstm_model_forward.4} parent=11 // pred_check_branch
          %210 = sbr.rel (%p208) target = $region20
        $region19: #{lstm_model_forward.4} parent=11 // pred_region
          _
        $region20: #{lstm_model_forward.4} parent=11 // pred_fallthru
          _
      $region12: #{lstm_model_forward.4} parent=5 // pred_fallthru
        _
      %p211 = scmp.lt.s32.totalorder %s19, 2
      // Predicated region
      $region21: #{lstm_model_forward.4} parent=5 // pred_check
        %p212 = pneg %p211
      $region22: #{lstm_model_forward.4} parent=5 // pred_check_branch
        %214 = sbr.rel (%p212) target = $region24
      $region23: #{lstm_model_forward.4} parent=5 // pred_region
        // Predicated region
        $region25: #{lstm_model_forward.4} parent=23 // pred_check
          %p215 = pneg %p39
        $region26: #{lstm_model_forward.4} parent=23 // pred_check_branch
          %217 = sbr.rel (%p215) target = $region28
        $region27: #{lstm_model_forward.4} parent=23 // pred_region
          %s218 = smul.u32 5, %s19
          %p219 = scmp.lt.s32.totalorder %s218, 9
          %s220 = scalar_select %p219, %s218, 9
          %s221 = smul.addr %s220, 8
          %s222 = scalar_lea.vmem %s0, %s221
          %s223 = smul.u32 5, %s19
        $region28: #{lstm_model_forward.4} parent=23 // pred_fallthru
          _
        // Predicated region
        $region29: #{lstm_model_forward.4} parent=23 // pred_check
          %p224 = pneg %p67
        $region30: #{lstm_model_forward.4} parent=23 // pred_check_branch
          %226 = sbr.rel (%p224) target = $region32
        $region31: #{lstm_model_forward.4} parent=23 // pred_region
          %s227 = ssub.s32 1, %s19
          %s228 = smul.u32 5, %s227
          %p229 = scmp.lt.s32.totalorder %s228, 9
          %s230 = scalar_select %p229, %s228, 9
          %s231 = smul.addr %s230, 8
          %s232 = scalar_lea.vmem %s1, %s231
          %s233 = ssub.s32 1, %s19
          %s234 = smul.u32 5, %s233
        $region32: #{lstm_model_forward.4} parent=23 // pred_fallthru
          _
      $region24: #{lstm_model_forward.4} parent=5 // pred_fallthru
        _
      %p235 = scmp.le.s32.totalorder 1, %s19
      %p236 = scmp.lt.s32.totalorder %s19, 3
      %p237 = pnand %p235, %p236
      %p238 = pneg %p237
      // Predicated region
      $region33: #{lstm_model_forward.4} parent=5 // pred_check
        _
      $region34: #{lstm_model_forward.4} parent=5 // pred_check_branch
        %240 = sbr.rel (%p237) target = $region36
      $region35: #{lstm_model_forward.4} parent=5 // pred_region
        %s241 = ssub.s32 %s19, 1
        %s242 = smul.u32 5, %s24
        %p243 = scmp.lt.s32.totalorder %s242, 9
        %s244 = scalar_select %p243, %s242, 9
        %s245 = smul.addr %s244, 8
        %s246 = scalar_lea.vmem %s0, %s245
        %p247 = pneg %p45
        %p248 = pneg %p42
        %s249 = ssub.s32 1, %s24
        %s250 = smul.u32 5, %s249
        %p251 = scmp.lt.s32.totalorder %s250, 9
        %s252 = scalar_select %p251, %s250, 9
        %s253 = smul.addr %s252, 8
        %s254 = scalar_lea.vmem %s1, %s253
        %p255 = pneg %p73
        %p256 = pneg %p70
        %p257 = pneg %p94
        %p258 = pneg %p91
        %p259 = pneg %p115
        %p260 = pneg %p112
        %p261 = pneg %p141
        %p262 = pneg %p138
        %s263 = sand.u32 %s128, 1
        %s264 = scalar_lea.sflag [#allocation7], %s263
        %s265 = sand.u32 %s128, 1
        %s266 = smul.addr %s265, 40
        %s267 = scalar_lea.vmem [#allocation6], %s266
        %p268 = pneg %p169
        %p269 = pneg %p166
        %s270 = sand.u32 %s156, 1
        %s271 = scalar_lea.sflag [#allocation9], %s270
        %s272 = sand.u32 %s156, 1
        %s273 = smul.addr %s272, 40
        %s274 = scalar_lea.vmem [#allocation8], %s273
        %p275 = pneg %p190
        %p276 = pneg %p187
        %s277 = smul.u32 5, %s24
        %p278 = scmp.lt.s32.totalorder %s277, 9
        %s279 = scalar_select %p278, %s277, 9
        %s280 = smul.addr %s279, 8
        %s281 = scalar_lea.vmem %s0, %s280
        %s282 = smul.u32 5, %s24
        %s283 = ssub.s32 1, %s24
        %s284 = smul.u32 5, %s283
        %p285 = scmp.lt.s32.totalorder %s284, 9
        %s286 = scalar_select %p285, %s284, 9
        %s287 = smul.addr %s286, 8
        %s288 = scalar_lea.vmem %s1, %s287
        %s289 = ssub.s32 1, %s24
        %s290 = smul.u32 5, %s289
        %s291 = smul.u32 5, %s24
        %s292 = ssub.s32 1, %s24
        %s293 = smul.u32 5, %s292
        %p294 = scmp.eq.s32.totalorder %s24, 0
        // Predicated region
        $region37: #{lstm_model_forward.4} parent=35 // pred_check
          %p295 = pneg %p294
        $region38: #{lstm_model_forward.4} parent=35 // pred_check_branch
          %297 = sbr.rel (%p295) target = $region40
        $region39: #{lstm_model_forward.4} parent=35 // pred_region
          %vm298 = vcmask 261120
          %299 = vst.msk [vmem:[#allocation2] sm:$0xff] %vm298, 0.0
          %300 = vst.msk [vmem:[#allocation3] sm:$0xff] %vm298, 0.0
          %301 = vst.msk [vmem:[#allocation4] sm:$0xff] %vm298, 0.0
          %302 = vst.msk [vmem:[#allocation5] sm:$0xff] %vm298, 0.0
        $region40: #{lstm_model_forward.4} parent=35 // pred_fallthru
          _
        %v303 = vld [vmem:[%s3] sm:$0xff]
        %v304 = vld [vmem:[%s3 + $0x8] sm:$0xff]
        %v305 = vld [vmem:[%s3 + $0x10] sm:$0xff]
        %v306 = vld [vmem:[%s3 + $0x18] sm:$0xff]
        %s307 = scalar_lea.vmem %s3, 32
        %v308 = vld [vmem:[%s307] sm:$0xff]
        %v309 = vld [vmem:[%s307 + $0x8] sm:$0xff]
        %v310 = vld [vmem:[%s307 + $0x10] sm:$0xff]
        %v311 = vld [vmem:[%s307 + $0x18] sm:$0xff]
        %v312 = vld [vmem:[%s2] sm:$0xff]
        %s313 = smul.u32 %s24, 5
        %s314 = ssub.s32 1, %s24
        %s315 = smul.u32 %s314, 5
        %v316 = vld [vmem:[#allocation2] sm:$0xff]
        %v317 = vld [vmem:[#allocation3] sm:$0xff]
        %v318 = vld [vmem:[#allocation4] sm:$0xff]
        %v319 = vld [vmem:[#allocation5] sm:$0xff]
        %v320 = vld [vmem:[%s281] sm:$0xff]
        %vm321 = vcmask 261120
        %v323 = vsel %vm321, %v316, 0
        %325 = vmatprep.subr.mxu0 0.0
        %326 = vmatpush1.msra.mxu0 %v303
        %327 = vmatprep.subr.mxu0 0.0
        %328 = vmatpush1.msra.mxu0 %v304
        %329 = vmatprep.subr.mxu0 0.0
        %330 = vmatpush1.msra.mxu0 %v305
        %331 = vmatprep.subr.mxu0 0.0
        %332 = vmatpush1.msra.mxu0 %v306
        %333 = vmatprep.subr.mxu0 0.0
        %334 = vmatpush1.msra.mxu0 0.0
        %335 = vmatprep.subr.mxu0 0.0
        %336 = vmatpush1.msra.mxu0 0.0
        %337 = vmatprep.subr.mxu0 0.0
        %338 = vmatpush1.msra.mxu0 0.0
        %339 = vmatprep.subr.mxu0 0.0
        %340 = vmatpush1.msra.mxu0 0.0
        %341 = vmatprep.subr.mxu0 0.0
        %342 = vmatpush1.msra.mxu0 0.0
        %343 = vmatprep.subr.mxu0 0.0
        %344 = vmatpush1.msra.mxu0 0.0
        %345 = vmatprep.subr.mxu0 0.0
        %346 = vmatpush1.msra.mxu0 0.0
        %347 = vmatprep.subr.mxu0 0.0
        %348 = vmatpush1.msra.mxu0 0.0
        %349 = vmatprep.subr.mxu0 0.0
        %350 = vmatpush1.msra.mxu0 0.0
        %351 = vmatprep.subr.mxu0 0.0
        %352 = vmatpush1.msra.mxu0 0.0
        %353 = vmatprep.subr.mxu0 0.0
        %354 = vmatpush1.msra.mxu0 0.0
        %355 = vmatprep.subr.mxu0 0.0
        %356 = vmatpush1.msra.mxu0 0.0
        %357 = vmatprep.subr.mxu0 0.0
        %358 = vmatpush1.msra.mxu0 0.0
        %359 = vmatprep.subr.mxu0 0.0
        %360 = vmatpush1.msra.mxu0 0.0
        %361 = vmatprep.subr.mxu0 0.0
        %362 = vmatpush1.msra.mxu0 0.0
        %363 = vmatprep.subr.mxu0 0.0
        %364 = vmatpush1.msra.mxu0 0.0
        %365 = vmatprep.subr.mxu0 0.0
        %366 = vmatpush1.msra.mxu0 0.0
        %367 = vmatprep.subr.mxu0 0.0
        %368 = vmatpush1.msra.mxu0 0.0
        %369 = vmatprep.subr.mxu0 0.0
        %370 = vmatpush1.msra.mxu0 0.0
        %371 = vmatprep.subr.mxu0 0.0
        %372 = vmatpush1.msra.mxu0 0.0
        %373 = vmatprep.subr.mxu0 0.0
        %374 = vmatpush1.msra.mxu0 0.0
        %375 = vmatprep.subr.mxu0 0.0
        %376 = vmatpush1.msra.mxu0 0.0
        %377 = vmatprep.subr.mxu0 0.0
        %378 = vmatpush1.msra.mxu0 0.0
        %379 = vmatprep.subr.mxu0 0.0
        %380 = vmatpush1.msra.mxu0 0.0
        %381 = vmatprep.subr.mxu0 0.0
        %382 = vmatpush1.msra.mxu0 0.0
        %383 = vmatprep.subr.mxu0 0.0
        %384 = vmatpush1.msra.mxu0 0.0
        %385 = vmatprep.subr.mxu0 0.0
        %386 = vmatpush1.msra.mxu0 0.0
        %387 = vmatprep.subr.mxu0 0.0
        %388 = vmatpush1.msra.mxu0 0.0
        %389 = vmatprep.mubr.f32.mxu0 0.0
        %390 = vmatmul.mubr.f32.gmra.mrb[0].mxu0 %v323
        %v391 = vpop.f32.mrb[0].mxu0
        %v392 = vadd.f32 0.0, %v391
        %v393 = vpop.f32.mrb[0].mxu0
        %394 = vdwg.mxu0
        %v395 = vadd.f32 %v320, %v392
        %v396 = vxor.u32 %v395, 2147483648
        %v397 = vmul.f32 %v396, 1.442695
        %v398 = vpow.pop %v397
        %v399 = vadd.f32 %v398, 1.0
        %v400 = vrcp.pop %v399
        %v401 = vmul.f32 1.0, %v400
        %v402 = vtanh.pop %v395
        %404 = vrot.lane.b32.xlu0 %v317, 32
        %v405 = vpop.permute.xlu0 %404
        %v407 = vmul.f32 %v401, %v405
        %409 = vrot.lane.b32.xlu0 %v402, 64
        %v410 = vpop.permute.xlu0 %409
        %v412 = vmul.f32 %v401, %v410
        %414 = vrot.lane.b32.xlu0 %v412, 32
        %v415 = vpop.permute.xlu0 %414
        %v417 = vadd.f32 %v407, %v415
        %v418 = vtanh.pop %v417
        %420 = vrot.lane.b32.xlu0 %v418, 64
        %v421 = vpop.permute.xlu0 %420
        %v423 = vmul.f32 %v401, %v421
        %v424 = vstv %s313
        %vm425 = vcmp.gt.s32.totalorder %v312, %v424
        %v426 = vsel %vm425, 1, 0
        %427 = vset.pattern.permute.xlu0 0
        %428 = vperm.xlu0 %427, %v426
        %v429 = vpop.permute.xlu0 %428
        %vm430 = vcmp.eq.s32.totalorder %v429, 1
        %431 = vrot.lane.b32.xlu0 %v316, 96
        %v432 = vpop.permute.xlu0 %431
        %v434 = vsel %vm430, %v423, %v432
        %v435 = vsel %vm430, %v417, %v405
        %s436 = scalar_lea.vmem %s288, 32
        %v437 = vld [vmem:[%s436] sm:$0xff]
        %s438 = sadd.s32 %s315, 4
        %v440 = vsel %vm321, %v318, 0
        %442 = vmatprep.subr.mxu0 0.0
        %443 = vmatpush1.msra.mxu0 %v308
        %444 = vmatprep.subr.mxu0 0.0
        %445 = vmatpush1.msra.mxu0 %v309
        %446 = vmatprep.subr.mxu0 0.0
        %447 = vmatpush1.msra.mxu0 %v310
        %448 = vmatprep.subr.mxu0 0.0
        %449 = vmatpush1.msra.mxu0 %v311
        %450 = vmatprep.subr.mxu0 0.0
        %451 = vmatpush1.msra.mxu0 0.0
        %452 = vmatprep.subr.mxu0 0.0
        %453 = vmatpush1.msra.mxu0 0.0
        %454 = vmatprep.subr.mxu0 0.0
        %455 = vmatpush1.msra.mxu0 0.0
        %456 = vmatprep.subr.mxu0 0.0
        %457 = vmatpush1.msra.mxu0 0.0
        %458 = vmatprep.subr.mxu0 0.0
        %459 = vmatpush1.msra.mxu0 0.0
        %460 = vmatprep.subr.mxu0 0.0
        %461 = vmatpush1.msra.mxu0 0.0
        %462 = vmatprep.subr.mxu0 0.0
        %463 = vmatpush1.msra.mxu0 0.0
        %464 = vmatprep.subr.mxu0 0.0
        %465 = vmatpush1.msra.mxu0 0.0
        %466 = vmatprep.subr.mxu0 0.0
        %467 = vmatpush1.msra.mxu0 0.0
        %468 = vmatprep.subr.mxu0 0.0
        %469 = vmatpush1.msra.mxu0 0.0
        %470 = vmatprep.subr.mxu0 0.0
        %471 = vmatpush1.msra.mxu0 0.0
        %472 = vmatprep.subr.mxu0 0.0
        %473 = vmatpush1.msra.mxu0 0.0
        %474 = vmatprep.subr.mxu0 0.0
        %475 = vmatpush1.msra.mxu0 0.0
        %476 = vmatprep.subr.mxu0 0.0
        %477 = vmatpush1.msra.mxu0 0.0
        %478 = vmatprep.subr.mxu0 0.0
        %479 = vmatpush1.msra.mxu0 0.0
        %480 = vmatprep.subr.mxu0 0.0
        %481 = vmatpush1.msra.mxu0 0.0
        %482 = vmatprep.subr.mxu0 0.0
        %483 = vmatpush1.msra.mxu0 0.0
        %484 = vmatprep.subr.mxu0 0.0
        %485 = vmatpush1.msra.mxu0 0.0
        %486 = vmatprep.subr.mxu0 0.0
        %487 = vmatpush1.msra.mxu0 0.0
        %488 = vmatprep.subr.mxu0 0.0
        %489 = vmatpush1.msra.mxu0 0.0
        %490 = vmatprep.subr.mxu0 0.0
        %491 = vmatpush1.msra.mxu0 0.0
        %492 = vmatprep.subr.mxu0 0.0
        %493 = vmatpush1.msra.mxu0 0.0
        %494 = vmatprep.subr.mxu0 0.0
        %495 = vmatpush1.msra.mxu0 0.0
        %496 = vmatprep.subr.mxu0 0.0
        %497 = vmatpush1.msra.mxu0 0.0
        %498 = vmatprep.subr.mxu0 0.0
        %499 = vmatpush1.msra.mxu0 0.0
        %500 = vmatprep.subr.mxu0 0.0
        %501 = vmatpush1.msra.mxu0 0.0
        %502 = vmatprep.subr.mxu0 0.0
        %503 = vmatpush1.msra.mxu0 0.0
        %504 = vmatprep.subr.mxu0 0.0
        %505 = vmatpush1.msra.mxu0 0.0
        %506 = vmatprep.mubr.f32.mxu0 0.0
        %507 = vmatmul.mubr.f32.gmra.mrb[0].mxu0 %v440
        %v508 = vpop.f32.mrb[0].mxu0
        %v509 = vadd.f32 0.0, %v508
        %v510 = vpop.f32.mrb[0].mxu0
        %511 = vdwg.mxu0
        %v512 = vadd.f32 %v437, %v509
        %v513 = vxor.u32 %v512, 2147483648
        %v514 = vmul.f32 %v513, 1.442695
        %v515 = vpow.pop %v514
        %v516 = vadd.f32 %v515, 1.0
        %v517 = vrcp.pop %v516
        %v518 = vmul.f32 1.0, %v517
        %v519 = vtanh.pop %v512
        %521 = vrot.lane.b32.xlu0 %v319, 32
        %v522 = vpop.permute.xlu0 %521
        %v524 = vmul.f32 %v518, %v522
        %526 = vrot.lane.b32.xlu0 %v519, 64
        %v527 = vpop.permute.xlu0 %526
        %v529 = vmul.f32 %v518, %v527
        %531 = vrot.lane.b32.xlu0 %v529, 32
        %v532 = vpop.permute.xlu0 %531
        %v534 = vadd.f32 %v524, %v532
        %v535 = vtanh.pop %v534
        %537 = vrot.lane.b32.xlu0 %v535, 64
        %v538 = vpop.permute.xlu0 %537
        %v540 = vmul.f32 %v518, %v538
        %v541 = vstv %s438
        %vm542 = vcmp.gt.s32.totalorder %v312, %v541
        %v543 = vsel %vm542, 1, 0
        %544 = vset.pattern.permute.xlu0 0
        %545 = vperm.xlu0 %544, %v543
        %v546 = vpop.permute.xlu0 %545
        %vm547 = vcmp.eq.s32.totalorder %v546, 1
        %548 = vrot.lane.b32.xlu0 %v318, 96
        %v549 = vpop.permute.xlu0 %548
        %v551 = vsel %vm547, %v540, %v549
        %v552 = vsel %vm547, %v534, %v522
        %554 = vrot.lane.b32.xlu0 %v434, 32
        %v555 = vpop.permute.xlu0 %554
        %557 = vst.msk [vmem:[%s267] sm:$0xff] %vm321, %v555
        %559 = vrot.lane.b32.xlu0 %v551, 32
        %v560 = vpop.permute.xlu0 %559
        %s562 = scalar_lea.vmem %s274, 32 [#allocation8]
        %563 = vst.msk [vmem:[%s562] sm:$0xff] %vm321, %v560
        %s564 = scalar_lea.vmem %s281, 8
        %v565 = vld [vmem:[%s564] sm:$0xff]
        %s566 = sadd.s32 %s313, 1
        %v567 = vsel %vm321, %v555, 0
        %569 = vmatprep.subr.mxu0 0.0
        %570 = vmatpush1.msra.mxu0 %v303
        %571 = vmatprep.subr.mxu0 0.0
        %572 = vmatpush1.msra.mxu0 %v304
        %573 = vmatprep.subr.mxu0 0.0
        %574 = vmatpush1.msra.mxu0 %v305
        %575 = vmatprep.subr.mxu0 0.0
        %576 = vmatpush1.msra.mxu0 %v306
        %577 = vmatprep.subr.mxu0 0.0
        %578 = vmatpush1.msra.mxu0 0.0
        %579 = vmatprep.subr.mxu0 0.0
        %580 = vmatpush1.msra.mxu0 0.0
        %581 = vmatprep.subr.mxu0 0.0
        %582 = vmatpush1.msra.mxu0 0.0
        %583 = vmatprep.subr.mxu0 0.0
        %584 = vmatpush1.msra.mxu0 0.0
        %585 = vmatprep.subr.mxu0 0.0
        %586 = vmatpush1.msra.mxu0 0.0
        %587 = vmatprep.subr.mxu0 0.0
        %588 = vmatpush1.msra.mxu0 0.0
        %589 = vmatprep.subr.mxu0 0.0
        %590 = vmatpush1.msra.mxu0 0.0
        %591 = vmatprep.subr.mxu0 0.0
        %592 = vmatpush1.msra.mxu0 0.0
        %593 = vmatprep.subr.mxu0 0.0
        %594 = vmatpush1.msra.mxu0 0.0
        %595 = vmatprep.subr.mxu0 0.0
        %596 = vmatpush1.msra.mxu0 0.0
        %597 = vmatprep.subr.mxu0 0.0
        %598 = vmatpush1.msra.mxu0 0.0
        %599 = vmatprep.subr.mxu0 0.0
        %600 = vmatpush1.msra.mxu0 0.0
        %601 = vmatprep.subr.mxu0 0.0
        %602 = vmatpush1.msra.mxu0 0.0
        %603 = vmatprep.subr.mxu0 0.0
        %604 = vmatpush1.msra.mxu0 0.0
        %605 = vmatprep.subr.mxu0 0.0
        %606 = vmatpush1.msra.mxu0 0.0
        %607 = vmatprep.subr.mxu0 0.0
        %608 = vmatpush1.msra.mxu0 0.0
        %609 = vmatprep.subr.mxu0 0.0
        %610 = vmatpush1.msra.mxu0 0.0
        %611 = vmatprep.subr.mxu0 0.0
        %612 = vmatpush1.msra.mxu0 0.0
        %613 = vmatprep.subr.mxu0 0.0
        %614 = vmatpush1.msra.mxu0 0.0
        %615 = vmatprep.subr.mxu0 0.0
        %616 = vmatpush1.msra.mxu0 0.0
        %617 = vmatprep.subr.mxu0 0.0
        %618 = vmatpush1.msra.mxu0 0.0
        %619 = vmatprep.subr.mxu0 0.0
        %620 = vmatpush1.msra.mxu0 0.0
        %621 = vmatprep.subr.mxu0 0.0
        %622 = vmatpush1.msra.mxu0 0.0
        %623 = vmatprep.subr.mxu0 0.0
        %624 = vmatpush1.msra.mxu0 0.0
        %625 = vmatprep.subr.mxu0 0.0
        %626 = vmatpush1.msra.mxu0 0.0
        %627 = vmatprep.subr.mxu0 0.0
        %628 = vmatpush1.msra.mxu0 0.0
        %629 = vmatprep.subr.mxu0 0.0
        %630 = vmatpush1.msra.mxu0 0.0
        %631 = vmatprep.subr.mxu0 0.0
        %632 = vmatpush1.msra.mxu0 0.0
        %633 = vmatprep.mubr.f32.mxu0 0.0
        %634 = vmatmul.mubr.f32.gmra.mrb[0].mxu0 %v567
        %v635 = vpop.f32.mrb[0].mxu0
        %v636 = vadd.f32 0.0, %v635
        %v637 = vpop.f32.mrb[0].mxu0
        %638 = vdwg.mxu0
        %v639 = vadd.f32 %v565, %v636
        %v640 = vxor.u32 %v639, 2147483648
        %v641 = vmul.f32 %v640, 1.442695
        %v642 = vpow.pop %v641
        %v643 = vadd.f32 %v642, 1.0
        %v644 = vrcp.pop %v643
        %v645 = vmul.f32 1.0, %v644
        %v646 = vtanh.pop %v639
        %v647 = vmul.f32 %v645, %v435
        %649 = vrot.lane.b32.xlu0 %v646, 64
        %v650 = vpop.permute.xlu0 %649
        %v652 = vmul.f32 %v645, %v650
        %654 = vrot.lane.b32.xlu0 %v652, 32
        %v655 = vpop.permute.xlu0 %654
        %v657 = vadd.f32 %v647, %v655
        %v658 = vtanh.pop %v657
        %660 = vrot.lane.b32.xlu0 %v658, 64
        %v661 = vpop.permute.xlu0 %660
        %v663 = vmul.f32 %v645, %v661
        %v664 = vstv %s566
        %vm665 = vcmp.gt.s32.totalorder %v312, %v664
        %v666 = vsel %vm665, 1, 0
        %667 = vset.pattern.permute.xlu0 0
        %668 = vperm.xlu0 %667, %v666
        %v669 = vpop.permute.xlu0 %668
        %vm670 = vcmp.eq.s32.totalorder %v669, 1
        %v671 = vsel %vm670, %v663, %v434
        %v672 = vsel %vm670, %v657, %v435
        %s673 = scalar_lea.vmem %s288, 24
        %v674 = vld [vmem:[%s673] sm:$0xff]
        %s675 = sadd.s32 %s315, 3
        %v676 = vsel %vm321, %v560, 0
        %678 = vmatprep.subr.mxu0 0.0
        %679 = vmatpush1.msra.mxu0 %v308
        %680 = vmatprep.subr.mxu0 0.0
        %681 = vmatpush1.msra.mxu0 %v309
        %682 = vmatprep.subr.mxu0 0.0
        %683 = vmatpush1.msra.mxu0 %v310
        %684 = vmatprep.subr.mxu0 0.0
        %685 = vmatpush1.msra.mxu0 %v311
        %686 = vmatprep.subr.mxu0 0.0
        %687 = vmatpush1.msra.mxu0 0.0
        %688 = vmatprep.subr.mxu0 0.0
        %689 = vmatpush1.msra.mxu0 0.0
        %690 = vmatprep.subr.mxu0 0.0
        %691 = vmatpush1.msra.mxu0 0.0
        %692 = vmatprep.subr.mxu0 0.0
        %693 = vmatpush1.msra.mxu0 0.0
        %694 = vmatprep.subr.mxu0 0.0
        %695 = vmatpush1.msra.mxu0 0.0
        %696 = vmatprep.subr.mxu0 0.0
        %697 = vmatpush1.msra.mxu0 0.0
        %698 = vmatprep.subr.mxu0 0.0
        %699 = vmatpush1.msra.mxu0 0.0
        %700 = vmatprep.subr.mxu0 0.0
        %701 = vmatpush1.msra.mxu0 0.0
        %702 = vmatprep.subr.mxu0 0.0
        %703 = vmatpush1.msra.mxu0 0.0
        %704 = vmatprep.subr.mxu0 0.0
        %705 = vmatpush1.msra.mxu0 0.0
        %706 = vmatprep.subr.mxu0 0.0
        %707 = vmatpush1.msra.mxu0 0.0
        %708 = vmatprep.subr.mxu0 0.0
        %709 = vmatpush1.msra.mxu0 0.0
        %710 = vmatprep.subr.mxu0 0.0
        %711 = vmatpush1.msra.mxu0 0.0
        %712 = vmatprep.subr.mxu0 0.0
        %713 = vmatpush1.msra.mxu0 0.0
        %714 = vmatprep.subr.mxu0 0.0
        %715 = vmatpush1.msra.mxu0 0.0
        %716 = vmatprep.subr.mxu0 0.0
        %717 = vmatpush1.msra.mxu0 0.0
        %718 = vmatprep.subr.mxu0 0.0
        %719 = vmatpush1.msra.mxu0 0.0
        %720 = vmatprep.subr.mxu0 0.0
        %721 = vmatpush1.msra.mxu0 0.0
        %722 = vmatprep.subr.mxu0 0.0
        %723 = vmatpush1.msra.mxu0 0.0
        %724 = vmatprep.subr.mxu0 0.0
        %725 = vmatpush1.msra.mxu0 0.0
        %726 = vmatprep.subr.mxu0 0.0
        %727 = vmatpush1.msra.mxu0 0.0
        %728 = vmatprep.subr.mxu0 0.0
        %729 = vmatpush1.msra.mxu0 0.0
        %730 = vmatprep.subr.mxu0 0.0
        %731 = vmatpush1.msra.mxu0 0.0
        %732 = vmatprep.subr.mxu0 0.0
        %733 = vmatpush1.msra.mxu0 0.0
        %734 = vmatprep.subr.mxu0 0.0
        %735 = vmatpush1.msra.mxu0 0.0
        %736 = vmatprep.subr.mxu0 0.0
        %737 = vmatpush1.msra.mxu0 0.0
        %738 = vmatprep.subr.mxu0 0.0
        %739 = vmatpush1.msra.mxu0 0.0
        %740 = vmatprep.subr.mxu0 0.0
        %741 = vmatpush1.msra.mxu0 0.0
        %742 = vmatprep.mubr.f32.mxu0 0.0
        %743 = vmatmul.mubr.f32.gmra.mrb[0].mxu0 %v676
        %v744 = vpop.f32.mrb[0].mxu0
        %v745 = vadd.f32 0.0, %v744
        %v746 = vpop.f32.mrb[0].mxu0
        %747 = vdwg.mxu0
        %v748 = vadd.f32 %v674, %v745
        %v749 = vxor.u32 %v748, 2147483648
        %v750 = vmul.f32 %v749, 1.442695
        %v751 = vpow.pop %v750
        %v752 = vadd.f32 %v751, 1.0
        %v753 = vrcp.pop %v752
        %v754 = vmul.f32 1.0, %v753
        %v755 = vtanh.pop %v748
        %v756 = vmul.f32 %v754, %v552
        %758 = vrot.lane.b32.xlu0 %v755, 64
        %v759 = vpop.permute.xlu0 %758
        %v761 = vmul.f32 %v754, %v759
        %763 = vrot.lane.b32.xlu0 %v761, 32
        %v764 = vpop.permute.xlu0 %763
        %v766 = vadd.f32 %v756, %v764
        %v767 = vtanh.pop %v766
        %769 = vrot.lane.b32.xlu0 %v767, 64
        %v770 = vpop.permute.xlu0 %769
        %v772 = vmul.f32 %v754, %v770
        %v773 = vstv %s675
        %vm774 = vcmp.gt.s32.totalorder %v312, %v773
        %v775 = vsel %vm774, 1, 0
        %776 = vset.pattern.permute.xlu0 0
        %777 = vperm.xlu0 %776, %v775
        %v778 = vpop.permute.xlu0 %777
        %vm779 = vcmp.eq.s32.totalorder %v778, 1
        %v780 = vsel %vm779, %v772, %v551
        %v781 = vsel %vm779, %v766, %v552
        %783 = vrot.lane.b32.xlu0 %v671, 32
        %v784 = vpop.permute.xlu0 %783
        %s786 = scalar_lea.vmem %s267, 8 [#allocation6]
        %787 = vst.msk [vmem:[%s786] sm:$0xff] %vm321, %v784
        %789 = vrot.lane.b32.xlu0 %v780, 32
        %v790 = vpop.permute.xlu0 %789
        %s792 = scalar_lea.vmem %s274, 24 [#allocation8]
        %793 = vst.msk [vmem:[%s792] sm:$0xff] %vm321, %v790
        %s794 = scalar_lea.vmem %s281, 16
        %v795 = vld [vmem:[%s794] sm:$0xff]
        %s796 = sadd.s32 %s313, 2
        %v797 = vsel %vm321, %v784, 0
        %799 = vmatprep.subr.mxu0 0.0
        %800 = vmatpush1.msra.mxu0 %v303
        %801 = vmatprep.subr.mxu0 0.0
        %802 = vmatpush1.msra.mxu0 %v304
        %803 = vmatprep.subr.mxu0 0.0
        %804 = vmatpush1.msra.mxu0 %v305
        %805 = vmatprep.subr.mxu0 0.0
        %806 = vmatpush1.msra.mxu0 %v306
        %807 = vmatprep.subr.mxu0 0.0
        %808 = vmatpush1.msra.mxu0 0.0
        %809 = vmatprep.subr.mxu0 0.0
        %810 = vmatpush1.msra.mxu0 0.0
        %811 = vmatprep.subr.mxu0 0.0
        %812 = vmatpush1.msra.mxu0 0.0
        %813 = vmatprep.subr.mxu0 0.0
        %814 = vmatpush1.msra.mxu0 0.0
        %815 = vmatprep.subr.mxu0 0.0
        %816 = vmatpush1.msra.mxu0 0.0
        %817 = vmatprep.subr.mxu0 0.0
        %818 = vmatpush1.msra.mxu0 0.0
        %819 = vmatprep.subr.mxu0 0.0
        %820 = vmatpush1.msra.mxu0 0.0
        %821 = vmatprep.subr.mxu0 0.0
        %822 = vmatpush1.msra.mxu0 0.0
        %823 = vmatprep.subr.mxu0 0.0
        %824 = vmatpush1.msra.mxu0 0.0
        %825 = vmatprep.subr.mxu0 0.0
        %826 = vmatpush1.msra.mxu0 0.0
        %827 = vmatprep.subr.mxu0 0.0
        %828 = vmatpush1.msra.mxu0 0.0
        %829 = vmatprep.subr.mxu0 0.0
        %830 = vmatpush1.msra.mxu0 0.0
        %831 = vmatprep.subr.mxu0 0.0
        %832 = vmatpush1.msra.mxu0 0.0
        %833 = vmatprep.subr.mxu0 0.0
        %834 = vmatpush1.msra.mxu0 0.0
        %835 = vmatprep.subr.mxu0 0.0
        %836 = vmatpush1.msra.mxu0 0.0
        %837 = vmatprep.subr.mxu0 0.0
        %838 = vmatpush1.msra.mxu0 0.0
        %839 = vmatprep.subr.mxu0 0.0
        %840 = vmatpush1.msra.mxu0 0.0
        %841 = vmatprep.subr.mxu0 0.0
        %842 = vmatpush1.msra.mxu0 0.0
        %843 = vmatprep.subr.mxu0 0.0
        %844 = vmatpush1.msra.mxu0 0.0
        %845 = vmatprep.subr.mxu0 0.0
        %846 = vmatpush1.msra.mxu0 0.0
        %847 = vmatprep.subr.mxu0 0.0
        %848 = vmatpush1.msra.mxu0 0.0
        %849 = vmatprep.subr.mxu0 0.0
        %850 = vmatpush1.msra.mxu0 0.0
        %851 = vmatprep.subr.mxu0 0.0
        %852 = vmatpush1.msra.mxu0 0.0
        %853 = vmatprep.subr.mxu0 0.0
        %854 = vmatpush1.msra.mxu0 0.0
        %855 = vmatprep.subr.mxu0 0.0
        %856 = vmatpush1.msra.mxu0 0.0
        %857 = vmatprep.subr.mxu0 0.0
        %858 = vmatpush1.msra.mxu0 0.0
        %859 = vmatprep.subr.mxu0 0.0
        %860 = vmatpush1.msra.mxu0 0.0
        %861 = vmatprep.subr.mxu0 0.0
        %862 = vmatpush1.msra.mxu0 0.0
        %863 = vmatprep.mubr.f32.mxu0 0.0
        %864 = vmatmul.mubr.f32.gmra.mrb[0].mxu0 %v797
        %v865 = vpop.f32.mrb[0].mxu0
        %v866 = vadd.f32 0.0, %v865
        %v867 = vpop.f32.mrb[0].mxu0
        %868 = vdwg.mxu0
        %v869 = vadd.f32 %v795, %v866
        %v870 = vxor.u32 %v869, 2147483648
        %v871 = vmul.f32 %v870, 1.442695
        %v872 = vpow.pop %v871
        %v873 = vadd.f32 %v872, 1.0
        %v874 = vrcp.pop %v873
        %v875 = vmul.f32 1.0, %v874
        %v876 = vtanh.pop %v869
        %v877 = vmul.f32 %v875, %v672
        %879 = vrot.lane.b32.xlu0 %v876, 64
        %v880 = vpop.permute.xlu0 %879
        %v882 = vmul.f32 %v875, %v880
        %884 = vrot.lane.b32.xlu0 %v882, 32
        %v885 = vpop.permute.xlu0 %884
        %v887 = vadd.f32 %v877, %v885
        %v888 = vtanh.pop %v887
        %890 = vrot.lane.b32.xlu0 %v888, 64
        %v891 = vpop.permute.xlu0 %890
        %v893 = vmul.f32 %v875, %v891
        %v894 = vstv %s796
        %vm895 = vcmp.gt.s32.totalorder %v312, %v894
        %v896 = vsel %vm895, 1, 0
        %897 = vset.pattern.permute.xlu0 0
        %898 = vperm.xlu0 %897, %v896
        %v899 = vpop.permute.xlu0 %898
        %vm900 = vcmp.eq.s32.totalorder %v899, 1
        %v901 = vsel %vm900, %v893, %v671
        %v902 = vsel %vm900, %v887, %v672
        %s903 = scalar_lea.vmem %s288, 16
        %v904 = vld [vmem:[%s903] sm:$0xff]
        %s905 = sadd.s32 %s315, 2
        %v906 = vsel %vm321, %v790, 0
        %908 = vmatprep.subr.mxu0 0.0
        %909 = vmatpush1.msra.mxu0 %v308
        %910 = vmatprep.subr.mxu0 0.0
        %911 = vmatpush1.msra.mxu0 %v309
        %912 = vmatprep.subr.mxu0 0.0
        %913 = vmatpush1.msra.mxu0 %v310
        %914 = vmatprep.subr.mxu0 0.0
        %915 = vmatpush1.msra.mxu0 %v311
        %916 = vmatprep.subr.mxu0 0.0
        %917 = vmatpush1.msra.mxu0 0.0
        %918 = vmatprep.subr.mxu0 0.0
        %919 = vmatpush1.msra.mxu0 0.0
        %920 = vmatprep.subr.mxu0 0.0
        %921 = vmatpush1.msra.mxu0 0.0
        %922 = vmatprep.subr.mxu0 0.0
        %923 = vmatpush1.msra.mxu0 0.0
        %924 = vmatprep.subr.mxu0 0.0
        %925 = vmatpush1.msra.mxu0 0.0
        %926 = vmatprep.subr.mxu0 0.0
        %927 = vmatpush1.msra.mxu0 0.0
        %928 = vmatprep.subr.mxu0 0.0
        %929 = vmatpush1.msra.mxu0 0.0
        %930 = vmatprep.subr.mxu0 0.0
        %931 = vmatpush1.msra.mxu0 0.0
        %932 = vmatprep.subr.mxu0 0.0
        %933 = vmatpush1.msra.mxu0 0.0
        %934 = vmatprep.subr.mxu0 0.0
        %935 = vmatpush1.msra.mxu0 0.0
        %936 = vmatprep.subr.mxu0 0.0
        %937 = vmatpush1.msra.mxu0 0.0
        %938 = vmatprep.subr.mxu0 0.0
        %939 = vmatpush1.msra.mxu0 0.0
        %940 = vmatprep.subr.mxu0 0.0
        %941 = vmatpush1.msra.mxu0 0.0
        %942 = vmatprep.subr.mxu0 0.0
        %943 = vmatpush1.msra.mxu0 0.0
        %944 = vmatprep.subr.mxu0 0.0
        %945 = vmatpush1.msra.mxu0 0.0
        %946 = vmatprep.subr.mxu0 0.0
        %947 = vmatpush1.msra.mxu0 0.0
        %948 = vmatprep.subr.mxu0 0.0
        %949 = vmatpush1.msra.mxu0 0.0
        %950 = vmatprep.subr.mxu0 0.0
        %951 = vmatpush1.msra.mxu0 0.0
        %952 = vmatprep.subr.mxu0 0.0
        %953 = vmatpush1.msra.mxu0 0.0
        %954 = vmatprep.subr.mxu0 0.0
        %955 = vmatpush1.msra.mxu0 0.0
        %956 = vmatprep.subr.mxu0 0.0
        %957 = vmatpush1.msra.mxu0 0.0
        %958 = vmatprep.subr.mxu0 0.0
        %959 = vmatpush1.msra.mxu0 0.0
        %960 = vmatprep.subr.mxu0 0.0
        %961 = vmatpush1.msra.mxu0 0.0
        %962 = vmatprep.subr.mxu0 0.0
        %963 = vmatpush1.msra.mxu0 0.0
        %964 = vmatprep.subr.mxu0 0.0
        %965 = vmatpush1.msra.mxu0 0.0
        %966 = vmatprep.subr.mxu0 0.0
        %967 = vmatpush1.msra.mxu0 0.0
        %968 = vmatprep.subr.mxu0 0.0
        %969 = vmatpush1.msra.mxu0 0.0
        %970 = vmatprep.subr.mxu0 0.0
        %971 = vmatpush1.msra.mxu0 0.0
        %972 = vmatprep.mubr.f32.mxu0 0.0
        %973 = vmatmul.mubr.f32.gmra.mrb[0].mxu0 %v906
        %v974 = vpop.f32.mrb[0].mxu0
        %v975 = vadd.f32 0.0, %v974
        %v976 = vpop.f32.mrb[0].mxu0
        %977 = vdwg.mxu0
        %v978 = vadd.f32 %v904, %v975
        %v979 = vxor.u32 %v978, 2147483648
        %v980 = vmul.f32 %v979, 1.442695
        %v981 = vpow.pop %v980
        %v982 = vadd.f32 %v981, 1.0
        %v983 = vrcp.pop %v982
        %v984 = vmul.f32 1.0, %v983
        %v985 = vtanh.pop %v978
        %v986 = vmul.f32 %v984, %v781
        %988 = vrot.lane.b32.xlu0 %v985, 64
        %v989 = vpop.permute.xlu0 %988
        %v991 = vmul.f32 %v984, %v989
        %993 = vrot.lane.b32.xlu0 %v991, 32
        %v994 = vpop.permute.xlu0 %993
        %v996 = vadd.f32 %v986, %v994
        %v997 = vtanh.pop %v996
        %999 = vrot.lane.b32.xlu0 %v997, 64
        %v1000 = vpop.permute.xlu0 %999
        %v1002 = vmul.f32 %v984, %v1000
        %v1003 = vstv %s905
        %vm1004 = vcmp.gt.s32.totalorder %v312, %v1003
        %v1005 = vsel %vm1004, 1, 0
        %1006 = vset.pattern.permute.xlu0 0
        %1007 = vperm.xlu0 %1006, %v1005
        %v1008 = vpop.permute.xlu0 %1007
        %vm1009 = vcmp.eq.s32.totalorder %v1008, 1
        %v1010 = vsel %vm1009, %v1002, %v780
        %v1011 = vsel %vm1009, %v996, %v781
        %1013 = vrot.lane.b32.xlu0 %v901, 32
        %v1014 = vpop.permute.xlu0 %1013
        %s1016 = scalar_lea.vmem %s267, 16 [#allocation6]
        %1017 = vst.msk [vmem:[%s1016] sm:$0xff] %vm321, %v1014
        %1019 = vrot.lane.b32.xlu0 %v1010, 32
        %v1020 = vpop.permute.xlu0 %1019
        %s1022 = scalar_lea.vmem %s274, 16 [#allocation8]
        %1023 = vst.msk [vmem:[%s1022] sm:$0xff] %vm321, %v1020
        %s1024 = scalar_lea.vmem %s281, 24
        %v1025 = vld [vmem:[%s1024] sm:$0xff]
        %s1026 = sadd.s32 %s313, 3
        %v1027 = vsel %vm321, %v1014, 0
        %1029 = vmatprep.subr.mxu0 0.0
        %1030 = vmatpush1.msra.mxu0 %v303
        %1031 = vmatprep.subr.mxu0 0.0
        %1032 = vmatpush1.msra.mxu0 %v304
        %1033 = vmatprep.subr.mxu0 0.0
        %1034 = vmatpush1.msra.mxu0 %v305
        %1035 = vmatprep.subr.mxu0 0.0
        %1036 = vmatpush1.msra.mxu0 %v306
        %1037 = vmatprep.subr.mxu0 0.0
        %1038 = vmatpush1.msra.mxu0 0.0
        %1039 = vmatprep.subr.mxu0 0.0
        %1040 = vmatpush1.msra.mxu0 0.0
        %1041 = vmatprep.subr.mxu0 0.0
        %1042 = vmatpush1.msra.mxu0 0.0
        %1043 = vmatprep.subr.mxu0 0.0
        %1044 = vmatpush1.msra.mxu0 0.0
        %1045 = vmatprep.subr.mxu0 0.0
        %1046 = vmatpush1.msra.mxu0 0.0
        %1047 = vmatprep.subr.mxu0 0.0
        %1048 = vmatpush1.msra.mxu0 0.0
        %1049 = vmatprep.subr.mxu0 0.0
        %1050 = vmatpush1.msra.mxu0 0.0
        %1051 = vmatprep.subr.mxu0 0.0
        %1052 = vmatpush1.msra.mxu0 0.0
        %1053 = vmatprep.subr.mxu0 0.0
        %1054 = vmatpush1.msra.mxu0 0.0
        %1055 = vmatprep.subr.mxu0 0.0
        %1056 = vmatpush1.msra.mxu0 0.0
        %1057 = vmatprep.subr.mxu0 0.0
        %1058 = vmatpush1.msra.mxu0 0.0
        %1059 = vmatprep.subr.mxu0 0.0
        %1060 = vmatpush1.msra.mxu0 0.0
        %1061 = vmatprep.subr.mxu0 0.0
        %1062 = vmatpush1.msra.mxu0 0.0
        %1063 = vmatprep.subr.mxu0 0.0
        %1064 = vmatpush1.msra.mxu0 0.0
        %1065 = vmatprep.subr.mxu0 0.0
        %1066 = vmatpush1.msra.mxu0 0.0
        %1067 = vmatprep.subr.mxu0 0.0
        %1068 = vmatpush1.msra.mxu0 0.0
        %1069 = vmatprep.subr.mxu0 0.0
        %1070 = vmatpush1.msra.mxu0 0.0
        %1071 = vmatprep.subr.mxu0 0.0
        %1072 = vmatpush1.msra.mxu0 0.0
        %1073 = vmatprep.subr.mxu0 0.0
        %1074 = vmatpush1.msra.mxu0 0.0
        %1075 = vmatprep.subr.mxu0 0.0
        %1076 = vmatpush1.msra.mxu0 0.0
        %1077 = vmatprep.subr.mxu0 0.0
        %1078 = vmatpush1.msra.mxu0 0.0
        %1079 = vmatprep.subr.mxu0 0.0
        %1080 = vmatpush1.msra.mxu0 0.0
        %1081 = vmatprep.subr.mxu0 0.0
        %1082 = vmatpush1.msra.mxu0 0.0
        %1083 = vmatprep.subr.mxu0 0.0
        %1084 = vmatpush1.msra.mxu0 0.0
        %1085 = vmatprep.subr.mxu0 0.0
        %1086 = vmatpush1.msra.mxu0 0.0
        %1087 = vmatprep.subr.mxu0 0.0
        %1088 = vmatpush1.msra.mxu0 0.0
        %1089 = vmatprep.subr.mxu0 0.0
        %1090 = vmatpush1.msra.mxu0 0.0
        %1091 = vmatprep.subr.mxu0 0.0
        %1092 = vmatpush1.msra.mxu0 0.0
        %1093 = vmatprep.mubr.f32.mxu0 0.0
        %1094 = vmatmul.mubr.f32.gmra.mrb[0].mxu0 %v1027
        %v1095 = vpop.f32.mrb[0].mxu0
        %v1096 = vadd.f32 0.0, %v1095
        %v1097 = vpop.f32.mrb[0].mxu0
        %1098 = vdwg.mxu0
        %v1099 = vadd.f32 %v1025, %v1096
        %v1100 = vxor.u32 %v1099, 2147483648
        %v1101 = vmul.f32 %v1100, 1.442695
        %v1102 = vpow.pop %v1101
        %v1103 = vadd.f32 %v1102, 1.0
        %v1104 = vrcp.pop %v1103
        %v1105 = vmul.f32 1.0, %v1104
        %v1106 = vtanh.pop %v1099
        %v1107 = vmul.f32 %v1105, %v902
        %1109 = vrot.lane.b32.xlu0 %v1106, 64
        %v1110 = vpop.permute.xlu0 %1109
        %v1112 = vmul.f32 %v1105, %v1110
        %1114 = vrot.lane.b32.xlu0 %v1112, 32
        %v1115 = vpop.permute.xlu0 %1114
        %v1117 = vadd.f32 %v1107, %v1115
        %v1118 = vtanh.pop %v1117
        %1120 = vrot.lane.b32.xlu0 %v1118, 64
        %v1121 = vpop.permute.xlu0 %1120
        %v1123 = vmul.f32 %v1105, %v1121
        %v1124 = vstv %s1026
        %vm1125 = vcmp.gt.s32.totalorder %v312, %v1124
        %v1126 = vsel %vm1125, 1, 0
        %1127 = vset.pattern.permute.xlu0 0
        %1128 = vperm.xlu0 %1127, %v1126
        %v1129 = vpop.permute.xlu0 %1128
        %vm1130 = vcmp.eq.s32.totalorder %v1129, 1
        %v1131 = vsel %vm1130, %v1123, %v901
        %v1132 = vsel %vm1130, %v1117, %v902
        %s1133 = scalar_lea.vmem %s288, 8
        %v1134 = vld [vmem:[%s1133] sm:$0xff]
        %s1135 = sadd.s32 %s315, 1
        %v1136 = vsel %vm321, %v1020, 0
        %1138 = vmatprep.subr.mxu0 0.0
        %1139 = vmatpush1.msra.mxu0 %v308
        %1140 = vmatprep.subr.mxu0 0.0
        %1141 = vmatpush1.msra.mxu0 %v309
        %1142 = vmatprep.subr.mxu0 0.0
        %1143 = vmatpush1.msra.mxu0 %v310
        %1144 = vmatprep.subr.mxu0 0.0
        %1145 = vmatpush1.msra.mxu0 %v311
        %1146 = vmatprep.subr.mxu0 0.0
        %1147 = vmatpush1.msra.mxu0 0.0
        %1148 = vmatprep.subr.mxu0 0.0
        %1149 = vmatpush1.msra.mxu0 0.0
        %1150 = vmatprep.subr.mxu0 0.0
        %1151 = vmatpush1.msra.mxu0 0.0
        %1152 = vmatprep.subr.mxu0 0.0
        %1153 = vmatpush1.msra.mxu0 0.0
        %1154 = vmatprep.subr.mxu0 0.0
        %1155 = vmatpush1.msra.mxu0 0.0
        %1156 = vmatprep.subr.mxu0 0.0
        %1157 = vmatpush1.msra.mxu0 0.0
        %1158 = vmatprep.subr.mxu0 0.0
        %1159 = vmatpush1.msra.mxu0 0.0
        %1160 = vmatprep.subr.mxu0 0.0
        %1161 = vmatpush1.msra.mxu0 0.0
        %1162 = vmatprep.subr.mxu0 0.0
        %1163 = vmatpush1.msra.mxu0 0.0
        %1164 = vmatprep.subr.mxu0 0.0
        %1165 = vmatpush1.msra.mxu0 0.0
        %1166 = vmatprep.subr.mxu0 0.0
        %1167 = vmatpush1.msra.mxu0 0.0
        %1168 = vmatprep.subr.mxu0 0.0
        %1169 = vmatpush1.msra.mxu0 0.0
        %1170 = vmatprep.subr.mxu0 0.0
        %1171 = vmatpush1.msra.mxu0 0.0
        %1172 = vmatprep.subr.mxu0 0.0
        %1173 = vmatpush1.msra.mxu0 0.0
        %1174 = vmatprep.subr.mxu0 0.0
        %1175 = vmatpush1.msra.mxu0 0.0
        %1176 = vmatprep.subr.mxu0 0.0
        %1177 = vmatpush1.msra.mxu0 0.0
        %1178 = vmatprep.subr.mxu0 0.0
        %1179 = vmatpush1.msra.mxu0 0.0
        %1180 = vmatprep.subr.mxu0 0.0
        %1181 = vmatpush1.msra.mxu0 0.0
        %1182 = vmatprep.subr.mxu0 0.0
        %1183 = vmatpush1.msra.mxu0 0.0
        %1184 = vmatprep.subr.mxu0 0.0
        %1185 = vmatpush1.msra.mxu0 0.0
        %1186 = vmatprep.subr.mxu0 0.0
        %1187 = vmatpush1.msra.mxu0 0.0
        %1188 = vmatprep.subr.mxu0 0.0
        %1189 = vmatpush1.msra.mxu0 0.0
        %1190 = vmatprep.subr.mxu0 0.0
        %1191 = vmatpush1.msra.mxu0 0.0
        %1192 = vmatprep.subr.mxu0 0.0
        %1193 = vmatpush1.msra.mxu0 0.0
        %1194 = vmatprep.subr.mxu0 0.0
        %1195 = vmatpush1.msra.mxu0 0.0
        %1196 = vmatprep.subr.mxu0 0.0
        %1197 = vmatpush1.msra.mxu0 0.0
        %1198 = vmatprep.subr.mxu0 0.0
        %1199 = vmatpush1.msra.mxu0 0.0
        %1200 = vmatprep.subr.mxu0 0.0
        %1201 = vmatpush1.msra.mxu0 0.0
        %1202 = vmatprep.mubr.f32.mxu0 0.0
        %1203 = vmatmul.mubr.f32.gmra.mrb[0].mxu0 %v1136
        %v1204 = vpop.f32.mrb[0].mxu0
        %v1205 = vadd.f32 0.0, %v1204
        %v1206 = vpop.f32.mrb[0].mxu0
        %1207 = vdwg.mxu0
        %v1208 = vadd.f32 %v1134, %v1205
        %v1209 = vxor.u32 %v1208, 2147483648
        %v1210 = vmul.f32 %v1209, 1.442695
        %v1211 = vpow.pop %v1210
        %v1212 = vadd.f32 %v1211, 1.0
        %v1213 = vrcp.pop %v1212
        %v1214 = vmul.f32 1.0, %v1213
        %v1215 = vtanh.pop %v1208
        %v1216 = vmul.f32 %v1214, %v1011
        %1218 = vrot.lane.b32.xlu0 %v1215, 64
        %v1219 = vpop.permute.xlu0 %1218
        %v1221 = vmul.f32 %v1214, %v1219
        %1223 = vrot.lane.b32.xlu0 %v1221, 32
        %v1224 = vpop.permute.xlu0 %1223
        %v1226 = vadd.f32 %v1216, %v1224
        %v1227 = vtanh.pop %v1226
        %1229 = vrot.lane.b32.xlu0 %v1227, 64
        %v1230 = vpop.permute.xlu0 %1229
        %v1232 = vmul.f32 %v1214, %v1230
        %v1233 = vstv %s1135
        %vm1234 = vcmp.gt.s32.totalorder %v312, %v1233
        %v1235 = vsel %vm1234, 1, 0
        %1236 = vset.pattern.permute.xlu0 0
        %1237 = vperm.xlu0 %1236, %v1235
        %v1238 = vpop.permute.xlu0 %1237
        %vm1239 = vcmp.eq.s32.totalorder %v1238, 1
        %v1240 = vsel %vm1239, %v1232, %v1010
        %v1241 = vsel %vm1239, %v1226, %v1011
        %1243 = vrot.lane.b32.xlu0 %v1131, 32
        %v1244 = vpop.permute.xlu0 %1243
        %s1246 = scalar_lea.vmem %s267, 24 [#allocation6]
        %1247 = vst.msk [vmem:[%s1246] sm:$0xff] %vm321, %v1244
        %1249 = vrot.lane.b32.xlu0 %v1240, 32
        %v1250 = vpop.permute.xlu0 %1249
        %s1252 = scalar_lea.vmem %s274, 8 [#allocation8]
        %1253 = vst.msk [vmem:[%s1252] sm:$0xff] %vm321, %v1250
        %s1254 = scalar_lea.vmem %s281, 32
        %v1255 = vld [vmem:[%s1254] sm:$0xff]
        %s1256 = sadd.s32 %s313, 4
        %v1257 = vsel %vm321, %v1244, 0
        %1259 = vmatprep.subr.mxu0 0.0
        %1260 = vmatpush1.msra.mxu0 %v303
        %1261 = vmatprep.subr.mxu0 0.0
        %1262 = vmatpush1.msra.mxu0 %v304
        %1263 = vmatprep.subr.mxu0 0.0
        %1264 = vmatpush1.msra.mxu0 %v305
        %1265 = vmatprep.subr.mxu0 0.0
        %1266 = vmatpush1.msra.mxu0 %v306
        %1267 = vmatprep.subr.mxu0 0.0
        %1268 = vmatpush1.msra.mxu0 0.0
        %1269 = vmatprep.subr.mxu0 0.0
        %1270 = vmatpush1.msra.mxu0 0.0
        %1271 = vmatprep.subr.mxu0 0.0
        %1272 = vmatpush1.msra.mxu0 0.0
        %1273 = vmatprep.subr.mxu0 0.0
        %1274 = vmatpush1.msra.mxu0 0.0
        %1275 = vmatprep.subr.mxu0 0.0
        %1276 = vmatpush1.msra.mxu0 0.0
        %1277 = vmatprep.subr.mxu0 0.0
        %1278 = vmatpush1.msra.mxu0 0.0
        %1279 = vmatprep.subr.mxu0 0.0
        %1280 = vmatpush1.msra.mxu0 0.0
        %1281 = vmatprep.subr.mxu0 0.0
        %1282 = vmatpush1.msra.mxu0 0.0
        %1283 = vmatprep.subr.mxu0 0.0
        %1284 = vmatpush1.msra.mxu0 0.0
        %1285 = vmatprep.subr.mxu0 0.0
        %1286 = vmatpush1.msra.mxu0 0.0
        %1287 = vmatprep.subr.mxu0 0.0
        %1288 = vmatpush1.msra.mxu0 0.0
        %1289 = vmatprep.subr.mxu0 0.0
        %1290 = vmatpush1.msra.mxu0 0.0
        %1291 = vmatprep.subr.mxu0 0.0
        %1292 = vmatpush1.msra.mxu0 0.0
        %1293 = vmatprep.subr.mxu0 0.0
        %1294 = vmatpush1.msra.mxu0 0.0
        %1295 = vmatprep.subr.mxu0 0.0
        %1296 = vmatpush1.msra.mxu0 0.0
        %1297 = vmatprep.subr.mxu0 0.0
        %1298 = vmatpush1.msra.mxu0 0.0
        %1299 = vmatprep.subr.mxu0 0.0
        %1300 = vmatpush1.msra.mxu0 0.0
        %1301 = vmatprep.subr.mxu0 0.0
        %1302 = vmatpush1.msra.mxu0 0.0
        %1303 = vmatprep.subr.mxu0 0.0
        %1304 = vmatpush1.msra.mxu0 0.0
        %1305 = vmatprep.subr.mxu0 0.0
        %1306 = vmatpush1.msra.mxu0 0.0
        %1307 = vmatprep.subr.mxu0 0.0
        %1308 = vmatpush1.msra.mxu0 0.0
        %1309 = vmatprep.subr.mxu0 0.0
        %1310 = vmatpush1.msra.mxu0 0.0
        %1311 = vmatprep.subr.mxu0 0.0
        %1312 = vmatpush1.msra.mxu0 0.0
        %1313 = vmatprep.subr.mxu0 0.0
        %1314 = vmatpush1.msra.mxu0 0.0
        %1315 = vmatprep.subr.mxu0 0.0
        %1316 = vmatpush1.msra.mxu0 0.0
        %1317 = vmatprep.subr.mxu0 0.0
        %1318 = vmatpush1.msra.mxu0 0.0
        %1319 = vmatprep.subr.mxu0 0.0
        %1320 = vmatpush1.msra.mxu0 0.0
        %1321 = vmatprep.subr.mxu0 0.0
        %1322 = vmatpush1.msra.mxu0 0.0
        %1323 = vmatprep.mubr.f32.mxu0 0.0
        %1324 = vmatmul.mubr.f32.gmra.mrb[0].mxu0 %v1257
        %v1325 = vpop.f32.mrb[0].mxu0
        %v1326 = vadd.f32 0.0, %v1325
        %v1327 = vpop.f32.mrb[0].mxu0
        %1328 = vdwg.mxu0
        %v1329 = vadd.f32 %v1255, %v1326
        %v1330 = vxor.u32 %v1329, 2147483648
        %v1331 = vmul.f32 %v1330, 1.442695
        %v1332 = vpow.pop %v1331
        %v1333 = vadd.f32 %v1332, 1.0
        %v1334 = vrcp.pop %v1333
        %v1335 = vmul.f32 1.0, %v1334
        %v1336 = vtanh.pop %v1329
        %v1337 = vmul.f32 %v1335, %v1132
        %1339 = vrot.lane.b32.xlu0 %v1336, 64
        %v1340 = vpop.permute.xlu0 %1339
        %v1342 = vmul.f32 %v1335, %v1340
        %1344 = vrot.lane.b32.xlu0 %v1342, 32
        %v1345 = vpop.permute.xlu0 %1344
        %v1347 = vadd.f32 %v1337, %v1345
        %v1348 = vtanh.pop %v1347
        %1350 = vrot.lane.b32.xlu0 %v1348, 64
        %v1351 = vpop.permute.xlu0 %1350
        %v1353 = vmul.f32 %v1335, %v1351
        %v1354 = vstv %s1256
        %vm1355 = vcmp.gt.s32.totalorder %v312, %v1354
        %v1356 = vsel %vm1355, 1, 0
        %1357 = vset.pattern.permute.xlu0 0
        %1358 = vperm.xlu0 %1357, %v1356
        %v1359 = vpop.permute.xlu0 %1358
        %vm1360 = vcmp.eq.s32.totalorder %v1359, 1
        %v1361 = vsel %vm1360, %v1353, %v1131
        %v1362 = vsel %vm1360, %v1347, %v1132
        %v1363 = vld [vmem:[%s288] sm:$0xff]
        %v1364 = vsel %vm321, %v1250, 0
        %1366 = vmatprep.subr.mxu0 0.0
        %1367 = vmatpush1.msra.mxu0 %v308
        %1368 = vmatprep.subr.mxu0 0.0
        %1369 = vmatpush1.msra.mxu0 %v309
        %1370 = vmatprep.subr.mxu0 0.0
        %1371 = vmatpush1.msra.mxu0 %v310
        %1372 = vmatprep.subr.mxu0 0.0
        %1373 = vmatpush1.msra.mxu0 %v311
        %1374 = vmatprep.subr.mxu0 0.0
        %1375 = vmatpush1.msra.mxu0 0.0
        %1376 = vmatprep.subr.mxu0 0.0
        %1377 = vmatpush1.msra.mxu0 0.0
        %1378 = vmatprep.subr.mxu0 0.0
        %1379 = vmatpush1.msra.mxu0 0.0
        %1380 = vmatprep.subr.mxu0 0.0
        %1381 = vmatpush1.msra.mxu0 0.0
        %1382 = vmatprep.subr.mxu0 0.0
        %1383 = vmatpush1.msra.mxu0 0.0
        %1384 = vmatprep.subr.mxu0 0.0
        %1385 = vmatpush1.msra.mxu0 0.0
        %1386 = vmatprep.subr.mxu0 0.0
        %1387 = vmatpush1.msra.mxu0 0.0
        %1388 = vmatprep.subr.mxu0 0.0
        %1389 = vmatpush1.msra.mxu0 0.0
        %1390 = vmatprep.subr.mxu0 0.0
        %1391 = vmatpush1.msra.mxu0 0.0
        %1392 = vmatprep.subr.mxu0 0.0
        %1393 = vmatpush1.msra.mxu0 0.0
        %1394 = vmatprep.subr.mxu0 0.0
        %1395 = vmatpush1.msra.mxu0 0.0
        %1396 = vmatprep.subr.mxu0 0.0
        %1397 = vmatpush1.msra.mxu0 0.0
        %1398 = vmatprep.subr.mxu0 0.0
        %1399 = vmatpush1.msra.mxu0 0.0
        %1400 = vmatprep.subr.mxu0 0.0
        %1401 = vmatpush1.msra.mxu0 0.0
        %1402 = vmatprep.subr.mxu0 0.0
        %1403 = vmatpush1.msra.mxu0 0.0
        %1404 = vmatprep.subr.mxu0 0.0
        %1405 = vmatpush1.msra.mxu0 0.0
        %1406 = vmatprep.subr.mxu0 0.0
        %1407 = vmatpush1.msra.mxu0 0.0
        %1408 = vmatprep.subr.mxu0 0.0
        %1409 = vmatpush1.msra.mxu0 0.0
        %1410 = vmatprep.subr.mxu0 0.0
        %1411 = vmatpush1.msra.mxu0 0.0
        %1412 = vmatprep.subr.mxu0 0.0
        %1413 = vmatpush1.msra.mxu0 0.0
        %1414 = vmatprep.subr.mxu0 0.0
        %1415 = vmatpush1.msra.mxu0 0.0
        %1416 = vmatprep.subr.mxu0 0.0
        %1417 = vmatpush1.msra.mxu0 0.0
        %1418 = vmatprep.subr.mxu0 0.0
        %1419 = vmatpush1.msra.mxu0 0.0
        %1420 = vmatprep.subr.mxu0 0.0
        %1421 = vmatpush1.msra.mxu0 0.0
        %1422 = vmatprep.subr.mxu0 0.0
        %1423 = vmatpush1.msra.mxu0 0.0
        %1424 = vmatprep.subr.mxu0 0.0
        %1425 = vmatpush1.msra.mxu0 0.0
        %1426 = vmatprep.subr.mxu0 0.0
        %1427 = vmatpush1.msra.mxu0 0.0
        %1428 = vmatprep.subr.mxu0 0.0
        %1429 = vmatpush1.msra.mxu0 0.0
        %1430 = vmatprep.mubr.f32.mxu0 0.0
        %1431 = vmatmul.mubr.f32.gmra.mrb[0].mxu0 %v1364
        %v1432 = vpop.f32.mrb[0].mxu0
        %v1433 = vadd.f32 0.0, %v1432
        %v1434 = vpop.f32.mrb[0].mxu0
        %1435 = vdwg.mxu0
        %v1436 = vadd.f32 %v1363, %v1433
        %v1437 = vxor.u32 %v1436, 2147483648
        %v1438 = vmul.f32 %v1437, 1.442695
        %v1439 = vpow.pop %v1438
        %v1440 = vadd.f32 %v1439, 1.0
        %v1441 = vrcp.pop %v1440
        %v1442 = vmul.f32 1.0, %v1441
        %v1443 = vtanh.pop %v1436
        %v1444 = vmul.f32 %v1442, %v1241
        %1446 = vrot.lane.b32.xlu0 %v1443, 64
        %v1447 = vpop.permute.xlu0 %1446
        %v1449 = vmul.f32 %v1442, %v1447
        %1451 = vrot.lane.b32.xlu0 %v1449, 32
        %v1452 = vpop.permute.xlu0 %1451
        %v1454 = vadd.f32 %v1444, %v1452
        %v1455 = vtanh.pop %v1454
        %1457 = vrot.lane.b32.xlu0 %v1455, 64
        %v1458 = vpop.permute.xlu0 %1457
        %v1460 = vmul.f32 %v1442, %v1458
        %v1461 = vstv %s315
        %vm1462 = vcmp.gt.s32.totalorder %v312, %v1461
        %v1463 = vsel %vm1462, 1, 0
        %1464 = vset.pattern.permute.xlu0 0
        %1465 = vperm.xlu0 %1464, %v1463
        %v1466 = vpop.permute.xlu0 %1465
        %vm1467 = vcmp.eq.s32.totalorder %v1466, 1
        %v1468 = vsel %vm1467, %v1460, %v1240
        %v1469 = vsel %vm1467, %v1454, %v1241
        %1471 = vrot.lane.b32.xlu0 %v1361, 32
        %v1472 = vpop.permute.xlu0 %1471
        %s1474 = scalar_lea.vmem %s267, 32 [#allocation6]
        %1475 = vst.msk [vmem:[%s1474] sm:$0xff] %vm321, %v1472
        %1477 = vrot.lane.b32.xlu0 %v1468, 32
        %v1478 = vpop.permute.xlu0 %1477
        %1480 = vst.msk [vmem:[%s274] sm:$0xff] %vm321, %v1478
        %1481 = vst.msk [vmem:[#allocation2] sm:$0xff] %vm321, %v1472
        %1483 = vrot.lane.b32.xlu0 %v1362, 96
        %v1484 = vpop.permute.xlu0 %1483
        %1486 = vst.msk [vmem:[#allocation3] sm:$0xff] %vm321, %v1484
        %1487 = vst.msk [vmem:[#allocation4] sm:$0xff] %vm321, %v1478
        %1489 = vrot.lane.b32.xlu0 %v1469, 96
        %v1490 = vpop.permute.xlu0 %1489
        %1492 = vst.msk [vmem:[#allocation5] sm:$0xff] %vm321, %v1490
        %p1493 = scmp.eq.s32.totalorder %s24, 1
        // Predicated region
        $region41: #{lstm_model_forward.4} parent=35 // pred_check
          %p1494 = pneg %p1493
        $region42: #{lstm_model_forward.4} parent=35 // pred_check_branch
          %1496 = sbr.rel (%p1494) target = $region44
        $region43: #{lstm_model_forward.4} parent=35 // pred_region
          %1497 = vst.msk [vmem:[%s6] sm:$0xff] %vm321, %v1472
          %s1498 = scalar_lea.vmem %s6, 8
          %1499 = vst.msk [vmem:[%s1498] sm:$0xff] %vm321, %v1478
        $region44: #{lstm_model_forward.4} parent=35 // pred_fallthru
          _
        %s1500 = sand.u32 %s128, 1
        %s1501 = scalar_lea.sflag [#allocation7], %s1500
        %s1502 = sand.u32 %s128, 1
        %s1503 = smul.addr %s1502, 40
        %s1504 = scalar_lea.vmem [#allocation6], %s1503
        %s1505 = sand.u32 %s156, 1
        %s1506 = scalar_lea.sflag [#allocation9], %s1505
        %s1507 = sand.u32 %s156, 1
        %s1508 = smul.addr %s1507, 40
        %s1509 = scalar_lea.vmem [#allocation8], %s1508
        // Predicated region
        $region45: #{lstm_model_forward.4} parent=35 // pred_check
          %p1510 = pneg %p138
        $region46: #{lstm_model_forward.4} parent=35 // pred_check_branch
          %1512 = sbr.rel (%p1510) target = $region48
        $region47: #{lstm_model_forward.4} parent=35 // pred_region
          %s1513 = smul.u32 5, %s24
          %s1515 = ssub.s32 640, 640
          %1516 = vsyncadd %s1501, %s1515
          %s1517 = smul.addr %s1513, 128
          %s1518 = scalar_lea.hbm %s4, %s1517
          %s1519 = sshll.u32 %s1504, 4
          %s1520 = int_to_ptr.vmem [resolvable:$true] %s1519
          %1525 = dma.vmem_to_hbm [thread:$0]  %s1520, 640, %s1518, %s1501, 128, 128, 8
        $region48: #{lstm_model_forward.4} parent=35 // pred_fallthru
          _
        // Predicated region
        $region49: #{lstm_model_forward.4} parent=35 // pred_check
          %p1526 = pneg %p166
        $region50: #{lstm_model_forward.4} parent=35 // pred_check_branch
          %1528 = sbr.rel (%p1526) target = $region52
        $region51: #{lstm_model_forward.4} parent=35 // pred_region
          %s1529 = ssub.s32 1, %s24
          %s1530 = smul.u32 5, %s1529
          %s1532 = ssub.s32 640, 640
          %1533 = vsyncadd %s1506, %s1532
          %s1534 = smul.addr %s1530, 128
          %s1535 = scalar_lea.hbm %s5, %s1534
          %s1536 = sshll.u32 %s1509, 4
          %s1537 = int_to_ptr.vmem [resolvable:$true] %s1536
          %1542 = dma.vmem_to_hbm [thread:$0]  %s1537, 640, %s1535, %s1506, 128, 128, 8
        $region52: #{lstm_model_forward.4} parent=35 // pred_fallthru
          _
        // Predicated region
        $region53: #{lstm_model_forward.4} parent=35 // pred_check
          %p1543 = pneg %p187
        $region54: #{lstm_model_forward.4} parent=35 // pred_check_branch
          %1545 = sbr.rel (%p1543) target = $region56
        $region55: #{lstm_model_forward.4} parent=35 // pred_region
          _
        $region56: #{lstm_model_forward.4} parent=35 // pred_fallthru
          _
        // Predicated region
        $region57: #{lstm_model_forward.4} parent=35 // pred_check
          %p1546 = pneg %p187
        $region58: #{lstm_model_forward.4} parent=35 // pred_check_branch
          %1548 = sbr.rel (%p1546) target = $region60
        $region59: #{lstm_model_forward.4} parent=35 // pred_region
          _
        $region60: #{lstm_model_forward.4} parent=35 // pred_fallthru
          _
      $region36: #{lstm_model_forward.4} parent=5 // pred_fallthru
        _
      %p1549 = scmp.le.s32.totalorder 2, %s19
      // Predicated region
      $region61: #{lstm_model_forward.4} parent=5 // pred_check
        %p1550 = pneg %p1549
      $region62: #{lstm_model_forward.4} parent=5 // pred_check_branch
        %1552 = sbr.rel (%p1550) target = $region64
      $region63: #{lstm_model_forward.4} parent=5 // pred_region
        %s1553 = ssub.s32 %s19, 2
        // Predicated region
        $region65: #{lstm_model_forward.4} parent=63 // pred_check
          %p1554 = pneg %p144
        $region66: #{lstm_model_forward.4} parent=63 // pred_check_branch
          %1556 = sbr.rel (%p1554) target = $region68
        $region67: #{lstm_model_forward.4} parent=63 // pred_region
          %s1557 = sand.u32 %s129, 1
          %s1558 = scalar_lea.sflag [#allocation7], %s1557
          %s1559 = sand.u32 %s129, 1
          %s1560 = smul.addr %s1559, 40
          %s1561 = scalar_lea.vmem [#allocation6], %s1560
          %1562 = dma.done %s1558, 640
        $region68: #{lstm_model_forward.4} parent=63 // pred_fallthru
          _
        // Predicated region
        $region69: #{lstm_model_forward.4} parent=63 // pred_check
          %p1563 = pneg %p172
        $region70: #{lstm_model_forward.4} parent=63 // pred_check_branch
          %1565 = sbr.rel (%p1563) target = $region72
        $region71: #{lstm_model_forward.4} parent=63 // pred_region
          %s1566 = sand.u32 %s157, 1
          %s1567 = scalar_lea.sflag [#allocation9], %s1566
          %s1568 = sand.u32 %s157, 1
          %s1569 = smul.addr %s1568, 40
          %s1570 = scalar_lea.vmem [#allocation8], %s1569
          %1571 = dma.done %s1567, 640
        $region72: #{lstm_model_forward.4} parent=63 // pred_fallthru
          _
      $region64: #{lstm_model_forward.4} parent=5 // pred_fallthru
        _
    $region6: #{lstm_model_forward.4} parent=1 // loop_footer
      %s23 = sadd.s32 1, %s19
    $region7: #{lstm_model_forward.4} parent=1 // loop_footer_branch
      %18 = sbr.rel target = $region3
    $region8: #{lstm_model_forward.4} parent=1 // loop_exit
      _
    %1572 = vsyncpa [#allocation7], 1
    %s1573 = scalar_lea.sflag [#allocation7], 1
    %1574 = vsyncpa %s1573, 1
    %1575 = vsyncpa [#allocation9], 1
    %s1576 = scalar_lea.sflag [#allocation9], 1
    %1577 = vsyncpa %s1576, 1

</llo_original>
